<compile_context>
chip_gen: v7x
topology: tpu7x:2x2x1
jax: 0.10.0
libtpu: 0.0.40
codegen_flags: <defaults>
</compile_context>

<pallas_src>
import jax
import jax.numpy as jnp
from jax import lax
from jax.experimental import pallas as pl
from jax.experimental.pallas import tpu as pltpu


def bigru_ln_kernel(words_ref, len_ref, gamma_ref, beta_ref,
                    wih_ref, whh_f_ref, whh_b_ref, bx_ref,
                    bhn_f_ref, bhn_b_ref,
                    h_ref, emb_ref, xp_ref):
    T, B, _ = words_ref.shape
    H = whh_f_ref.shape[0]
    H2, H3 = 2 * H, 3 * H

    # ---- phase 1: hoisted input projection (independent of the recurrence) ------
    # x_t @ [W_ir|W_iz|W_in] for both directions, with (b_ih + b_hh) folded in for
    # r/z and b_in for n.  T independent MXU matmuls, all off the serial chain.
    wih = wih_ref[...]                       # (300, 6H)
    bx = bx_ref[...]                         # (1, 6H)

    def proj_body(t, carry):
        xp_ref[t] = jnp.dot(words_ref[t], wih,
                            preferred_element_type=jnp.float32) + bx
        return carry

    lax.fori_loop(0, T, proj_body, 0, unroll=True)

    # ---- phase 2: interleaved fwd+bwd recurrence (packed-sequence masking) ------
    lengths = len_ref[...]                   # (B, 1) int32
    whh_f = whh_f_ref[...]                   # (H, 3H), gate order r, z, n
    whh_b = whh_b_ref[...]
    bhn_f = jnp.broadcast_to(bhn_f_ref[...], (B, H))   # hoisted broadcasts
    bhn_b = jnp.broadcast_to(bhn_b_ref[...], (B, H))

    def gru_step(xg, h_prev, whh, bhn):
        # xg already holds x@W_ih + folded biases, laid out [r | z | n].
        hh = jnp.dot(h_prev, whh, preferred_element_type=jnp.float32)   # (B, 3H)
        rz = jax.nn.sigmoid(xg[:, :H2] + hh[:, :H2])                    # r,z in one EUP op
        r, z = rz[:, :H], rz[:, H:]
        n = jnp.tanh(xg[:, H2:] + r * (hh[:, H2:] + bhn))
        return (1.0 - z) * n + z * h_prev

    def body(i, carry):
        h_f, h_b = carry
        t_f = i
        t_b = T - 1 - i
        xp_f = xp_ref[t_f]                   # (B, 6H): [fwd gates | bwd gates]
        xp_b = xp_ref[t_b]
        hf_new = gru_step(xp_f[:, :H3], h_f, whh_f, bhn_f)
        hb_new = gru_step(xp_b[:, H3:], h_b, whh_b, bhn_b)
        valid_f = lengths > t_f              # (B, 1)
        valid_b = lengths > t_b
        emb_ref[t_f, :, :H] = jnp.where(valid_f, hf_new, 0.0)   # padded positions -> 0
        emb_ref[t_b, :, H:] = jnp.where(valid_b, hb_new, 0.0)
        # fwd: freeze state past the length; bwd: state stays 0 until t < len.
        return (jnp.where(valid_f, hf_new, h_f),
                jnp.where(valid_b, hb_new, h_b))

    h0 = jnp.zeros((B, H), jnp.float32)
    h_f, h_b = lax.fori_loop(0, T, body, (h0, h0), unroll=True)

    # ---- phase 3: LayerNorm([h_fwd ; h_bwd]) (eps=1e-5, biased variance) --------
    h_cat = jnp.concatenate([h_f, h_b], axis=-1)       # (B, 2H)
    mu = jnp.mean(h_cat, axis=-1, keepdims=True)
    var = jnp.mean((h_cat - mu) ** 2, axis=-1, keepdims=True)
    h_norm = (h_cat - mu) * lax.rsqrt(var + 1e-5)
    h_ref[...] = h_norm * gamma_ref[...] + beta_ref[...]


def _stack_gates(w):
    """(3, A, H) per-gate weights (order r,z,n) -> (A, 3H) gate-stacked."""
    g, a, h = w.shape
    return jnp.transpose(w, (1, 0, 2)).reshape(a, g * h)


def _fold_bias(bih, bhh):
    """(3,1,H) biases -> (1, 3H): [b_ir+b_hr, b_iz+b_hz, b_in]."""
    return jnp.concatenate([bih[0] + bhh[0], bih[1] + bhh[1], bih[2]], axis=-1)


def sentence_encoder(words, lengths, params, *, b_tile=None):
    """words: (B, T, 300) f32, lengths: (B,) int.  Returns (h, embeddings)."""
    B, T, Din = words.shape
    H = params["whh_f"].shape[-1]
    E = 2 * H
    lengths = lengths.astype(jnp.int32)

    # pack_padded_sequence semantics: sort by descending length, clamp 0 -> 1,
    # un-sort h afterwards.  Like the reference module, `embeddings` are left in
    # sorted (descending-length) order.
    order = jnp.argsort(-lengths)
    reverse = jnp.argsort(order)
    words_s = words[order]
    lengths_s = jnp.maximum(lengths[order], 1)

    words_tm = jnp.transpose(words_s, (1, 0, 2))        # (T, B, 300) time-major

    # Fused / folded parameter layout (built once, outside the kernel).
    wih_all = jnp.concatenate([_stack_gates(params["wih_f"]),
                               _stack_gates(params["wih_b"])], axis=-1)   # (300, 6H)
    whh_f = _stack_gates(params["whh_f"])               # (H, 3H)
    whh_b = _stack_gates(params["whh_b"])
    bx_all = jnp.concatenate([_fold_bias(params["bih_f"], params["bhh_f"]),
                              _fold_bias(params["bih_b"], params["bhh_b"])],
                             axis=-1)                   # (1, 6H)
    bhn_f = params["bhh_f"][2]                          # (1, H)
    bhn_b = params["bhh_b"][2]

    if b_tile is None:
        b_tile = B                                      # single batch tile at demo size
    grid = (pl.cdiv(B, b_tile),)

    full = lambda i: (0, 0)                             # replicated weights / LN params
    in_specs = [
        pl.BlockSpec((T, b_tile, Din), lambda i: (0, i, 0)),
        pl.BlockSpec((b_tile, 1), lambda i: (i, 0)),
        pl.BlockSpec((1, E), full),
        pl.BlockSpec((1, E), full),
        pl.BlockSpec((Din, 6 * H), full),
        pl.BlockSpec((H, 3 * H), full),
        pl.BlockSpec((H, 3 * H), full),
        pl.BlockSpec((1, 6 * H), full),
        pl.BlockSpec((1, H), full),
        pl.BlockSpec((1, H), full),
    ]
    out_specs = (
        pl.BlockSpec((b_tile, E), lambda i: (i, 0)),
        pl.BlockSpec((T, b_tile, E), lambda i: (0, i, 0)),
    )
    out_shape = (jax.ShapeDtypeStruct((B, E), jnp.float32),
                 jax.ShapeDtypeStruct((T, B, E), jnp.float32))

    h_s, emb_tm = pl.pallas_call(
        bigru_ln_kernel,
        grid=grid,
        in_specs=in_specs,
        out_specs=out_specs,
        out_shape=out_shape,
        scratch_shapes=[pltpu.VMEM((T, b_tile, 6 * H), jnp.float32)],
        compiler_params=pltpu.CompilerParams(
            dimension_semantics=("parallel",)),         # batch tiles -> both TCs on v7x
    )(words_tm, lengths_s.reshape(B, 1),
      params["ln_gamma"], params["ln_beta"],
      wih_all, whh_f, whh_b, bx_all, bhn_f, bhn_b)

    h = h_s[reverse]                                    # h back in original batch order
    embeddings = jnp.transpose(emb_tm, (1, 0, 2))       # (B, T, 2H), sorted order (as ref)
    return h, embeddings


def _ref_sentence_encoder(words, lengths, params):
    """Pure-jnp reference mirroring the PyTorch module (numerics check only)."""
    B, T, _ = words.shape
    H = params["whh_f"].shape[-1]
    order = jnp.argsort(-lengths)
    reverse = jnp.argsort(order)
    w = words[order]
    ln = jnp.maximum(lengths[order], 1)

    def cell(x, h, wih, whh, bih, bhh):
        r = jax.nn.sigmoid(x @ wih[0] + bih[0] + h @ whh[0] + bhh[0])
        z = jax.nn.sigmoid(x @ wih[1] + bih[1] + h @ whh[1] + bhh[1])
        n = jnp.tanh(x @ wih[2] + bih[2] + r * (h @ whh[2] + bhh[2]))
        return (1.0 - z) * n + z * h

    hf = jnp.zeros((B, H), jnp.float32)
    hb = jnp.zeros((B, H), jnp.float32)
    emb_f = [None] * T
    emb_b = [None] * T
    for t in range(T):
        hn = cell(w[:, t], hf, params["wih_f"], params["whh_f"],
                  params["bih_f"], params["bhh_f"])
        valid = (ln > t)[:, None]
        emb_f[t] = jnp.where(valid, hn, 0.0)
        hf = jnp.where(valid, hn, hf)
    for t in range(T - 1, -1, -1):
        hn = cell(w[:, t], hb, params["wih_b"], params["whh_b"],
                  params["bih_b"], params["bhh_b"])
        valid = (ln > t)[:, None]
        emb_b[t] = jnp.where(valid, hn, 0.0)
        hb = jnp.where(valid, hn, hb)
    h_cat = jnp.concatenate([hf, hb], axis=-1)[reverse]
    mu = h_cat.mean(-1, keepdims=True)
    var = ((h_cat - mu) ** 2).mean(-1, keepdims=True)
    h = (h_cat - mu) / jnp.sqrt(var + 1e-5) * params["ln_gamma"] + params["ln_beta"]
    emb = jnp.concatenate([jnp.stack(emb_f, 1), jnp.stack(emb_b, 1)], axis=-1)
    return h, emb


if __name__ == "__main__":
    key = jax.random.PRNGKey(0)
    B, T, D_IN = 2, 8, 300        # GRU input size is fixed at 300 (GloVe) in the module
    E = 32                        # cfg.embedding_dim
    H = E // 2

    keys = jax.random.split(key, 10)

    def init(k, shape, scale=0.1):
        return scale * jax.random.normal(k, shape, jnp.float32)

    params = dict(
        wih_f=init(keys[0], (3, D_IN, H)),
        whh_f=init(keys[1], (3, H, H)),
        bih_f=init(keys[2], (3, 1, H)),
        bhh_f=init(keys[3], (3, 1, H)),
        wih_b=init(keys[4], (3, D_IN, H)),
        whh_b=init(keys[5], (3, H, H)),
        bih_b=init(keys[6], (3, 1, H)),
        bhh_b=init(keys[7], (3, 1, H)),
        ln_gamma=jnp.ones((1, E), jnp.float32),   # nn.LayerNorm default init
        ln_beta=jnp.zeros((1, E), jnp.float32),
    )

    words = jax.random.normal(keys[8], (B, T, D_IN), jnp.float32)
    lengths = jnp.array([5, 8], dtype=jnp.int32)   # unsorted -> exercises the reorder path

    h, emb = sentence_encoder(words, lengths, params)
    jax.block_until_ready((h, emb))

    assert h.shape == (B, E), h.shape
    assert emb.shape == (B, T, E), emb.shape
    assert bool(jnp.all(jnp.isfinite(h))) and bool(jnp.all(jnp.isfinite(emb)))

    h_want, emb_want = _ref_sentence_encoder(words, lengths, params)
    assert bool(jnp.allclose(h, h_want, atol=2e-4, rtol=2e-4))
    assert bool(jnp.allclose(emb, emb_want, atol=2e-4, rtol=2e-4))
    print("KERNEL_OK")
</pallas_src>

<mosaic_0001>
module attributes {stable_mosaic.version = 11 : i64} {
  func.func @bigru_ln_kernel(%arg0: i32, %arg1: memref<8x2x300xf32, #tpu.memory_space<vmem>>, %arg2: memref<2x1xi32, #tpu.memory_space<vmem>>, %arg3: memref<1x32xf32, #tpu.memory_space<vmem>>, %arg4: memref<1x32xf32, #tpu.memory_space<vmem>>, %arg5: memref<300x96xf32, #tpu.memory_space<vmem>>, %arg6: memref<16x48xf32, #tpu.memory_space<vmem>>, %arg7: memref<16x48xf32, #tpu.memory_space<vmem>>, %arg8: memref<1x96xf32, #tpu.memory_space<vmem>>, %arg9: memref<1x16xf32, #tpu.memory_space<vmem>>, %arg10: memref<1x16xf32, #tpu.memory_space<vmem>>, %arg11: memref<2x32xf32, #tpu.memory_space<vmem>>, %arg12: memref<8x2x32xf32, #tpu.memory_space<vmem>>, %arg13: memref<8x2x96xf32, #tpu.memory_space<vmem>>) attributes {dimension_semantics = [#tpu.dimension_semantics<parallel>], iteration_bounds = array<i64: 1>, scalar_prefetch = 0 : i64, scratch_operands = 1 : i64, tpu.core_type = #tpu.core_type<tc>, window_params = [{transform_indices = @transform_0, window_bounds = array<i64: 8, 2, 300>}, {transform_indices = @transform_1, window_bounds = array<i64: 2, 1>}, {pipeline_mode = #tpu.pipeline_mode<synchronous>, transform_indices = @transform_2, window_bounds = array<i64: 1, 32>}, {pipeline_mode = #tpu.pipeline_mode<synchronous>, transform_indices = @transform_3, window_bounds = array<i64: 1, 32>}, {pipeline_mode = #tpu.pipeline_mode<synchronous>, transform_indices = @transform_4, window_bounds = array<i64: 300, 96>}, {pipeline_mode = #tpu.pipeline_mode<synchronous>, transform_indices = @transform_5, window_bounds = array<i64: 16, 48>}, {pipeline_mode = #tpu.pipeline_mode<synchronous>, transform_indices = @transform_6, window_bounds = array<i64: 16, 48>}, {pipeline_mode = #tpu.pipeline_mode<synchronous>, transform_indices = @transform_7, window_bounds = array<i64: 1, 96>}, {pipeline_mode = #tpu.pipeline_mode<synchronous>, transform_indices = @transform_8, window_bounds = array<i64: 1, 16>}, {pipeline_mode = #tpu.pipeline_mode<synchronous>, transform_indices = @transform_9, window_bounds = array<i64: 1, 16>}, {transform_indices = @transform_10, window_bounds = array<i64: 2, 32>}, {transform_indices = @transform_11, window_bounds = array<i64: 8, 2, 32>}]} {
    %c0 = arith.constant 0 : index
    %c0_0 = arith.constant 0 : index
    %0 = vector.load %arg5[%c0, %c0_0] : memref<300x96xf32, #tpu.memory_space<vmem>>, vector<300x96xf32>
    %c0_1 = arith.constant 0 : index
    %c0_2 = arith.constant 0 : index
    %1 = vector.load %arg8[%c0_1, %c0_2] : memref<1x96xf32, #tpu.memory_space<vmem>>, vector<1x96xf32>
    %c0_i32 = arith.constant 0 : i32
    %2 = arith.index_cast %c0_i32 : i32 to index
    %c0_3 = arith.constant 0 : index
    %c0_4 = arith.constant 0 : index
    %3 = vector.load %arg1[%2, %c0_3, %c0_4] : memref<8x2x300xf32, #tpu.memory_space<vmem>>, vector<1x2x300xf32>
    %4 = vector.shape_cast %3 : vector<1x2x300xf32> to vector<2x300xf32>
    %cst = arith.constant dense<0.000000e+00> : vector<2x96xf32>
    %5 = tpu.matmul %4, %0, %cst {dimension_numbers = #tpu.dot_dimension_numbers<[1], [0], [0], [1], [0, 0, 1, 1], [], []>} : vector<2x300xf32>, vector<300x96xf32>, vector<2x96xf32> -> vector<2x96xf32>
    %6 = vector.broadcast %1 : vector<1x96xf32> to vector<2x96xf32>
    %7 = arith.addf %5, %6 : vector<2x96xf32>
    %8 = arith.index_cast %c0_i32 : i32 to index
    %c0_5 = arith.constant 0 : index
    %c0_6 = arith.constant 0 : index
    %9 = vector.load %arg13[%8, %c0_5, %c0_6] : memref<8x2x96xf32, #tpu.memory_space<vmem>>, vector<1x2x96xf32>
    %10 = vector.shape_cast %9 : vector<1x2x96xf32> to vector<2x96xf32>
    %11 = vector.shape_cast %7 : vector<2x96xf32> to vector<1x2x96xf32>
    tpu.vector_store %arg13[%8, %c0_5, %c0_6], %11 {strides = array<i32>} : memref<8x2x96xf32, #tpu.memory_space<vmem>>, vector<1x2x96xf32>,
    %c1_i32 = arith.constant 1 : i32
    %12 = arith.index_cast %c1_i32 : i32 to index
    %c0_7 = arith.constant 0 : index
    %c0_8 = arith.constant 0 : index
    %13 = vector.load %arg1[%12, %c0_7, %c0_8] : memref<8x2x300xf32, #tpu.memory_space<vmem>>, vector<1x2x300xf32>
    %14 = vector.shape_cast %13 : vector<1x2x300xf32> to vector<2x300xf32>
    %cst_9 = arith.constant dense<0.000000e+00> : vector<2x96xf32>
    %15 = tpu.matmul %14, %0, %cst_9 {dimension_numbers = #tpu.dot_dimension_numbers<[1], [0], [0], [1], [0, 0, 1, 1], [], []>} : vector<2x300xf32>, vector<300x96xf32>, vector<2x96xf32> -> vector<2x96xf32>
    %16 = vector.broadcast %1 : vector<1x96xf32> to vector<2x96xf32>
    %17 = arith.addf %15, %16 : vector<2x96xf32>
    %18 = arith.index_cast %c1_i32 : i32 to index
    %c0_10 = arith.constant 0 : index
    %c0_11 = arith.constant 0 : index
    %19 = vector.load %arg13[%18, %c0_10, %c0_11] : memref<8x2x96xf32, #tpu.memory_space<vmem>>, vector<1x2x96xf32>
    %20 = vector.shape_cast %19 : vector<1x2x96xf32> to vector<2x96xf32>
    %21 = vector.shape_cast %17 : vector<2x96xf32> to vector<1x2x96xf32>
    tpu.vector_store %arg13[%18, %c0_10, %c0_11], %21 {strides = array<i32>} : memref<8x2x96xf32, #tpu.memory_space<vmem>>, vector<1x2x96xf32>,
    %c2_i32 = arith.constant 2 : i32
    %22 = arith.index_cast %c2_i32 : i32 to index
    %c0_12 = arith.constant 0 : index
    %c0_13 = arith.constant 0 : index
    %23 = vector.load %arg1[%22, %c0_12, %c0_13] : memref<8x2x300xf32, #tpu.memory_space<vmem>>, vector<1x2x300xf32>
    %24 = vector.shape_cast %23 : vector<1x2x300xf32> to vector<2x300xf32>
    %cst_14 = arith.constant dense<0.000000e+00> : vector<2x96xf32>
    %25 = tpu.matmul %24, %0, %cst_14 {dimension_numbers = #tpu.dot_dimension_numbers<[1], [0], [0], [1], [0, 0, 1, 1], [], []>} : vector<2x300xf32>, vector<300x96xf32>, vector<2x96xf32> -> vector<2x96xf32>
    %26 = vector.broadcast %1 : vector<1x96xf32> to vector<2x96xf32>
    %27 = arith.addf %25, %26 : vector<2x96xf32>
    %28 = arith.index_cast %c2_i32 : i32 to index
    %c0_15 = arith.constant 0 : index
    %c0_16 = arith.constant 0 : index
    %29 = vector.load %arg13[%28, %c0_15, %c0_16] : memref<8x2x96xf32, #tpu.memory_space<vmem>>, vector<1x2x96xf32>
    %30 = vector.shape_cast %29 : vector<1x2x96xf32> to vector<2x96xf32>
    %31 = vector.shape_cast %27 : vector<2x96xf32> to vector<1x2x96xf32>
    tpu.vector_store %arg13[%28, %c0_15, %c0_16], %31 {strides = array<i32>} : memref<8x2x96xf32, #tpu.memory_space<vmem>>, vector<1x2x96xf32>,
    %c3_i32 = arith.constant 3 : i32
    %32 = arith.index_cast %c3_i32 : i32 to index
    %c0_17 = arith.constant 0 : index
    %c0_18 = arith.constant 0 : index
    %33 = vector.load %arg1[%32, %c0_17, %c0_18] : memref<8x2x300xf32, #tpu.memory_space<vmem>>, vector<1x2x300xf32>
    %34 = vector.shape_cast %33 : vector<1x2x300xf32> to vector<2x300xf32>
    %cst_19 = arith.constant dense<0.000000e+00> : vector<2x96xf32>
    %35 = tpu.matmul %34, %0, %cst_19 {dimension_numbers = #tpu.dot_dimension_numbers<[1], [0], [0], [1], [0, 0, 1, 1], [], []>} : vector<2x300xf32>, vector<300x96xf32>, vector<2x96xf32> -> vector<2x96xf32>
    %36 = vector.broadcast %1 : vector<1x96xf32> to vector<2x96xf32>
    %37 = arith.addf %35, %36 : vector<2x96xf32>
    %38 = arith.index_cast %c3_i32 : i32 to index
    %c0_20 = arith.constant 0 : index
    %c0_21 = arith.constant 0 : index
    %39 = vector.load %arg13[%38, %c0_20, %c0_21] : memref<8x2x96xf32, #tpu.memory_space<vmem>>, vector<1x2x96xf32>
    %40 = vector.shape_cast %39 : vector<1x2x96xf32> to vector<2x96xf32>
    %41 = vector.shape_cast %37 : vector<2x96xf32> to vector<1x2x96xf32>
    tpu.vector_store %arg13[%38, %c0_20, %c0_21], %41 {strides = array<i32>} : memref<8x2x96xf32, #tpu.memory_space<vmem>>, vector<1x2x96xf32>,
    %c4_i32 = arith.constant 4 : i32
    %42 = arith.index_cast %c4_i32 : i32 to index
    %c0_22 = arith.constant 0 : index
    %c0_23 = arith.constant 0 : index
    %43 = vector.load %arg1[%42, %c0_22, %c0_23] : memref<8x2x300xf32, #tpu.memory_space<vmem>>, vector<1x2x300xf32>
    %44 = vector.shape_cast %43 : vector<1x2x300xf32> to vector<2x300xf32>
    %cst_24 = arith.constant dense<0.000000e+00> : vector<2x96xf32>
    %45 = tpu.matmul %44, %0, %cst_24 {dimension_numbers = #tpu.dot_dimension_numbers<[1], [0], [0], [1], [0, 0, 1, 1], [], []>} : vector<2x300xf32>, vector<300x96xf32>, vector<2x96xf32> -> vector<2x96xf32>
    %46 = vector.broadcast %1 : vector<1x96xf32> to vector<2x96xf32>
    %47 = arith.addf %45, %46 : vector<2x96xf32>
    %48 = arith.index_cast %c4_i32 : i32 to index
    %c0_25 = arith.constant 0 : index
    %c0_26 = arith.constant 0 : index
    %49 = vector.load %arg13[%48, %c0_25, %c0_26] : memref<8x2x96xf32, #tpu.memory_space<vmem>>, vector<1x2x96xf32>
    %50 = vector.shape_cast %49 : vector<1x2x96xf32> to vector<2x96xf32>
    %51 = vector.shape_cast %47 : vector<2x96xf32> to vector<1x2x96xf32>
    tpu.vector_store %arg13[%48, %c0_25, %c0_26], %51 {strides = array<i32>} : memref<8x2x96xf32, #tpu.memory_space<vmem>>, vector<1x2x96xf32>,
    %c5_i32 = arith.constant 5 : i32
    %52 = arith.index_cast %c5_i32 : i32 to index
    %c0_27 = arith.constant 0 : index
    %c0_28 = arith.constant 0 : index
    %53 = vector.load %arg1[%52, %c0_27, %c0_28] : memref<8x2x300xf32, #tpu.memory_space<vmem>>, vector<1x2x300xf32>
    %54 = vector.shape_cast %53 : vector<1x2x300xf32> to vector<2x300xf32>
    %cst_29 = arith.constant dense<0.000000e+00> : vector<2x96xf32>
    %55 = tpu.matmul %54, %0, %cst_29 {dimension_numbers = #tpu.dot_dimension_numbers<[1], [0], [0], [1], [0, 0, 1, 1], [], []>} : vector<2x300xf32>, vector<300x96xf32>, vector<2x96xf32> -> vector<2x96xf32>
    %56 = vector.broadcast %1 : vector<1x96xf32> to vector<2x96xf32>
    %57 = arith.addf %55, %56 : vector<2x96xf32>
    %58 = arith.index_cast %c5_i32 : i32 to index
    %c0_30 = arith.constant 0 : index
    %c0_31 = arith.constant 0 : index
    %59 = vector.load %arg13[%58, %c0_30, %c0_31] : memref<8x2x96xf32, #tpu.memory_space<vmem>>, vector<1x2x96xf32>
    %60 = vector.shape_cast %59 : vector<1x2x96xf32> to vector<2x96xf32>
    %61 = vector.shape_cast %57 : vector<2x96xf32> to vector<1x2x96xf32>
    tpu.vector_store %arg13[%58, %c0_30, %c0_31], %61 {strides = array<i32>} : memref<8x2x96xf32, #tpu.memory_space<vmem>>, vector<1x2x96xf32>,
    %c6_i32 = arith.constant 6 : i32
    %62 = arith.index_cast %c6_i32 : i32 to index
    %c0_32 = arith.constant 0 : index
    %c0_33 = arith.constant 0 : index
    %63 = vector.load %arg1[%62, %c0_32, %c0_33] : memref<8x2x300xf32, #tpu.memory_space<vmem>>, vector<1x2x300xf32>
    %64 = vector.shape_cast %63 : vector<1x2x300xf32> to vector<2x300xf32>
    %cst_34 = arith.constant dense<0.000000e+00> : vector<2x96xf32>
    %65 = tpu.matmul %64, %0, %cst_34 {dimension_numbers = #tpu.dot_dimension_numbers<[1], [0], [0], [1], [0, 0, 1, 1], [], []>} : vector<2x300xf32>, vector<300x96xf32>, vector<2x96xf32> -> vector<2x96xf32>
    %66 = vector.broadcast %1 : vector<1x96xf32> to vector<2x96xf32>
    %67 = arith.addf %65, %66 : vector<2x96xf32>
    %68 = arith.index_cast %c6_i32 : i32 to index
    %c0_35 = arith.constant 0 : index
    %c0_36 = arith.constant 0 : index
    %69 = vector.load %arg13[%68, %c0_35, %c0_36] : memref<8x2x96xf32, #tpu.memory_space<vmem>>, vector<1x2x96xf32>
    %70 = vector.shape_cast %69 : vector<1x2x96xf32> to vector<2x96xf32>
    %71 = vector.shape_cast %67 : vector<2x96xf32> to vector<1x2x96xf32>
    tpu.vector_store %arg13[%68, %c0_35, %c0_36], %71 {strides = array<i32>} : memref<8x2x96xf32, #tpu.memory_space<vmem>>, vector<1x2x96xf32>,
    %c7_i32 = arith.constant 7 : i32
    %72 = arith.index_cast %c7_i32 : i32 to index
    %c0_37 = arith.constant 0 : index
    %c0_38 = arith.constant 0 : index
    %73 = vector.load %arg1[%72, %c0_37, %c0_38] : memref<8x2x300xf32, #tpu.memory_space<vmem>>, vector<1x2x300xf32>
    %74 = vector.shape_cast %73 : vector<1x2x300xf32> to vector<2x300xf32>
    %cst_39 = arith.constant dense<0.000000e+00> : vector<2x96xf32>
    %75 = tpu.matmul %74, %0, %cst_39 {dimension_numbers = #tpu.dot_dimension_numbers<[1], [0], [0], [1], [0, 0, 1, 1], [], []>} : vector<2x300xf32>, vector<300x96xf32>, vector<2x96xf32> -> vector<2x96xf32>
    %76 = vector.broadcast %1 : vector<1x96xf32> to vector<2x96xf32>
    %77 = arith.addf %75, %76 : vector<2x96xf32>
    %78 = arith.index_cast %c7_i32 : i32 to index
    %c0_40 = arith.constant 0 : index
    %c0_41 = arith.constant 0 : index
    %79 = vector.load %arg13[%78, %c0_40, %c0_41] : memref<8x2x96xf32, #tpu.memory_space<vmem>>, vector<1x2x96xf32>
    %80 = vector.shape_cast %79 : vector<1x2x96xf32> to vector<2x96xf32>
    %81 = vector.shape_cast %77 : vector<2x96xf32> to vector<1x2x96xf32>
    tpu.vector_store %arg13[%78, %c0_40, %c0_41], %81 {strides = array<i32>} : memref<8x2x96xf32, #tpu.memory_space<vmem>>, vector<1x2x96xf32>,
    %c8_i32 = arith.constant 8 : i32
    %c0_42 = arith.constant 0 : index
    %c0_43 = arith.constant 0 : index
    %82 = vector.load %arg2[%c0_42, %c0_43] : memref<2x1xi32, #tpu.memory_space<vmem>>, vector<2x1xi32>
    %c0_44 = arith.constant 0 : index
    %c0_45 = arith.constant 0 : index
    %83 = vector.load %arg6[%c0_44, %c0_45] : memref<16x48xf32, #tpu.memory_space<vmem>>, vector<16x48xf32>
    %c0_46 = arith.constant 0 : index
    %c0_47 = arith.constant 0 : index
    %84 = vector.load %arg7[%c0_46, %c0_47] : memref<16x48xf32, #tpu.memory_space<vmem>>, vector<16x48xf32>
    %c0_48 = arith.constant 0 : index
    %c0_49 = arith.constant 0 : index
    %85 = vector.load %arg9[%c0_48, %c0_49] : memref<1x16xf32, #tpu.memory_space<vmem>>, vector<1x16xf32>
    %86 = vector.shape_cast %85 : vector<1x16xf32> to vector<1x16xf32>
    %87 = vector.broadcast %86 : vector<1x16xf32> to vector<2x16xf32>
    %c0_50 = arith.constant 0 : index
    %c0_51 = arith.constant 0 : index
    %88 = vector.load %arg10[%c0_50, %c0_51] : memref<1x16xf32, #tpu.memory_space<vmem>>, vector<1x16xf32>
    %89 = vector.shape_cast %88 : vector<1x16xf32> to vector<1x16xf32>
    %90 = vector.broadcast %89 : vector<1x16xf32> to vector<2x16xf32>
    %cst_52 = arith.constant 0.000000e+00 : f32
    %91 = vector.broadcast %cst_52 : f32 to vector<2x16xf32>
    %c0_i32_53 = arith.constant 0 : i32
    %c7_i32_54 = arith.constant 7 : i32
    %92 = arith.subi %c7_i32_54, %c0_i32_53 : i32
    %93 = arith.index_cast %c0_i32_53 : i32 to index
    %c0_55 = arith.constant 0 : index
    %c0_56 = arith.constant 0 : index
    %94 = vector.load %arg13[%93, %c0_55, %c0_56] : memref<8x2x96xf32, #tpu.memory_space<vmem>>, vector<1x2x96xf32>
    %95 = vector.shape_cast %94 : vector<1x2x96xf32> to vector<2x96xf32>
    %96 = arith.index_cast %92 : i32 to index
    %c0_57 = arith.constant 0 : index
    %c0_58 = arith.constant 0 : index
    %97 = vector.load %arg13[%96, %c0_57, %c0_58] : memref<8x2x96xf32, #tpu.memory_space<vmem>>, vector<1x2x96xf32>
    %98 = vector.shape_cast %97 : vector<1x2x96xf32> to vector<2x96xf32>
    %99 = vector.extract_strided_slice %95 {offsets = [0, 0], sizes = [2, 48], strides = [1, 1]} : vector<2x96xf32> to vector<2x48xf32>
    %cst_59 = arith.constant dense<0.000000e+00> : vector<2x48xf32>
    %100 = tpu.matmul %91, %83, %cst_59 {dimension_numbers = #tpu.dot_dimension_numbers<[1], [0], [0], [1], [0, 0, 1, 1], [], []>} : vector<2x16xf32>, vector<16x48xf32>, vector<2x48xf32> -> vector<2x48xf32>
    %101 = vector.extract_strided_slice %99 {offsets = [0, 0], sizes = [2, 32], strides = [1, 1]} : vector<2x48xf32> to vector<2x32xf32>
    %102 = vector.extract_strided_slice %100 {offsets = [0, 0], sizes = [2, 32], strides = [1, 1]} : vector<2x48xf32> to vector<2x32xf32>
    %103 = arith.addf %101, %102 : vector<2x32xf32>
    %104 = arith.negf %103 : vector<2x32xf32>
    %105 = math.exp %104 : vector<2x32xf32>
    %cst_60 = arith.constant 1.000000e+00 : f32
    %106 = vector.broadcast %cst_60 : f32 to vector<2x32xf32>
    %107 = arith.addf %106, %105 : vector<2x32xf32>
    %108 = arith.divf %106, %107 : vector<2x32xf32>
    %109 = vector.extract_strided_slice %108 {offsets = [0, 0], sizes = [2, 16], strides = [1, 1]} : vector<2x32xf32> to vector<2x16xf32>
    %110 = vector.extract_strided_slice %108 {offsets = [0, 16], sizes = [2, 16], strides = [1, 1]} : vector<2x32xf32> to vector<2x16xf32>
    %111 = vector.extract_strided_slice %99 {offsets = [0, 32], sizes = [2, 16], strides = [1, 1]} : vector<2x48xf32> to vector<2x16xf32>
    %112 = vector.extract_strided_slice %100 {offsets = [0, 32], sizes = [2, 16], strides = [1, 1]} : vector<2x48xf32> to vector<2x16xf32>
    %113 = arith.addf %112, %87 : vector<2x16xf32>
    %114 = arith.mulf %109, %113 : vector<2x16xf32>
    %115 = arith.addf %111, %114 : vector<2x16xf32>
    %116 = math.tanh %115 : vector<2x16xf32>
    %cst_61 = arith.constant 1.000000e+00 : f32
    %117 = vector.broadcast %cst_61 : f32 to vector<2x16xf32>
    %118 = arith.subf %117, %110 : vector<2x16xf32>
    %119 = arith.mulf %118, %116 : vector<2x16xf32>
    %120 = arith.mulf %110, %91 : vector<2x16xf32>
    %121 = arith.addf %119, %120 : vector<2x16xf32>
    %122 = vector.extract_strided_slice %98 {offsets = [0, 48], sizes = [2, 48], strides = [1, 1]} : vector<2x96xf32> to vector<2x48xf32>
    %cst_62 = arith.constant dense<0.000000e+00> : vector<2x48xf32>
    %123 = tpu.matmul %91, %84, %cst_62 {dimension_numbers = #tpu.dot_dimension_numbers<[1], [0], [0], [1], [0, 0, 1, 1], [], []>} : vector<2x16xf32>, vector<16x48xf32>, vector<2x48xf32> -> vector<2x48xf32>
    %124 = vector.extract_strided_slice %122 {offsets = [0, 0], sizes = [2, 32], strides = [1, 1]} : vector<2x48xf32> to vector<2x32xf32>
    %125 = vector.extract_strided_slice %123 {offsets = [0, 0], sizes = [2, 32], strides = [1, 1]} : vector<2x48xf32> to vector<2x32xf32>
    %126 = arith.addf %124, %125 : vector<2x32xf32>
    %127 = arith.negf %126 : vector<2x32xf32>
    %128 = math.exp %127 : vector<2x32xf32>
    %cst_63 = arith.constant 1.000000e+00 : f32
    %129 = vector.broadcast %cst_63 : f32 to vector<2x32xf32>
    %130 = arith.addf %129, %128 : vector<2x32xf32>
    %131 = arith.divf %129, %130 : vector<2x32xf32>
    %132 = vector.extract_strided_slice %131 {offsets = [0, 0], sizes = [2, 16], strides = [1, 1]} : vector<2x32xf32> to vector<2x16xf32>
    %133 = vector.extract_strided_slice %131 {offsets = [0, 16], sizes = [2, 16], strides = [1, 1]} : vector<2x32xf32> to vector<2x16xf32>
    %134 = vector.extract_strided_slice %122 {offsets = [0, 32], sizes = [2, 16], strides = [1, 1]} : vector<2x48xf32> to vector<2x16xf32>
    %135 = vector.extract_strided_slice %123 {offsets = [0, 32], sizes = [2, 16], strides = [1, 1]} : vector<2x48xf32> to vector<2x16xf32>
    %136 = arith.addf %135, %90 : vector<2x16xf32>
    %137 = arith.mulf %132, %136 : vector<2x16xf32>
    %138 = arith.addf %134, %137 : vector<2x16xf32>
    %139 = math.tanh %138 : vector<2x16xf32>
    %cst_64 = arith.constant 1.000000e+00 : f32
    %140 = vector.broadcast %cst_64 : f32 to vector<2x16xf32>
    %141 = arith.subf %140, %133 : vector<2x16xf32>
    %142 = arith.mulf %141, %139 : vector<2x16xf32>
    %143 = arith.mulf %133, %91 : vector<2x16xf32>
    %144 = arith.addf %142, %143 : vector<2x16xf32>
    %145 = vector.broadcast %c0_i32_53 : i32 to vector<2x1xi32>
    %146 = arith.cmpi sgt, %82, %145 : vector<2x1xi32>
    %147 = vector.broadcast %92 : i32 to vector<2x1xi32>
    %148 = arith.cmpi sgt, %82, %147 : vector<2x1xi32>
    %cst_65 = arith.constant 0.000000e+00 : f32
    %149 = vector.shape_cast %146 : vector<2x1xi1> to vector<2x1xi1>
    %150 = vector.broadcast %149 : vector<2x1xi1> to vector<2x16xi1>
    %151 = vector.broadcast %cst_65 : f32 to vector<2x16xf32>
    %152 = arith.select %150, %121, %151 : vector<2x16xi1>, vector<2x16xf32>
    %153 = arith.index_cast %c0_i32_53 : i32 to index
    %c0_66 = arith.constant 0 : index
    %c0_67 = arith.constant 0 : index
    %154 = vector.load %arg12[%153, %c0_66, %c0_67] : memref<8x2x32xf32, #tpu.memory_space<vmem>>, vector<1x2x16xf32>
    %155 = vector.shape_cast %154 : vector<1x2x16xf32> to vector<2x16xf32>
    %156 = vector.shape_cast %152 : vector<2x16xf32> to vector<1x2x16xf32>
    tpu.vector_store %arg12[%153, %c0_66, %c0_67], %156 {strides = array<i32>} : memref<8x2x32xf32, #tpu.memory_space<vmem>>, vector<1x2x16xf32>,
    %cst_68 = arith.constant 0.000000e+00 : f32
    %157 = vector.shape_cast %148 : vector<2x1xi1> to vector<2x1xi1>
    %158 = vector.broadcast %157 : vector<2x1xi1> to vector<2x16xi1>
    %159 = vector.broadcast %cst_68 : f32 to vector<2x16xf32>
    %160 = arith.select %158, %144, %159 : vector<2x16xi1>, vector<2x16xf32>
    %161 = arith.index_cast %92 : i32 to index
    %c0_69 = arith.constant 0 : index
    %c16 = arith.constant 16 : index
    %162 = vector.load %arg12[%161, %c0_69, %c16] : memref<8x2x32xf32, #tpu.memory_space<vmem>>, vector<1x2x16xf32>
    %163 = vector.shape_cast %162 : vector<1x2x16xf32> to vector<2x16xf32>
    %164 = vector.shape_cast %160 : vector<2x16xf32> to vector<1x2x16xf32>
    tpu.vector_store %arg12[%161, %c0_69, %c16], %164 {strides = array<i32>} : memref<8x2x32xf32, #tpu.memory_space<vmem>>, vector<1x2x16xf32>,
    %165 = vector.shape_cast %146 : vector<2x1xi1> to vector<2x1xi1>
    %166 = vector.broadcast %165 : vector<2x1xi1> to vector<2x16xi1>
    %167 = arith.select %166, %121, %91 : vector<2x16xi1>, vector<2x16xf32>
    %168 = vector.shape_cast %148 : vector<2x1xi1> to vector<2x1xi1>
    %169 = vector.broadcast %168 : vector<2x1xi1> to vector<2x16xi1>
    %170 = arith.select %169, %144, %91 : vector<2x16xi1>, vector<2x16xf32>
    %c1_i32_70 = arith.constant 1 : i32
    %c7_i32_71 = arith.constant 7 : i32
    %171 = arith.subi %c7_i32_71, %c1_i32_70 : i32
    %172 = arith.index_cast %c1_i32_70 : i32 to index
    %c0_72 = arith.constant 0 : index
    %c0_73 = arith.constant 0 : index
    %173 = vector.load %arg13[%172, %c0_72, %c0_73] : memref<8x2x96xf32, #tpu.memory_space<vmem>>, vector<1x2x96xf32>
    %174 = vector.shape_cast %173 : vector<1x2x96xf32> to vector<2x96xf32>
    %175 = arith.index_cast %171 : i32 to index
    %c0_74 = arith.constant 0 : index
    %c0_75 = arith.constant 0 : index
    %176 = vector.load %arg13[%175, %c0_74, %c0_75] : memref<8x2x96xf32, #tpu.memory_space<vmem>>, vector<1x2x96xf32>
    %177 = vector.shape_cast %176 : vector<1x2x96xf32> to vector<2x96xf32>
    %178 = vector.extract_strided_slice %174 {offsets = [0, 0], sizes = [2, 48], strides = [1, 1]} : vector<2x96xf32> to vector<2x48xf32>
    %cst_76 = arith.constant dense<0.000000e+00> : vector<2x48xf32>
    %179 = tpu.matmul %167, %83, %cst_76 {dimension_numbers = #tpu.dot_dimension_numbers<[1], [0], [0], [1], [0, 0, 1, 1], [], []>} : vector<2x16xf32>, vector<16x48xf32>, vector<2x48xf32> -> vector<2x48xf32>
    %180 = vector.extract_strided_slice %178 {offsets = [0, 0], sizes = [2, 32], strides = [1, 1]} : vector<2x48xf32> to vector<2x32xf32>
    %181 = vector.extract_strided_slice %179 {offsets = [0, 0], sizes = [2, 32], strides = [1, 1]} : vector<2x48xf32> to vector<2x32xf32>
    %182 = arith.addf %180, %181 : vector<2x32xf32>
    %183 = arith.negf %182 : vector<2x32xf32>
    %184 = math.exp %183 : vector<2x32xf32>
    %cst_77 = arith.constant 1.000000e+00 : f32
    %185 = vector.broadcast %cst_77 : f32 to vector<2x32xf32>
    %186 = arith.addf %185, %184 : vector<2x32xf32>
    %187 = arith.divf %185, %186 : vector<2x32xf32>
    %188 = vector.extract_strided_slice %187 {offsets = [0, 0], sizes = [2, 16], strides = [1, 1]} : vector<2x32xf32> to vector<2x16xf32>
    %189 = vector.extract_strided_slice %187 {offsets = [0, 16], sizes = [2, 16], strides = [1, 1]} : vector<2x32xf32> to vector<2x16xf32>
    %190 = vector.extract_strided_slice %178 {offsets = [0, 32], sizes = [2, 16], strides = [1, 1]} : vector<2x48xf32> to vector<2x16xf32>
    %191 = vector.extract_strided_slice %179 {offsets = [0, 32], sizes = [2, 16], strides = [1, 1]} : vector<2x48xf32> to vector<2x16xf32>
    %192 = arith.addf %191, %87 : vector<2x16xf32>
    %193 = arith.mulf %188, %192 : vector<2x16xf32>
    %194 = arith.addf %190, %193 : vector<2x16xf32>
    %195 = math.tanh %194 : vector<2x16xf32>
    %cst_78 = arith.constant 1.000000e+00 : f32
    %196 = vector.broadcast %cst_78 : f32 to vector<2x16xf32>
    %197 = arith.subf %196, %189 : vector<2x16xf32>
    %198 = arith.mulf %197, %195 : vector<2x16xf32>
    %199 = arith.mulf %189, %167 : vector<2x16xf32>
    %200 = arith.addf %198, %199 : vector<2x16xf32>
    %201 = vector.extract_strided_slice %177 {offsets = [0, 48], sizes = [2, 48], strides = [1, 1]} : vector<2x96xf32> to vector<2x48xf32>
    %cst_79 = arith.constant dense<0.000000e+00> : vector<2x48xf32>
    %202 = tpu.matmul %170, %84, %cst_79 {dimension_numbers = #tpu.dot_dimension_numbers<[1], [0], [0], [1], [0, 0, 1, 1], [], []>} : vector<2x16xf32>, vector<16x48xf32>, vector<2x48xf32> -> vector<2x48xf32>
    %203 = vector.extract_strided_slice %201 {offsets = [0, 0], sizes = [2, 32], strides = [1, 1]} : vector<2x48xf32> to vector<2x32xf32>
    %204 = vector.extract_strided_slice %202 {offsets = [0, 0], sizes = [2, 32], strides = [1, 1]} : vector<2x48xf32> to vector<2x32xf32>
    %205 = arith.addf %203, %204 : vector<2x32xf32>
    %206 = arith.negf %205 : vector<2x32xf32>
    %207 = math.exp %206 : vector<2x32xf32>
    %cst_80 = arith.constant 1.000000e+00 : f32
    %208 = vector.broadcast %cst_80 : f32 to vector<2x32xf32>
    %209 = arith.addf %208, %207 : vector<2x32xf32>
    %210 = arith.divf %208, %209 : vector<2x32xf32>
    %211 = vector.extract_strided_slice %210 {offsets = [0, 0], sizes = [2, 16], strides = [1, 1]} : vector<2x32xf32> to vector<2x16xf32>
    %212 = vector.extract_strided_slice %210 {offsets = [0, 16], sizes = [2, 16], strides = [1, 1]} : vector<2x32xf32> to vector<2x16xf32>
    %213 = vector.extract_strided_slice %201 {offsets = [0, 32], sizes = [2, 16], strides = [1, 1]} : vector<2x48xf32> to vector<2x16xf32>
    %214 = vector.extract_strided_slice %202 {offsets = [0, 32], sizes = [2, 16], strides = [1, 1]} : vector<2x48xf32> to vector<2x16xf32>
    %215 = arith.addf %214, %90 : vector<2x16xf32>
    %216 = arith.mulf %211, %215 : vector<2x16xf32>
    %217 = arith.addf %213, %216 : vector<2x16xf32>
    %218 = math.tanh %217 : vector<2x16xf32>
    %cst_81 = arith.constant 1.000000e+00 : f32
    %219 = vector.broadcast %cst_81 : f32 to vector<2x16xf32>
    %220 = arith.subf %219, %212 : vector<2x16xf32>
    %221 = arith.mulf %220, %218 : vector<2x16xf32>
    %222 = arith.mulf %212, %170 : vector<2x16xf32>
    %223 = arith.addf %221, %222 : vector<2x16xf32>
    %224 = vector.broadcast %c1_i32_70 : i32 to vector<2x1xi32>
    %225 = arith.cmpi sgt, %82, %224 : vector<2x1xi32>
    %226 = vector.broadcast %171 : i32 to vector<2x1xi32>
    %227 = arith.cmpi sgt, %82, %226 : vector<2x1xi32>
    %cst_82 = arith.constant 0.000000e+00 : f32
    %228 = vector.shape_cast %225 : vector<2x1xi1> to vector<2x1xi1>
    %229 = vector.broadcast %228 : vector<2x1xi1> to vector<2x16xi1>
    %230 = vector.broadcast %cst_82 : f32 to vector<2x16xf32>
    %231 = arith.select %229, %200, %230 : vector<2x16xi1>, vector<2x16xf32>
    %232 = arith.index_cast %c1_i32_70 : i32 to index
    %c0_83 = arith.constant 0 : index
    %c0_84 = arith.constant 0 : index
    %233 = vector.load %arg12[%232, %c0_83, %c0_84] : memref<8x2x32xf32, #tpu.memory_space<vmem>>, vector<1x2x16xf32>
    %234 = vector.shape_cast %233 : vector<1x2x16xf32> to vector<2x16xf32>
    %235 = vector.shape_cast %231 : vector<2x16xf32> to vector<1x2x16xf32>
    tpu.vector_store %arg12[%232, %c0_83, %c0_84], %235 {strides = array<i32>} : memref<8x2x32xf32, #tpu.memory_space<vmem>>, vector<1x2x16xf32>,
    %cst_85 = arith.constant 0.000000e+00 : f32
    %236 = vector.shape_cast %227 : vector<2x1xi1> to vector<2x1xi1>
    %237 = vector.broadcast %236 : vector<2x1xi1> to vector<2x16xi1>
    %238 = vector.broadcast %cst_85 : f32 to vector<2x16xf32>
    %239 = arith.select %237, %223, %238 : vector<2x16xi1>, vector<2x16xf32>
    %240 = arith.index_cast %171 : i32 to index
    %c0_86 = arith.constant 0 : index
    %c16_87 = arith.constant 16 : index
    %241 = vector.load %arg12[%240, %c0_86, %c16_87] : memref<8x2x32xf32, #tpu.memory_space<vmem>>, vector<1x2x16xf32>
    %242 = vector.shape_cast %241 : vector<1x2x16xf32> to vector<2x16xf32>
    %243 = vector.shape_cast %239 : vector<2x16xf32> to vector<1x2x16xf32>
    tpu.vector_store %arg12[%240, %c0_86, %c16_87], %243 {strides = array<i32>} : memref<8x2x32xf32, #tpu.memory_space<vmem>>, vector<1x2x16xf32>,
    %244 = vector.shape_cast %225 : vector<2x1xi1> to vector<2x1xi1>
    %245 = vector.broadcast %244 : vector<2x1xi1> to vector<2x16xi1>
    %246 = arith.select %245, %200, %167 : vector<2x16xi1>, vector<2x16xf32>
    %247 = vector.shape_cast %227 : vector<2x1xi1> to vector<2x1xi1>
    %248 = vector.broadcast %247 : vector<2x1xi1> to vector<2x16xi1>
    %249 = arith.select %248, %223, %170 : vector<2x16xi1>, vector<2x16xf32>
    %c2_i32_88 = arith.constant 2 : i32
    %c7_i32_89 = arith.constant 7 : i32
    %250 = arith.subi %c7_i32_89, %c2_i32_88 : i32
    %251 = arith.index_cast %c2_i32_88 : i32 to index
    %c0_90 = arith.constant 0 : index
    %c0_91 = arith.constant 0 : index
    %252 = vector.load %arg13[%251, %c0_90, %c0_91] : memref<8x2x96xf32, #tpu.memory_space<vmem>>, vector<1x2x96xf32>
    %253 = vector.shape_cast %252 : vector<1x2x96xf32> to vector<2x96xf32>
    %254 = arith.index_cast %250 : i32 to index
    %c0_92 = arith.constant 0 : index
    %c0_93 = arith.constant 0 : index
    %255 = vector.load %arg13[%254, %c0_92, %c0_93] : memref<8x2x96xf32, #tpu.memory_space<vmem>>, vector<1x2x96xf32>
    %256 = vector.shape_cast %255 : vector<1x2x96xf32> to vector<2x96xf32>
    %257 = vector.extract_strided_slice %253 {offsets = [0, 0], sizes = [2, 48], strides = [1, 1]} : vector<2x96xf32> to vector<2x48xf32>
    %cst_94 = arith.constant dense<0.000000e+00> : vector<2x48xf32>
    %258 = tpu.matmul %246, %83, %cst_94 {dimension_numbers = #tpu.dot_dimension_numbers<[1], [0], [0], [1], [0, 0, 1, 1], [], []>} : vector<2x16xf32>, vector<16x48xf32>, vector<2x48xf32> -> vector<2x48xf32>
    %259 = vector.extract_strided_slice %257 {offsets = [0, 0], sizes = [2, 32], strides = [1, 1]} : vector<2x48xf32> to vector<2x32xf32>
    %260 = vector.extract_strided_slice %258 {offsets = [0, 0], sizes = [2, 32], strides = [1, 1]} : vector<2x48xf32> to vector<2x32xf32>
    %261 = arith.addf %259, %260 : vector<2x32xf32>
    %262 = arith.negf %261 : vector<2x32xf32>
    %263 = math.exp %262 : vector<2x32xf32>
    %cst_95 = arith.constant 1.000000e+00 : f32
    %264 = vector.broadcast %cst_95 : f32 to vector<2x32xf32>
    %265 = arith.addf %264, %263 : vector<2x32xf32>
    %266 = arith.divf %264, %265 : vector<2x32xf32>
    %267 = vector.extract_strided_slice %266 {offsets = [0, 0], sizes = [2, 16], strides = [1, 1]} : vector<2x32xf32> to vector<2x16xf32>
    %268 = vector.extract_strided_slice %266 {offsets = [0, 16], sizes = [2, 16], strides = [1, 1]} : vector<2x32xf32> to vector<2x16xf32>
    %269 = vector.extract_strided_slice %257 {offsets = [0, 32], sizes = [2, 16], strides = [1, 1]} : vector<2x48xf32> to vector<2x16xf32>
    %270 = vector.extract_strided_slice %258 {offsets = [0, 32], sizes = [2, 16], strides = [1, 1]} : vector<2x48xf32> to vector<2x16xf32>
    %271 = arith.addf %270, %87 : vector<2x16xf32>
    %272 = arith.mulf %267, %271 : vector<2x16xf32>
    %273 = arith.addf %269, %272 : vector<2x16xf32>
    %274 = math.tanh %273 : vector<2x16xf32>
    %cst_96 = arith.constant 1.000000e+00 : f32
    %275 = vector.broadcast %cst_96 : f32 to vector<2x16xf32>
    %276 = arith.subf %275, %268 : vector<2x16xf32>
    %277 = arith.mulf %276, %274 : vector<2x16xf32>
    %278 = arith.mulf %268, %246 : vector<2x16xf32>
    %279 = arith.addf %277, %278 : vector<2x16xf32>
    %280 = vector.extract_strided_slice %256 {offsets = [0, 48], sizes = [2, 48], strides = [1, 1]} : vector<2x96xf32> to vector<2x48xf32>
    %cst_97 = arith.constant dense<0.000000e+00> : vector<2x48xf32>
    %281 = tpu.matmul %249, %84, %cst_97 {dimension_numbers = #tpu.dot_dimension_numbers<[1], [0], [0], [1], [0, 0, 1, 1], [], []>} : vector<2x16xf32>, vector<16x48xf32>, vector<2x48xf32> -> vector<2x48xf32>
    %282 = vector.extract_strided_slice %280 {offsets = [0, 0], sizes = [2, 32], strides = [1, 1]} : vector<2x48xf32> to vector<2x32xf32>
    %283 = vector.extract_strided_slice %281 {offsets = [0, 0], sizes = [2, 32], strides = [1, 1]} : vector<2x48xf32> to vector<2x32xf32>
    %284 = arith.addf %282, %283 : vector<2x32xf32>
    %285 = arith.negf %284 : vector<2x32xf32>
    %286 = math.exp %285 : vector<2x32xf32>
    %cst_98 = arith.constant 1.000000e+00 : f32
    %287 = vector.broadcast %cst_98 : f32 to vector<2x32xf32>
    %288 = arith.addf %287, %286 : vector<2x32xf32>
    %289 = arith.divf %287, %288 : vector<2x32xf32>
    %290 = vector.extract_strided_slice %289 {offsets = [0, 0], sizes = [2, 16], strides = [1, 1]} : vector<2x32xf32> to vector<2x16xf32>
    %291 = vector.extract_strided_slice %289 {offsets = [0, 16], sizes = [2, 16], strides = [1, 1]} : vector<2x32xf32> to vector<2x16xf32>
    %292 = vector.extract_strided_slice %280 {offsets = [0, 32], sizes = [2, 16], strides = [1, 1]} : vector<2x48xf32> to vector<2x16xf32>
    %293 = vector.extract_strided_slice %281 {offsets = [0, 32], sizes = [2, 16], strides = [1, 1]} : vector<2x48xf32> to vector<2x16xf32>
    %294 = arith.addf %293, %90 : vector<2x16xf32>
    %295 = arith.mulf %290, %294 : vector<2x16xf32>
    %296 = arith.addf %292, %295 : vector<2x16xf32>
    %297 = math.tanh %296 : vector<2x16xf32>
    %cst_99 = arith.constant 1.000000e+00 : f32
    %298 = vector.broadcast %cst_99 : f32 to vector<2x16xf32>
    %299 = arith.subf %298, %291 : vector<2x16xf32>
    %300 = arith.mulf %299, %297 : vector<2x16xf32>
    %301 = arith.mulf %291, %249 : vector<2x16xf32>
    %302 = arith.addf %300, %301 : vector<2x16xf32>
    %303 = vector.broadcast %c2_i32_88 : i32 to vector<2x1xi32>
    %304 = arith.cmpi sgt, %82, %303 : vector<2x1xi32>
    %305 = vector.broadcast %250 : i32 to vector<2x1xi32>
    %306 = arith.cmpi sgt, %82, %305 : vector<2x1xi32>
    %cst_100 = arith.constant 0.000000e+00 : f32
    %307 = vector.shape_cast %304 : vector<2x1xi1> to vector<2x1xi1>
    %308 = vector.broadcast %307 : vector<2x1xi1> to vector<2x16xi1>
    %309 = vector.broadcast %cst_100 : f32 to vector<2x16xf32>
    %310 = arith.select %308, %279, %309 : vector<2x16xi1>, vector<2x16xf32>
    %311 = arith.index_cast %c2_i32_88 : i32 to index
    %c0_101 = arith.constant 0 : index
    %c0_102 = arith.constant 0 : index
    %312 = vector.load %arg12[%311, %c0_101, %c0_102] : memref<8x2x32xf32, #tpu.memory_space<vmem>>, vector<1x2x16xf32>
    %313 = vector.shape_cast %312 : vector<1x2x16xf32> to vector<2x16xf32>
    %314 = vector.shape_cast %310 : vector<2x16xf32> to vector<1x2x16xf32>
    tpu.vector_store %arg12[%311, %c0_101, %c0_102], %314 {strides = array<i32>} : memref<8x2x32xf32, #tpu.memory_space<vmem>>, vector<1x2x16xf32>,
    %cst_103 = arith.constant 0.000000e+00 : f32
    %315 = vector.shape_cast %306 : vector<2x1xi1> to vector<2x1xi1>
    %316 = vector.broadcast %315 : vector<2x1xi1> to vector<2x16xi1>
    %317 = vector.broadcast %cst_103 : f32 to vector<2x16xf32>
    %318 = arith.select %316, %302, %317 : vector<2x16xi1>, vector<2x16xf32>
    %319 = arith.index_cast %250 : i32 to index
    %c0_104 = arith.constant 0 : index
    %c16_105 = arith.constant 16 : index
    %320 = vector.load %arg12[%319, %c0_104, %c16_105] : memref<8x2x32xf32, #tpu.memory_space<vmem>>, vector<1x2x16xf32>
    %321 = vector.shape_cast %320 : vector<1x2x16xf32> to vector<2x16xf32>
    %322 = vector.shape_cast %318 : vector<2x16xf32> to vector<1x2x16xf32>
    tpu.vector_store %arg12[%319, %c0_104, %c16_105], %322 {strides = array<i32>} : memref<8x2x32xf32, #tpu.memory_space<vmem>>, vector<1x2x16xf32>,
    %323 = vector.shape_cast %304 : vector<2x1xi1> to vector<2x1xi1>
    %324 = vector.broadcast %323 : vector<2x1xi1> to vector<2x16xi1>
    %325 = arith.select %324, %279, %246 : vector<2x16xi1>, vector<2x16xf32>
    %326 = vector.shape_cast %306 : vector<2x1xi1> to vector<2x1xi1>
    %327 = vector.broadcast %326 : vector<2x1xi1> to vector<2x16xi1>
    %328 = arith.select %327, %302, %249 : vector<2x16xi1>, vector<2x16xf32>
    %c3_i32_106 = arith.constant 3 : i32
    %c7_i32_107 = arith.constant 7 : i32
    %329 = arith.subi %c7_i32_107, %c3_i32_106 : i32
    %330 = arith.index_cast %c3_i32_106 : i32 to index
    %c0_108 = arith.constant 0 : index
    %c0_109 = arith.constant 0 : index
    %331 = vector.load %arg13[%330, %c0_108, %c0_109] : memref<8x2x96xf32, #tpu.memory_space<vmem>>, vector<1x2x96xf32>
    %332 = vector.shape_cast %331 : vector<1x2x96xf32> to vector<2x96xf32>
    %333 = arith.index_cast %329 : i32 to index
    %c0_110 = arith.constant 0 : index
    %c0_111 = arith.constant 0 : index
    %334 = vector.load %arg13[%333, %c0_110, %c0_111] : memref<8x2x96xf32, #tpu.memory_space<vmem>>, vector<1x2x96xf32>
    %335 = vector.shape_cast %334 : vector<1x2x96xf32> to vector<2x96xf32>
    %336 = vector.extract_strided_slice %332 {offsets = [0, 0], sizes = [2, 48], strides = [1, 1]} : vector<2x96xf32> to vector<2x48xf32>
    %cst_112 = arith.constant dense<0.000000e+00> : vector<2x48xf32>
    %337 = tpu.matmul %325, %83, %cst_112 {dimension_numbers = #tpu.dot_dimension_numbers<[1], [0], [0], [1], [0, 0, 1, 1], [], []>} : vector<2x16xf32>, vector<16x48xf32>, vector<2x48xf32> -> vector<2x48xf32>
    %338 = vector.extract_strided_slice %336 {offsets = [0, 0], sizes = [2, 32], strides = [1, 1]} : vector<2x48xf32> to vector<2x32xf32>
    %339 = vector.extract_strided_slice %337 {offsets = [0, 0], sizes = [2, 32], strides = [1, 1]} : vector<2x48xf32> to vector<2x32xf32>
    %340 = arith.addf %338, %339 : vector<2x32xf32>
    %341 = arith.negf %340 : vector<2x32xf32>
    %342 = math.exp %341 : vector<2x32xf32>
    %cst_113 = arith.constant 1.000000e+00 : f32
    %343 = vector.broadcast %cst_113 : f32 to vector<2x32xf32>
    %344 = arith.addf %343, %342 : vector<2x32xf32>
    %345 = arith.divf %343, %344 : vector<2x32xf32>
    %346 = vector.extract_strided_slice %345 {offsets = [0, 0], sizes = [2, 16], strides = [1, 1]} : vector<2x32xf32> to vector<2x16xf32>
    %347 = vector.extract_strided_slice %345 {offsets = [0, 16], sizes = [2, 16], strides = [1, 1]} : vector<2x32xf32> to vector<2x16xf32>
    %348 = vector.extract_strided_slice %336 {offsets = [0, 32], sizes = [2, 16], strides = [1, 1]} : vector<2x48xf32> to vector<2x16xf32>
    %349 = vector.extract_strided_slice %337 {offsets = [0, 32], sizes = [2, 16], strides = [1, 1]} : vector<2x48xf32> to vector<2x16xf32>
    %350 = arith.addf %349, %87 : vector<2x16xf32>
    %351 = arith.mulf %346, %350 : vector<2x16xf32>
    %352 = arith.addf %348, %351 : vector<2x16xf32>
    %353 = math.tanh %352 : vector<2x16xf32>
    %cst_114 = arith.constant 1.000000e+00 : f32
    %354 = vector.broadcast %cst_114 : f32 to vector<2x16xf32>
    %355 = arith.subf %354, %347 : vector<2x16xf32>
    %356 = arith.mulf %355, %353 : vector<2x16xf32>
    %357 = arith.mulf %347, %325 : vector<2x16xf32>
    %358 = arith.addf %356, %357 : vector<2x16xf32>
    %359 = vector.extract_strided_slice %335 {offsets = [0, 48], sizes = [2, 48], strides = [1, 1]} : vector<2x96xf32> to vector<2x48xf32>
    %cst_115 = arith.constant dense<0.000000e+00> : vector<2x48xf32>
    %360 = tpu.matmul %328, %84, %cst_115 {dimension_numbers = #tpu.dot_dimension_numbers<[1], [0], [0], [1], [0, 0, 1, 1], [], []>} : vector<2x16xf32>, vector<16x48xf32>, vector<2x48xf32> -> vector<2x48xf32>
    %361 = vector.extract_strided_slice %359 {offsets = [0, 0], sizes = [2, 32], strides = [1, 1]} : vector<2x48xf32> to vector<2x32xf32>
    %362 = vector.extract_strided_slice %360 {offsets = [0, 0], sizes = [2, 32], strides = [1, 1]} : vector<2x48xf32> to vector<2x32xf32>
    %363 = arith.addf %361, %362 : vector<2x32xf32>
    %364 = arith.negf %363 : vector<2x32xf32>
    %365 = math.exp %364 : vector<2x32xf32>
    %cst_116 = arith.constant 1.000000e+00 : f32
    %366 = vector.broadcast %cst_116 : f32 to vector<2x32xf32>
    %367 = arith.addf %366, %365 : vector<2x32xf32>
    %368 = arith.divf %366, %367 : vector<2x32xf32>
    %369 = vector.extract_strided_slice %368 {offsets = [0, 0], sizes = [2, 16], strides = [1, 1]} : vector<2x32xf32> to vector<2x16xf32>
    %370 = vector.extract_strided_slice %368 {offsets = [0, 16], sizes = [2, 16], strides = [1, 1]} : vector<2x32xf32> to vector<2x16xf32>
    %371 = vector.extract_strided_slice %359 {offsets = [0, 32], sizes = [2, 16], strides = [1, 1]} : vector<2x48xf32> to vector<2x16xf32>
    %372 = vector.extract_strided_slice %360 {offsets = [0, 32], sizes = [2, 16], strides = [1, 1]} : vector<2x48xf32> to vector<2x16xf32>
    %373 = arith.addf %372, %90 : vector<2x16xf32>
    %374 = arith.mulf %369, %373 : vector<2x16xf32>
    %375 = arith.addf %371, %374 : vector<2x16xf32>
    %376 = math.tanh %375 : vector<2x16xf32>
    %cst_117 = arith.constant 1.000000e+00 : f32
    %377 = vector.broadcast %cst_117 : f32 to vector<2x16xf32>
    %378 = arith.subf %377, %370 : vector<2x16xf32>
    %379 = arith.mulf %378, %376 : vector<2x16xf32>
    %380 = arith.mulf %370, %328 : vector<2x16xf32>
    %381 = arith.addf %379, %380 : vector<2x16xf32>
    %382 = vector.broadcast %c3_i32_106 : i32 to vector<2x1xi32>
    %383 = arith.cmpi sgt, %82, %382 : vector<2x1xi32>
    %384 = vector.broadcast %329 : i32 to vector<2x1xi32>
    %385 = arith.cmpi sgt, %82, %384 : vector<2x1xi32>
    %cst_118 = arith.constant 0.000000e+00 : f32
    %386 = vector.shape_cast %383 : vector<2x1xi1> to vector<2x1xi1>
    %387 = vector.broadcast %386 : vector<2x1xi1> to vector<2x16xi1>
    %388 = vector.broadcast %cst_118 : f32 to vector<2x16xf32>
    %389 = arith.select %387, %358, %388 : vector<2x16xi1>, vector<2x16xf32>
    %390 = arith.index_cast %c3_i32_106 : i32 to index
    %c0_119 = arith.constant 0 : index
    %c0_120 = arith.constant 0 : index
    %391 = vector.load %arg12[%390, %c0_119, %c0_120] : memref<8x2x32xf32, #tpu.memory_space<vmem>>, vector<1x2x16xf32>
    %392 = vector.shape_cast %391 : vector<1x2x16xf32> to vector<2x16xf32>
    %393 = vector.shape_cast %389 : vector<2x16xf32> to vector<1x2x16xf32>
    tpu.vector_store %arg12[%390, %c0_119, %c0_120], %393 {strides = array<i32>} : memref<8x2x32xf32, #tpu.memory_space<vmem>>, vector<1x2x16xf32>,
    %cst_121 = arith.constant 0.000000e+00 : f32
    %394 = vector.shape_cast %385 : vector<2x1xi1> to vector<2x1xi1>
    %395 = vector.broadcast %394 : vector<2x1xi1> to vector<2x16xi1>
    %396 = vector.broadcast %cst_121 : f32 to vector<2x16xf32>
    %397 = arith.select %395, %381, %396 : vector<2x16xi1>, vector<2x16xf32>
    %398 = arith.index_cast %329 : i32 to index
    %c0_122 = arith.constant 0 : index
    %c16_123 = arith.constant 16 : index
    %399 = vector.load %arg12[%398, %c0_122, %c16_123] : memref<8x2x32xf32, #tpu.memory_space<vmem>>, vector<1x2x16xf32>
    %400 = vector.shape_cast %399 : vector<1x2x16xf32> to vector<2x16xf32>
    %401 = vector.shape_cast %397 : vector<2x16xf32> to vector<1x2x16xf32>
    tpu.vector_store %arg12[%398, %c0_122, %c16_123], %401 {strides = array<i32>} : memref<8x2x32xf32, #tpu.memory_space<vmem>>, vector<1x2x16xf32>,
    %402 = vector.shape_cast %383 : vector<2x1xi1> to vector<2x1xi1>
    %403 = vector.broadcast %402 : vector<2x1xi1> to vector<2x16xi1>
    %404 = arith.select %403, %358, %325 : vector<2x16xi1>, vector<2x16xf32>
    %405 = vector.shape_cast %385 : vector<2x1xi1> to vector<2x1xi1>
    %406 = vector.broadcast %405 : vector<2x1xi1> to vector<2x16xi1>
    %407 = arith.select %406, %381, %328 : vector<2x16xi1>, vector<2x16xf32>
    %c4_i32_124 = arith.constant 4 : i32
    %c7_i32_125 = arith.constant 7 : i32
    %408 = arith.subi %c7_i32_125, %c4_i32_124 : i32
    %409 = arith.index_cast %c4_i32_124 : i32 to index
    %c0_126 = arith.constant 0 : index
    %c0_127 = arith.constant 0 : index
    %410 = vector.load %arg13[%409, %c0_126, %c0_127] : memref<8x2x96xf32, #tpu.memory_space<vmem>>, vector<1x2x96xf32>
    %411 = vector.shape_cast %410 : vector<1x2x96xf32> to vector<2x96xf32>
    %412 = arith.index_cast %408 : i32 to index
    %c0_128 = arith.constant 0 : index
    %c0_129 = arith.constant 0 : index
    %413 = vector.load %arg13[%412, %c0_128, %c0_129] : memref<8x2x96xf32, #tpu.memory_space<vmem>>, vector<1x2x96xf32>
    %414 = vector.shape_cast %413 : vector<1x2x96xf32> to vector<2x96xf32>
    %415 = vector.extract_strided_slice %411 {offsets = [0, 0], sizes = [2, 48], strides = [1, 1]} : vector<2x96xf32> to vector<2x48xf32>
    %cst_130 = arith.constant dense<0.000000e+00> : vector<2x48xf32>
    %416 = tpu.matmul %404, %83, %cst_130 {dimension_numbers = #tpu.dot_dimension_numbers<[1], [0], [0], [1], [0, 0, 1, 1], [], []>} : vector<2x16xf32>, vector<16x48xf32>, vector<2x48xf32> -> vector<2x48xf32>
    %417 = vector.extract_strided_slice %415 {offsets = [0, 0], sizes = [2, 32], strides = [1, 1]} : vector<2x48xf32> to vector<2x32xf32>
    %418 = vector.extract_strided_slice %416 {offsets = [0, 0], sizes = [2, 32], strides = [1, 1]} : vector<2x48xf32> to vector<2x32xf32>
    %419 = arith.addf %417, %418 : vector<2x32xf32>
    %420 = arith.negf %419 : vector<2x32xf32>
    %421 = math.exp %420 : vector<2x32xf32>
    %cst_131 = arith.constant 1.000000e+00 : f32
    %422 = vector.broadcast %cst_131 : f32 to vector<2x32xf32>
    %423 = arith.addf %422, %421 : vector<2x32xf32>
    %424 = arith.divf %422, %423 : vector<2x32xf32>
    %425 = vector.extract_strided_slice %424 {offsets = [0, 0], sizes = [2, 16], strides = [1, 1]} : vector<2x32xf32> to vector<2x16xf32>
    %426 = vector.extract_strided_slice %424 {offsets = [0, 16], sizes = [2, 16], strides = [1, 1]} : vector<2x32xf32> to vector<2x16xf32>
    %427 = vector.extract_strided_slice %415 {offsets = [0, 32], sizes = [2, 16], strides = [1, 1]} : vector<2x48xf32> to vector<2x16xf32>
    %428 = vector.extract_strided_slice %416 {offsets = [0, 32], sizes = [2, 16], strides = [1, 1]} : vector<2x48xf32> to vector<2x16xf32>
    %429 = arith.addf %428, %87 : vector<2x16xf32>
    %430 = arith.mulf %425, %429 : vector<2x16xf32>
    %431 = arith.addf %427, %430 : vector<2x16xf32>
    %432 = math.tanh %431 : vector<2x16xf32>
    %cst_132 = arith.constant 1.000000e+00 : f32
    %433 = vector.broadcast %cst_132 : f32 to vector<2x16xf32>
    %434 = arith.subf %433, %426 : vector<2x16xf32>
    %435 = arith.mulf %434, %432 : vector<2x16xf32>
    %436 = arith.mulf %426, %404 : vector<2x16xf32>
    %437 = arith.addf %435, %436 : vector<2x16xf32>
    %438 = vector.extract_strided_slice %414 {offsets = [0, 48], sizes = [2, 48], strides = [1, 1]} : vector<2x96xf32> to vector<2x48xf32>
    %cst_133 = arith.constant dense<0.000000e+00> : vector<2x48xf32>
    %439 = tpu.matmul %407, %84, %cst_133 {dimension_numbers = #tpu.dot_dimension_numbers<[1], [0], [0], [1], [0, 0, 1, 1], [], []>} : vector<2x16xf32>, vector<16x48xf32>, vector<2x48xf32> -> vector<2x48xf32>
    %440 = vector.extract_strided_slice %438 {offsets = [0, 0], sizes = [2, 32], strides = [1, 1]} : vector<2x48xf32> to vector<2x32xf32>
    %441 = vector.extract_strided_slice %439 {offsets = [0, 0], sizes = [2, 32], strides = [1, 1]} : vector<2x48xf32> to vector<2x32xf32>
    %442 = arith.addf %440, %441 : vector<2x32xf32>
    %443 = arith.negf %442 : vector<2x32xf32>
    %444 = math.exp %443 : vector<2x32xf32>
    %cst_134 = arith.constant 1.000000e+00 : f32
    %445 = vector.broadcast %cst_134 : f32 to vector<2x32xf32>
    %446 = arith.addf %445, %444 : vector<2x32xf32>
    %447 = arith.divf %445, %446 : vector<2x32xf32>
    %448 = vector.extract_strided_slice %447 {offsets = [0, 0], sizes = [2, 16], strides = [1, 1]} : vector<2x32xf32> to vector<2x16xf32>
    %449 = vector.extract_strided_slice %447 {offsets = [0, 16], sizes = [2, 16], strides = [1, 1]} : vector<2x32xf32> to vector<2x16xf32>
    %450 = vector.extract_strided_slice %438 {offsets = [0, 32], sizes = [2, 16], strides = [1, 1]} : vector<2x48xf32> to vector<2x16xf32>
    %451 = vector.extract_strided_slice %439 {offsets = [0, 32], sizes = [2, 16], strides = [1, 1]} : vector<2x48xf32> to vector<2x16xf32>
    %452 = arith.addf %451, %90 : vector<2x16xf32>
    %453 = arith.mulf %448, %452 : vector<2x16xf32>
    %454 = arith.addf %450, %453 : vector<2x16xf32>
    %455 = math.tanh %454 : vector<2x16xf32>
    %cst_135 = arith.constant 1.000000e+00 : f32
    %456 = vector.broadcast %cst_135 : f32 to vector<2x16xf32>
    %457 = arith.subf %456, %449 : vector<2x16xf32>
    %458 = arith.mulf %457, %455 : vector<2x16xf32>
    %459 = arith.mulf %449, %407 : vector<2x16xf32>
    %460 = arith.addf %458, %459 : vector<2x16xf32>
    %461 = vector.broadcast %c4_i32_124 : i32 to vector<2x1xi32>
    %462 = arith.cmpi sgt, %82, %461 : vector<2x1xi32>
    %463 = vector.broadcast %408 : i32 to vector<2x1xi32>
    %464 = arith.cmpi sgt, %82, %463 : vector<2x1xi32>
    %cst_136 = arith.constant 0.000000e+00 : f32
    %465 = vector.shape_cast %462 : vector<2x1xi1> to vector<2x1xi1>
    %466 = vector.broadcast %465 : vector<2x1xi1> to vector<2x16xi1>
    %467 = vector.broadcast %cst_136 : f32 to vector<2x16xf32>
    %468 = arith.select %466, %437, %467 : vector<2x16xi1>, vector<2x16xf32>
    %469 = arith.index_cast %c4_i32_124 : i32 to index
    %c0_137 = arith.constant 0 : index
    %c0_138 = arith.constant 0 : index
    %470 = vector.load %arg12[%469, %c0_137, %c0_138] : memref<8x2x32xf32, #tpu.memory_space<vmem>>, vector<1x2x16xf32>
    %471 = vector.shape_cast %470 : vector<1x2x16xf32> to vector<2x16xf32>
    %472 = vector.shape_cast %468 : vector<2x16xf32> to vector<1x2x16xf32>
    tpu.vector_store %arg12[%469, %c0_137, %c0_138], %472 {strides = array<i32>} : memref<8x2x32xf32, #tpu.memory_space<vmem>>, vector<1x2x16xf32>,
    %cst_139 = arith.constant 0.000000e+00 : f32
    %473 = vector.shape_cast %464 : vector<2x1xi1> to vector<2x1xi1>
    %474 = vector.broadcast %473 : vector<2x1xi1> to vector<2x16xi1>
    %475 = vector.broadcast %cst_139 : f32 to vector<2x16xf32>
    %476 = arith.select %474, %460, %475 : vector<2x16xi1>, vector<2x16xf32>
    %477 = arith.index_cast %408 : i32 to index
    %c0_140 = arith.constant 0 : index
    %c16_141 = arith.constant 16 : index
    %478 = vector.load %arg12[%477, %c0_140, %c16_141] : memref<8x2x32xf32, #tpu.memory_space<vmem>>, vector<1x2x16xf32>
    %479 = vector.shape_cast %478 : vector<1x2x16xf32> to vector<2x16xf32>
    %480 = vector.shape_cast %476 : vector<2x16xf32> to vector<1x2x16xf32>
    tpu.vector_store %arg12[%477, %c0_140, %c16_141], %480 {strides = array<i32>} : memref<8x2x32xf32, #tpu.memory_space<vmem>>, vector<1x2x16xf32>,
    %481 = vector.shape_cast %462 : vector<2x1xi1> to vector<2x1xi1>
    %482 = vector.broadcast %481 : vector<2x1xi1> to vector<2x16xi1>
    %483 = arith.select %482, %437, %404 : vector<2x16xi1>, vector<2x16xf32>
    %484 = vector.shape_cast %464 : vector<2x1xi1> to vector<2x1xi1>
    %485 = vector.broadcast %484 : vector<2x1xi1> to vector<2x16xi1>
    %486 = arith.select %485, %460, %407 : vector<2x16xi1>, vector<2x16xf32>
    %c5_i32_142 = arith.constant 5 : i32
    %c7_i32_143 = arith.constant 7 : i32
    %487 = arith.subi %c7_i32_143, %c5_i32_142 : i32
    %488 = arith.index_cast %c5_i32_142 : i32 to index
    %c0_144 = arith.constant 0 : index
    %c0_145 = arith.constant 0 : index
    %489 = vector.load %arg13[%488, %c0_144, %c0_145] : memref<8x2x96xf32, #tpu.memory_space<vmem>>, vector<1x2x96xf32>
    %490 = vector.shape_cast %489 : vector<1x2x96xf32> to vector<2x96xf32>
    %491 = arith.index_cast %487 : i32 to index
    %c0_146 = arith.constant 0 : index
    %c0_147 = arith.constant 0 : index
    %492 = vector.load %arg13[%491, %c0_146, %c0_147] : memref<8x2x96xf32, #tpu.memory_space<vmem>>, vector<1x2x96xf32>
    %493 = vector.shape_cast %492 : vector<1x2x96xf32> to vector<2x96xf32>
    %494 = vector.extract_strided_slice %490 {offsets = [0, 0], sizes = [2, 48], strides = [1, 1]} : vector<2x96xf32> to vector<2x48xf32>
    %cst_148 = arith.constant dense<0.000000e+00> : vector<2x48xf32>
    %495 = tpu.matmul %483, %83, %cst_148 {dimension_numbers = #tpu.dot_dimension_numbers<[1], [0], [0], [1], [0, 0, 1, 1], [], []>} : vector<2x16xf32>, vector<16x48xf32>, vector<2x48xf32> -> vector<2x48xf32>
    %496 = vector.extract_strided_slice %494 {offsets = [0, 0], sizes = [2, 32], strides = [1, 1]} : vector<2x48xf32> to vector<2x32xf32>
    %497 = vector.extract_strided_slice %495 {offsets = [0, 0], sizes = [2, 32], strides = [1, 1]} : vector<2x48xf32> to vector<2x32xf32>
    %498 = arith.addf %496, %497 : vector<2x32xf32>
    %499 = arith.negf %498 : vector<2x32xf32>
    %500 = math.exp %499 : vector<2x32xf32>
    %cst_149 = arith.constant 1.000000e+00 : f32
    %501 = vector.broadcast %cst_149 : f32 to vector<2x32xf32>
    %502 = arith.addf %501, %500 : vector<2x32xf32>
    %503 = arith.divf %501, %502 : vector<2x32xf32>
    %504 = vector.extract_strided_slice %503 {offsets = [0, 0], sizes = [2, 16], strides = [1, 1]} : vector<2x32xf32> to vector<2x16xf32>
    %505 = vector.extract_strided_slice %503 {offsets = [0, 16], sizes = [2, 16], strides = [1, 1]} : vector<2x32xf32> to vector<2x16xf32>
    %506 = vector.extract_strided_slice %494 {offsets = [0, 32], sizes = [2, 16], strides = [1, 1]} : vector<2x48xf32> to vector<2x16xf32>
    %507 = vector.extract_strided_slice %495 {offsets = [0, 32], sizes = [2, 16], strides = [1, 1]} : vector<2x48xf32> to vector<2x16xf32>
    %508 = arith.addf %507, %87 : vector<2x16xf32>
    %509 = arith.mulf %504, %508 : vector<2x16xf32>
    %510 = arith.addf %506, %509 : vector<2x16xf32>
    %511 = math.tanh %510 : vector<2x16xf32>
    %cst_150 = arith.constant 1.000000e+00 : f32
    %512 = vector.broadcast %cst_150 : f32 to vector<2x16xf32>
    %513 = arith.subf %512, %505 : vector<2x16xf32>
    %514 = arith.mulf %513, %511 : vector<2x16xf32>
    %515 = arith.mulf %505, %483 : vector<2x16xf32>
    %516 = arith.addf %514, %515 : vector<2x16xf32>
    %517 = vector.extract_strided_slice %493 {offsets = [0, 48], sizes = [2, 48], strides = [1, 1]} : vector<2x96xf32> to vector<2x48xf32>
    %cst_151 = arith.constant dense<0.000000e+00> : vector<2x48xf32>
    %518 = tpu.matmul %486, %84, %cst_151 {dimension_numbers = #tpu.dot_dimension_numbers<[1], [0], [0], [1], [0, 0, 1, 1], [], []>} : vector<2x16xf32>, vector<16x48xf32>, vector<2x48xf32> -> vector<2x48xf32>
    %519 = vector.extract_strided_slice %517 {offsets = [0, 0], sizes = [2, 32], strides = [1, 1]} : vector<2x48xf32> to vector<2x32xf32>
    %520 = vector.extract_strided_slice %518 {offsets = [0, 0], sizes = [2, 32], strides = [1, 1]} : vector<2x48xf32> to vector<2x32xf32>
    %521 = arith.addf %519, %520 : vector<2x32xf32>
    %522 = arith.negf %521 : vector<2x32xf32>
    %523 = math.exp %522 : vector<2x32xf32>
    %cst_152 = arith.constant 1.000000e+00 : f32
    %524 = vector.broadcast %cst_152 : f32 to vector<2x32xf32>
    %525 = arith.addf %524, %523 : vector<2x32xf32>
    %526 = arith.divf %524, %525 : vector<2x32xf32>
    %527 = vector.extract_strided_slice %526 {offsets = [0, 0], sizes = [2, 16], strides = [1, 1]} : vector<2x32xf32> to vector<2x16xf32>
    %528 = vector.extract_strided_slice %526 {offsets = [0, 16], sizes = [2, 16], strides = [1, 1]} : vector<2x32xf32> to vector<2x16xf32>
    %529 = vector.extract_strided_slice %517 {offsets = [0, 32], sizes = [2, 16], strides = [1, 1]} : vector<2x48xf32> to vector<2x16xf32>
    %530 = vector.extract_strided_slice %518 {offsets = [0, 32], sizes = [2, 16], strides = [1, 1]} : vector<2x48xf32> to vector<2x16xf32>
    %531 = arith.addf %530, %90 : vector<2x16xf32>
    %532 = arith.mulf %527, %531 : vector<2x16xf32>
    %533 = arith.addf %529, %532 : vector<2x16xf32>
    %534 = math.tanh %533 : vector<2x16xf32>
    %cst_153 = arith.constant 1.000000e+00 : f32
    %535 = vector.broadcast %cst_153 : f32 to vector<2x16xf32>
    %536 = arith.subf %535, %528 : vector<2x16xf32>
    %537 = arith.mulf %536, %534 : vector<2x16xf32>
    %538 = arith.mulf %528, %486 : vector<2x16xf32>
    %539 = arith.addf %537, %538 : vector<2x16xf32>
    %540 = vector.broadcast %c5_i32_142 : i32 to vector<2x1xi32>
    %541 = arith.cmpi sgt, %82, %540 : vector<2x1xi32>
    %542 = vector.broadcast %487 : i32 to vector<2x1xi32>
    %543 = arith.cmpi sgt, %82, %542 : vector<2x1xi32>
    %cst_154 = arith.constant 0.000000e+00 : f32
    %544 = vector.shape_cast %541 : vector<2x1xi1> to vector<2x1xi1>
    %545 = vector.broadcast %544 : vector<2x1xi1> to vector<2x16xi1>
    %546 = vector.broadcast %cst_154 : f32 to vector<2x16xf32>
    %547 = arith.select %545, %516, %546 : vector<2x16xi1>, vector<2x16xf32>
    %548 = arith.index_cast %c5_i32_142 : i32 to index
    %c0_155 = arith.constant 0 : index
    %c0_156 = arith.constant 0 : index
    %549 = vector.load %arg12[%548, %c0_155, %c0_156] : memref<8x2x32xf32, #tpu.memory_space<vmem>>, vector<1x2x16xf32>
    %550 = vector.shape_cast %549 : vector<1x2x16xf32> to vector<2x16xf32>
    %551 = vector.shape_cast %547 : vector<2x16xf32> to vector<1x2x16xf32>
    tpu.vector_store %arg12[%548, %c0_155, %c0_156], %551 {strides = array<i32>} : memref<8x2x32xf32, #tpu.memory_space<vmem>>, vector<1x2x16xf32>,
    %cst_157 = arith.constant 0.000000e+00 : f32
    %552 = vector.shape_cast %543 : vector<2x1xi1> to vector<2x1xi1>
    %553 = vector.broadcast %552 : vector<2x1xi1> to vector<2x16xi1>
    %554 = vector.broadcast %cst_157 : f32 to vector<2x16xf32>
    %555 = arith.select %553, %539, %554 : vector<2x16xi1>, vector<2x16xf32>
    %556 = arith.index_cast %487 : i32 to index
    %c0_158 = arith.constant 0 : index
    %c16_159 = arith.constant 16 : index
    %557 = vector.load %arg12[%556, %c0_158, %c16_159] : memref<8x2x32xf32, #tpu.memory_space<vmem>>, vector<1x2x16xf32>
    %558 = vector.shape_cast %557 : vector<1x2x16xf32> to vector<2x16xf32>
    %559 = vector.shape_cast %555 : vector<2x16xf32> to vector<1x2x16xf32>
    tpu.vector_store %arg12[%556, %c0_158, %c16_159], %559 {strides = array<i32>} : memref<8x2x32xf32, #tpu.memory_space<vmem>>, vector<1x2x16xf32>,
    %560 = vector.shape_cast %541 : vector<2x1xi1> to vector<2x1xi1>
    %561 = vector.broadcast %560 : vector<2x1xi1> to vector<2x16xi1>
    %562 = arith.select %561, %516, %483 : vector<2x16xi1>, vector<2x16xf32>
    %563 = vector.shape_cast %543 : vector<2x1xi1> to vector<2x1xi1>
    %564 = vector.broadcast %563 : vector<2x1xi1> to vector<2x16xi1>
    %565 = arith.select %564, %539, %486 : vector<2x16xi1>, vector<2x16xf32>
    %c6_i32_160 = arith.constant 6 : i32
    %c7_i32_161 = arith.constant 7 : i32
    %566 = arith.subi %c7_i32_161, %c6_i32_160 : i32
    %567 = arith.index_cast %c6_i32_160 : i32 to index
    %c0_162 = arith.constant 0 : index
    %c0_163 = arith.constant 0 : index
    %568 = vector.load %arg13[%567, %c0_162, %c0_163] : memref<8x2x96xf32, #tpu.memory_space<vmem>>, vector<1x2x96xf32>
    %569 = vector.shape_cast %568 : vector<1x2x96xf32> to vector<2x96xf32>
    %570 = arith.index_cast %566 : i32 to index
    %c0_164 = arith.constant 0 : index
    %c0_165 = arith.constant 0 : index
    %571 = vector.load %arg13[%570, %c0_164, %c0_165] : memref<8x2x96xf32, #tpu.memory_space<vmem>>, vector<1x2x96xf32>
    %572 = vector.shape_cast %571 : vector<1x2x96xf32> to vector<2x96xf32>
    %573 = vector.extract_strided_slice %569 {offsets = [0, 0], sizes = [2, 48], strides = [1, 1]} : vector<2x96xf32> to vector<2x48xf32>
    %cst_166 = arith.constant dense<0.000000e+00> : vector<2x48xf32>
    %574 = tpu.matmul %562, %83, %cst_166 {dimension_numbers = #tpu.dot_dimension_numbers<[1], [0], [0], [1], [0, 0, 1, 1], [], []>} : vector<2x16xf32>, vector<16x48xf32>, vector<2x48xf32> -> vector<2x48xf32>
    %575 = vector.extract_strided_slice %573 {offsets = [0, 0], sizes = [2, 32], strides = [1, 1]} : vector<2x48xf32> to vector<2x32xf32>
    %576 = vector.extract_strided_slice %574 {offsets = [0, 0], sizes = [2, 32], strides = [1, 1]} : vector<2x48xf32> to vector<2x32xf32>
    %577 = arith.addf %575, %576 : vector<2x32xf32>
    %578 = arith.negf %577 : vector<2x32xf32>
    %579 = math.exp %578 : vector<2x32xf32>
    %cst_167 = arith.constant 1.000000e+00 : f32
    %580 = vector.broadcast %cst_167 : f32 to vector<2x32xf32>
    %581 = arith.addf %580, %579 : vector<2x32xf32>
    %582 = arith.divf %580, %581 : vector<2x32xf32>
    %583 = vector.extract_strided_slice %582 {offsets = [0, 0], sizes = [2, 16], strides = [1, 1]} : vector<2x32xf32> to vector<2x16xf32>
    %584 = vector.extract_strided_slice %582 {offsets = [0, 16], sizes = [2, 16], strides = [1, 1]} : vector<2x32xf32> to vector<2x16xf32>
    %585 = vector.extract_strided_slice %573 {offsets = [0, 32], sizes = [2, 16], strides = [1, 1]} : vector<2x48xf32> to vector<2x16xf32>
    %586 = vector.extract_strided_slice %574 {offsets = [0, 32], sizes = [2, 16], strides = [1, 1]} : vector<2x48xf32> to vector<2x16xf32>
    %587 = arith.addf %586, %87 : vector<2x16xf32>
    %588 = arith.mulf %583, %587 : vector<2x16xf32>
    %589 = arith.addf %585, %588 : vector<2x16xf32>
    %590 = math.tanh %589 : vector<2x16xf32>
    %cst_168 = arith.constant 1.000000e+00 : f32
    %591 = vector.broadcast %cst_168 : f32 to vector<2x16xf32>
    %592 = arith.subf %591, %584 : vector<2x16xf32>
    %593 = arith.mulf %592, %590 : vector<2x16xf32>
    %594 = arith.mulf %584, %562 : vector<2x16xf32>
    %595 = arith.addf %593, %594 : vector<2x16xf32>
    %596 = vector.extract_strided_slice %572 {offsets = [0, 48], sizes = [2, 48], strides = [1, 1]} : vector<2x96xf32> to vector<2x48xf32>
    %cst_169 = arith.constant dense<0.000000e+00> : vector<2x48xf32>
    %597 = tpu.matmul %565, %84, %cst_169 {dimension_numbers = #tpu.dot_dimension_numbers<[1], [0], [0], [1], [0, 0, 1, 1], [], []>} : vector<2x16xf32>, vector<16x48xf32>, vector<2x48xf32> -> vector<2x48xf32>
    %598 = vector.extract_strided_slice %596 {offsets = [0, 0], sizes = [2, 32], strides = [1, 1]} : vector<2x48xf32> to vector<2x32xf32>
    %599 = vector.extract_strided_slice %597 {offsets = [0, 0], sizes = [2, 32], strides = [1, 1]} : vector<2x48xf32> to vector<2x32xf32>
    %600 = arith.addf %598, %599 : vector<2x32xf32>
    %601 = arith.negf %600 : vector<2x32xf32>
    %602 = math.exp %601 : vector<2x32xf32>
    %cst_170 = arith.constant 1.000000e+00 : f32
    %603 = vector.broadcast %cst_170 : f32 to vector<2x32xf32>
    %604 = arith.addf %603, %602 : vector<2x32xf32>
    %605 = arith.divf %603, %604 : vector<2x32xf32>
    %606 = vector.extract_strided_slice %605 {offsets = [0, 0], sizes = [2, 16], strides = [1, 1]} : vector<2x32xf32> to vector<2x16xf32>
    %607 = vector.extract_strided_slice %605 {offsets = [0, 16], sizes = [2, 16], strides = [1, 1]} : vector<2x32xf32> to vector<2x16xf32>
    %608 = vector.extract_strided_slice %596 {offsets = [0, 32], sizes = [2, 16], strides = [1, 1]} : vector<2x48xf32> to vector<2x16xf32>
    %609 = vector.extract_strided_slice %597 {offsets = [0, 32], sizes = [2, 16], strides = [1, 1]} : vector<2x48xf32> to vector<2x16xf32>
    %610 = arith.addf %609, %90 : vector<2x16xf32>
    %611 = arith.mulf %606, %610 : vector<2x16xf32>
    %612 = arith.addf %608, %611 : vector<2x16xf32>
    %613 = math.tanh %612 : vector<2x16xf32>
    %cst_171 = arith.constant 1.000000e+00 : f32
    %614 = vector.broadcast %cst_171 : f32 to vector<2x16xf32>
    %615 = arith.subf %614, %607 : vector<2x16xf32>
    %616 = arith.mulf %615, %613 : vector<2x16xf32>
    %617 = arith.mulf %607, %565 : vector<2x16xf32>
    %618 = arith.addf %616, %617 : vector<2x16xf32>
    %619 = vector.broadcast %c6_i32_160 : i32 to vector<2x1xi32>
    %620 = arith.cmpi sgt, %82, %619 : vector<2x1xi32>
    %621 = vector.broadcast %566 : i32 to vector<2x1xi32>
    %622 = arith.cmpi sgt, %82, %621 : vector<2x1xi32>
    %cst_172 = arith.constant 0.000000e+00 : f32
    %623 = vector.shape_cast %620 : vector<2x1xi1> to vector<2x1xi1>
    %624 = vector.broadcast %623 : vector<2x1xi1> to vector<2x16xi1>
    %625 = vector.broadcast %cst_172 : f32 to vector<2x16xf32>
    %626 = arith.select %624, %595, %625 : vector<2x16xi1>, vector<2x16xf32>
    %627 = arith.index_cast %c6_i32_160 : i32 to index
    %c0_173 = arith.constant 0 : index
    %c0_174 = arith.constant 0 : index
    %628 = vector.load %arg12[%627, %c0_173, %c0_174] : memref<8x2x32xf32, #tpu.memory_space<vmem>>, vector<1x2x16xf32>
    %629 = vector.shape_cast %628 : vector<1x2x16xf32> to vector<2x16xf32>
    %630 = vector.shape_cast %626 : vector<2x16xf32> to vector<1x2x16xf32>
    tpu.vector_store %arg12[%627, %c0_173, %c0_174], %630 {strides = array<i32>} : memref<8x2x32xf32, #tpu.memory_space<vmem>>, vector<1x2x16xf32>,
    %cst_175 = arith.constant 0.000000e+00 : f32
    %631 = vector.shape_cast %622 : vector<2x1xi1> to vector<2x1xi1>
    %632 = vector.broadcast %631 : vector<2x1xi1> to vector<2x16xi1>
    %633 = vector.broadcast %cst_175 : f32 to vector<2x16xf32>
    %634 = arith.select %632, %618, %633 : vector<2x16xi1>, vector<2x16xf32>
    %635 = arith.index_cast %566 : i32 to index
    %c0_176 = arith.constant 0 : index
    %c16_177 = arith.constant 16 : index
    %636 = vector.load %arg12[%635, %c0_176, %c16_177] : memref<8x2x32xf32, #tpu.memory_space<vmem>>, vector<1x2x16xf32>
    %637 = vector.shape_cast %636 : vector<1x2x16xf32> to vector<2x16xf32>
    %638 = vector.shape_cast %634 : vector<2x16xf32> to vector<1x2x16xf32>
    tpu.vector_store %arg12[%635, %c0_176, %c16_177], %638 {strides = array<i32>} : memref<8x2x32xf32, #tpu.memory_space<vmem>>, vector<1x2x16xf32>,
    %639 = vector.shape_cast %620 : vector<2x1xi1> to vector<2x1xi1>
    %640 = vector.broadcast %639 : vector<2x1xi1> to vector<2x16xi1>
    %641 = arith.select %640, %595, %562 : vector<2x16xi1>, vector<2x16xf32>
    %642 = vector.shape_cast %622 : vector<2x1xi1> to vector<2x1xi1>
    %643 = vector.broadcast %642 : vector<2x1xi1> to vector<2x16xi1>
    %644 = arith.select %643, %618, %565 : vector<2x16xi1>, vector<2x16xf32>
    %c7_i32_178 = arith.constant 7 : i32
    %c7_i32_179 = arith.constant 7 : i32
    %645 = arith.subi %c7_i32_179, %c7_i32_178 : i32
    %646 = arith.index_cast %c7_i32_178 : i32 to index
    %c0_180 = arith.constant 0 : index
    %c0_181 = arith.constant 0 : index
    %647 = vector.load %arg13[%646, %c0_180, %c0_181] : memref<8x2x96xf32, #tpu.memory_space<vmem>>, vector<1x2x96xf32>
    %648 = vector.shape_cast %647 : vector<1x2x96xf32> to vector<2x96xf32>
    %649 = arith.index_cast %645 : i32 to index
    %c0_182 = arith.constant 0 : index
    %c0_183 = arith.constant 0 : index
    %650 = vector.load %arg13[%649, %c0_182, %c0_183] : memref<8x2x96xf32, #tpu.memory_space<vmem>>, vector<1x2x96xf32>
    %651 = vector.shape_cast %650 : vector<1x2x96xf32> to vector<2x96xf32>
    %652 = vector.extract_strided_slice %648 {offsets = [0, 0], sizes = [2, 48], strides = [1, 1]} : vector<2x96xf32> to vector<2x48xf32>
    %cst_184 = arith.constant dense<0.000000e+00> : vector<2x48xf32>
    %653 = tpu.matmul %641, %83, %cst_184 {dimension_numbers = #tpu.dot_dimension_numbers<[1], [0], [0], [1], [0, 0, 1, 1], [], []>} : vector<2x16xf32>, vector<16x48xf32>, vector<2x48xf32> -> vector<2x48xf32>
    %654 = vector.extract_strided_slice %652 {offsets = [0, 0], sizes = [2, 32], strides = [1, 1]} : vector<2x48xf32> to vector<2x32xf32>
    %655 = vector.extract_strided_slice %653 {offsets = [0, 0], sizes = [2, 32], strides = [1, 1]} : vector<2x48xf32> to vector<2x32xf32>
    %656 = arith.addf %654, %655 : vector<2x32xf32>
    %657 = arith.negf %656 : vector<2x32xf32>
    %658 = math.exp %657 : vector<2x32xf32>
    %cst_185 = arith.constant 1.000000e+00 : f32
    %659 = vector.broadcast %cst_185 : f32 to vector<2x32xf32>
    %660 = arith.addf %659, %658 : vector<2x32xf32>
    %661 = arith.divf %659, %660 : vector<2x32xf32>
    %662 = vector.extract_strided_slice %661 {offsets = [0, 0], sizes = [2, 16], strides = [1, 1]} : vector<2x32xf32> to vector<2x16xf32>
    %663 = vector.extract_strided_slice %661 {offsets = [0, 16], sizes = [2, 16], strides = [1, 1]} : vector<2x32xf32> to vector<2x16xf32>
    %664 = vector.extract_strided_slice %652 {offsets = [0, 32], sizes = [2, 16], strides = [1, 1]} : vector<2x48xf32> to vector<2x16xf32>
    %665 = vector.extract_strided_slice %653 {offsets = [0, 32], sizes = [2, 16], strides = [1, 1]} : vector<2x48xf32> to vector<2x16xf32>
    %666 = arith.addf %665, %87 : vector<2x16xf32>
    %667 = arith.mulf %662, %666 : vector<2x16xf32>
    %668 = arith.addf %664, %667 : vector<2x16xf32>
    %669 = math.tanh %668 : vector<2x16xf32>
    %cst_186 = arith.constant 1.000000e+00 : f32
    %670 = vector.broadcast %cst_186 : f32 to vector<2x16xf32>
    %671 = arith.subf %670, %663 : vector<2x16xf32>
    %672 = arith.mulf %671, %669 : vector<2x16xf32>
    %673 = arith.mulf %663, %641 : vector<2x16xf32>
    %674 = arith.addf %672, %673 : vector<2x16xf32>
    %675 = vector.extract_strided_slice %651 {offsets = [0, 48], sizes = [2, 48], strides = [1, 1]} : vector<2x96xf32> to vector<2x48xf32>
    %cst_187 = arith.constant dense<0.000000e+00> : vector<2x48xf32>
    %676 = tpu.matmul %644, %84, %cst_187 {dimension_numbers = #tpu.dot_dimension_numbers<[1], [0], [0], [1], [0, 0, 1, 1], [], []>} : vector<2x16xf32>, vector<16x48xf32>, vector<2x48xf32> -> vector<2x48xf32>
    %677 = vector.extract_strided_slice %675 {offsets = [0, 0], sizes = [2, 32], strides = [1, 1]} : vector<2x48xf32> to vector<2x32xf32>
    %678 = vector.extract_strided_slice %676 {offsets = [0, 0], sizes = [2, 32], strides = [1, 1]} : vector<2x48xf32> to vector<2x32xf32>
    %679 = arith.addf %677, %678 : vector<2x32xf32>
    %680 = arith.negf %679 : vector<2x32xf32>
    %681 = math.exp %680 : vector<2x32xf32>
    %cst_188 = arith.constant 1.000000e+00 : f32
    %682 = vector.broadcast %cst_188 : f32 to vector<2x32xf32>
    %683 = arith.addf %682, %681 : vector<2x32xf32>
    %684 = arith.divf %682, %683 : vector<2x32xf32>
    %685 = vector.extract_strided_slice %684 {offsets = [0, 0], sizes = [2, 16], strides = [1, 1]} : vector<2x32xf32> to vector<2x16xf32>
    %686 = vector.extract_strided_slice %684 {offsets = [0, 16], sizes = [2, 16], strides = [1, 1]} : vector<2x32xf32> to vector<2x16xf32>
    %687 = vector.extract_strided_slice %675 {offsets = [0, 32], sizes = [2, 16], strides = [1, 1]} : vector<2x48xf32> to vector<2x16xf32>
    %688 = vector.extract_strided_slice %676 {offsets = [0, 32], sizes = [2, 16], strides = [1, 1]} : vector<2x48xf32> to vector<2x16xf32>
    %689 = arith.addf %688, %90 : vector<2x16xf32>
    %690 = arith.mulf %685, %689 : vector<2x16xf32>
    %691 = arith.addf %687, %690 : vector<2x16xf32>
    %692 = math.tanh %691 : vector<2x16xf32>
    %cst_189 = arith.constant 1.000000e+00 : f32
    %693 = vector.broadcast %cst_189 : f32 to vector<2x16xf32>
    %694 = arith.subf %693, %686 : vector<2x16xf32>
    %695 = arith.mulf %694, %692 : vector<2x16xf32>
    %696 = arith.mulf %686, %644 : vector<2x16xf32>
    %697 = arith.addf %695, %696 : vector<2x16xf32>
    %698 = vector.broadcast %c7_i32_178 : i32 to vector<2x1xi32>
    %699 = arith.cmpi sgt, %82, %698 : vector<2x1xi32>
    %700 = vector.broadcast %645 : i32 to vector<2x1xi32>
    %701 = arith.cmpi sgt, %82, %700 : vector<2x1xi32>
    %cst_190 = arith.constant 0.000000e+00 : f32
    %702 = vector.shape_cast %699 : vector<2x1xi1> to vector<2x1xi1>
    %703 = vector.broadcast %702 : vector<2x1xi1> to vector<2x16xi1>
    %704 = vector.broadcast %cst_190 : f32 to vector<2x16xf32>
    %705 = arith.select %703, %674, %704 : vector<2x16xi1>, vector<2x16xf32>
    %706 = arith.index_cast %c7_i32_178 : i32 to index
    %c0_191 = arith.constant 0 : index
    %c0_192 = arith.constant 0 : index
    %707 = vector.load %arg12[%706, %c0_191, %c0_192] : memref<8x2x32xf32, #tpu.memory_space<vmem>>, vector<1x2x16xf32>
    %708 = vector.shape_cast %707 : vector<1x2x16xf32> to vector<2x16xf32>
    %709 = vector.shape_cast %705 : vector<2x16xf32> to vector<1x2x16xf32>
    tpu.vector_store %arg12[%706, %c0_191, %c0_192], %709 {strides = array<i32>} : memref<8x2x32xf32, #tpu.memory_space<vmem>>, vector<1x2x16xf32>,
    %cst_193 = arith.constant 0.000000e+00 : f32
    %710 = vector.shape_cast %701 : vector<2x1xi1> to vector<2x1xi1>
    %711 = vector.broadcast %710 : vector<2x1xi1> to vector<2x16xi1>
    %712 = vector.broadcast %cst_193 : f32 to vector<2x16xf32>
    %713 = arith.select %711, %697, %712 : vector<2x16xi1>, vector<2x16xf32>
    %714 = arith.index_cast %645 : i32 to index
    %c0_194 = arith.constant 0 : index
    %c16_195 = arith.constant 16 : index
    %715 = vector.load %arg12[%714, %c0_194, %c16_195] : memref<8x2x32xf32, #tpu.memory_space<vmem>>, vector<1x2x16xf32>
    %716 = vector.shape_cast %715 : vector<1x2x16xf32> to vector<2x16xf32>
    %717 = vector.shape_cast %713 : vector<2x16xf32> to vector<1x2x16xf32>
    tpu.vector_store %arg12[%714, %c0_194, %c16_195], %717 {strides = array<i32>} : memref<8x2x32xf32, #tpu.memory_space<vmem>>, vector<1x2x16xf32>,
    %718 = vector.shape_cast %699 : vector<2x1xi1> to vector<2x1xi1>
    %719 = vector.broadcast %718 : vector<2x1xi1> to vector<2x16xi1>
    %720 = arith.select %719, %674, %641 : vector<2x16xi1>, vector<2x16xf32>
    %721 = vector.shape_cast %701 : vector<2x1xi1> to vector<2x1xi1>
    %722 = vector.broadcast %721 : vector<2x1xi1> to vector<2x16xi1>
    %723 = arith.select %722, %697, %644 : vector<2x16xi1>, vector<2x16xf32>
    %c8_i32_196 = arith.constant 8 : i32
    %724 = tpu.concatenate %720, %723 in 1 : vector<2x16xf32>, vector<2x16xf32> -> vector<2x32xf32>
    %cst_197 = arith.constant dense<0.000000e+00> : vector<2xf32>
    %725 = vector.multi_reduction <add>, %724, %cst_197 [1] : vector<2x32xf32> to vector<2xf32>
    %726 = vector.shape_cast %725 : vector<2xf32> to vector<2x1xf32>
    %cst_198 = arith.constant 3.200000e+01 : f32
    %727 = vector.broadcast %cst_198 : f32 to vector<2x1xf32>
    %728 = arith.divf %726, %727 : vector<2x1xf32>
    %729 = vector.broadcast %728 : vector<2x1xf32> to vector<2x32xf32>
    %730 = arith.subf %724, %729 : vector<2x32xf32>
    %731 = arith.mulf %730, %730 : vector<2x32xf32>
    %cst_199 = arith.constant dense<0.000000e+00> : vector<2xf32>
    %732 = vector.multi_reduction <add>, %731, %cst_199 [1] : vector<2x32xf32> to vector<2xf32>
    %733 = vector.shape_cast %732 : vector<2xf32> to vector<2x1xf32>
    %cst_200 = arith.constant 3.200000e+01 : f32
    %734 = vector.broadcast %cst_200 : f32 to vector<2x1xf32>
    %735 = arith.divf %733, %734 : vector<2x1xf32>
    %736 = vector.broadcast %728 : vector<2x1xf32> to vector<2x32xf32>
    %737 = arith.subf %724, %736 : vector<2x32xf32>
    %cst_201 = arith.constant 9.99999974E-6 : f32
    %738 = vector.broadcast %cst_201 : f32 to vector<2x1xf32>
    %739 = arith.addf %735, %738 : vector<2x1xf32>
    %740 = math.rsqrt %739 : vector<2x1xf32>
    %741 = vector.broadcast %740 : vector<2x1xf32> to vector<2x32xf32>
    %742 = arith.mulf %737, %741 : vector<2x32xf32>
    %c0_202 = arith.constant 0 : index
    %c0_203 = arith.constant 0 : index
    %743 = vector.load %arg3[%c0_202, %c0_203] : memref<1x32xf32, #tpu.memory_space<vmem>>, vector<1x32xf32>
    %744 = vector.broadcast %743 : vector<1x32xf32> to vector<2x32xf32>
    %745 = arith.mulf %742, %744 : vector<2x32xf32>
    %c0_204 = arith.constant 0 : index
    %c0_205 = arith.constant 0 : index
    %746 = vector.load %arg4[%c0_204, %c0_205] : memref<1x32xf32, #tpu.memory_space<vmem>>, vector<1x32xf32>
    %747 = vector.broadcast %746 : vector<1x32xf32> to vector<2x32xf32>
    %748 = arith.addf %745, %747 : vector<2x32xf32>
    %c0_206 = arith.constant 0 : index
    %c0_207 = arith.constant 0 : index
    %749 = vector.load %arg11[%c0_206, %c0_207] : memref<2x32xf32, #tpu.memory_space<vmem>>, vector<2x32xf32>
    tpu.vector_store %arg11[%c0_206, %c0_207], %748 {strides = array<i32>} : memref<2x32xf32, #tpu.memory_space<vmem>>, vector<2x32xf32>,
    return
  }
  func.func @transform_0(%arg0: i32) -> (i32, i32, i32) {
    %c0_i32 = arith.constant 0 : i32
    %c0_i32_0 = arith.constant 0 : i32
    %c0_i32_1 = arith.constant 0 : i32
    return %c0_i32, %arg0, %c0_i32_0 : i32, i32, i32
  }
  func.func @transform_1(%arg0: i32) -> (i32, i32) {
    %c0_i32 = arith.constant 0 : i32
    %c0_i32_0 = arith.constant 0 : i32
    return %arg0, %c0_i32 : i32, i32
  }
  func.func @transform_2(%arg0: i32) -> (i32, i32) {
    %c0_i32 = arith.constant 0 : i32
    %c0_i32_0 = arith.constant 0 : i32
    %c0_i32_1 = arith.constant 0 : i32
    return %c0_i32, %c0_i32_0 : i32, i32
  }
  func.func @transform_3(%arg0: i32) -> (i32, i32) {
    %c0_i32 = arith.constant 0 : i32
    %c0_i32_0 = arith.constant 0 : i32
    %c0_i32_1 = arith.constant 0 : i32
    return %c0_i32, %c0_i32_0 : i32, i32
  }
  func.func @transform_4(%arg0: i32) -> (i32, i32) {
    %c0_i32 = arith.constant 0 : i32
    %c0_i32_0 = arith.constant 0 : i32
    %c0_i32_1 = arith.constant 0 : i32
    return %c0_i32, %c0_i32_0 : i32, i32
  }
  func.func @transform_5(%arg0: i32) -> (i32, i32) {
    %c0_i32 = arith.constant 0 : i32
    %c0_i32_0 = arith.constant 0 : i32
    %c0_i32_1 = arith.constant 0 : i32
    return %c0_i32, %c0_i32_0 : i32, i32
  }
  func.func @transform_6(%arg0: i32) -> (i32, i32) {
    %c0_i32 = arith.constant 0 : i32
    %c0_i32_0 = arith.constant 0 : i32
    %c0_i32_1 = arith.constant 0 : i32
    return %c0_i32, %c0_i32_0 : i32, i32
  }
  func.func @transform_7(%arg0: i32) -> (i32, i32) {
    %c0_i32 = arith.constant 0 : i32
    %c0_i32_0 = arith.constant 0 : i32
    %c0_i32_1 = arith.constant 0 : i32
    return %c0_i32, %c0_i32_0 : i32, i32
  }
  func.func @transform_8(%arg0: i32) -> (i32, i32) {
    %c0_i32 = arith.constant 0 : i32
    %c0_i32_0 = arith.constant 0 : i32
    %c0_i32_1 = arith.constant 0 : i32
    return %c0_i32, %c0_i32_0 : i32, i32
  }
  func.func @transform_9(%arg0: i32) -> (i32, i32) {
    %c0_i32 = arith.constant 0 : i32
    %c0_i32_0 = arith.constant 0 : i32
    %c0_i32_1 = arith.constant 0 : i32
    return %c0_i32, %c0_i32_0 : i32, i32
  }
  func.func @transform_10(%arg0: i32) -> (i32, i32) {
    %c0_i32 = arith.constant 0 : i32
    %c0_i32_0 = arith.constant 0 : i32
    return %arg0, %c0_i32 : i32, i32
  }
  func.func @transform_11(%arg0: i32) -> (i32, i32, i32) {
    %c0_i32 = arith.constant 0 : i32
    %c0_i32_0 = arith.constant 0 : i32
    %c0_i32_1 = arith.constant 0 : i32
    return %c0_i32, %arg0, %c0_i32_0 : i32, i32, i32
  }
}

</mosaic_0001>

<llo_original>
// kernel: tpu_custom_call.1
$region0: #{tpu_custom_call.1}
  #allocation0 [shape = 'u32[]', space=smem, size = 0x4, offset = 0x4, fixed_abs, tag = 'smem constant byte address 0x4 - core index']
  #allocation1 [shape = 'u32[144,128]{1,0:T(1,128)}', space=vmem, size = 0x12000, scoped, tag = 'internal scratch']
  #allocation2 [shape = 'f32[8,2,96]{2,1,0:T(2,128)}', space=vmem, size = 0x2000, scoped, tag = 'scratch operand']
  %s0 = inlined_call_operand.vmem [shape: f32[8,2,300], index: 0, kind: input, shape index: {}]
  %s1 = inlined_call_operand.vmem [shape: s32[2,1], index: 1, kind: input, shape index: {}]
  %s2 = inlined_call_operand.vmem [shape: f32[1,32], index: 2, kind: input, shape index: {}]
  %s3 = inlined_call_operand.vmem [shape: f32[1,32], index: 3, kind: input, shape index: {}]
  %s4 = inlined_call_operand.vmem [shape: f32[300,96], index: 4, kind: input, shape index: {}]
  %s5 = inlined_call_operand.vmem [shape: f32[16,48], index: 5, kind: input, shape index: {}]
  %s6 = inlined_call_operand.vmem [shape: f32[16,48], index: 6, kind: input, shape index: {}]
  %s7 = inlined_call_operand.vmem [shape: f32[1,96], index: 7, kind: input, shape index: {}]
  %s8 = inlined_call_operand.vmem [shape: f32[1,16], index: 8, kind: input, shape index: {}]
  %s9 = inlined_call_operand.vmem [shape: f32[1,16], index: 9, kind: input, shape index: {}]
  %s10 = inlined_call_operand.hbm [shape: f32[2,32], index: 10, kind: output, shape index: {0}]
  %s11 = inlined_call_operand.hbm [shape: f32[8,2,32], index: 11, kind: output, shape index: {1}]
  %12 = xla_tuple %s10, %s11
  %s13 = sld [smem:[#allocation0]]
  $region58: #{tpu_custom_call.1} parent=0
    _
  %s15 = ssub.s32 1, %s13
  %s16 = scalar_select 0, %s15, %s13
  $region1: #{tpu_custom_call.1} parent=0
    #allocation3 [shape = 'u8[1024]{0}', space=vmem, size = 0x400, scoped, tag = 'output window, operand 0, single buffered']
    #allocation4 [shape = 's32[1]{0}', space=sflag, size = 0x4, scoped, tag = 'scoped memory for tpu_custom_call.1']
    #allocation5 [shape = 'u8[8192]{0}', space=vmem, size = 0x2000, scoped, tag = 'output window, operand 1, single buffered']
    #allocation6 [shape = 's32[1]{0}', space=sflag, size = 0x4, scoped, tag = 'scoped memory for tpu_custom_call.1']
    %17 = vsyncpa [#allocation4], 0
    %18 = vsyncpa [#allocation6], 0
    // Predicated region
    $region2: #{tpu_custom_call.1} parent=1 // pred_check
      _
    $region3: #{tpu_custom_call.1} parent=1 // pred_check_branch
      %20 = sbr.rel (0) target = $region5
    $region4: #{tpu_custom_call.1} parent=1 // pred_region
      _
    $region5: #{tpu_custom_call.1} parent=1 // pred_fallthru
      _
    // Predicated region
    $region6: #{tpu_custom_call.1} parent=1 // pred_check
      _
    $region7: #{tpu_custom_call.1} parent=1 // pred_check_branch
      %22 = sbr.rel (0) target = $region9
    $region8: #{tpu_custom_call.1} parent=1 // pred_region
      _
    $region9: #{tpu_custom_call.1} parent=1 // pred_fallthru
      _
    // Predicated region
    $region10: #{tpu_custom_call.1} parent=1 // pred_check
      _
    $region11: #{tpu_custom_call.1} parent=1 // pred_check_branch
      %24 = sbr.rel (0) target = $region13
    $region12: #{tpu_custom_call.1} parent=1 // pred_region
      _
    $region13: #{tpu_custom_call.1} parent=1 // pred_fallthru
      _
    // Predicated region
    $region14: #{tpu_custom_call.1} parent=1 // pred_check
      _
    $region15: #{tpu_custom_call.1} parent=1 // pred_check_branch
      %26 = sbr.rel (0) target = $region17
    $region16: #{tpu_custom_call.1} parent=1 // pred_region
      _
    $region17: #{tpu_custom_call.1} parent=1 // pred_fallthru
      _
    // Predicated region
    $region18: #{tpu_custom_call.1} parent=1 // pred_check
      _
    $region19: #{tpu_custom_call.1} parent=1 // pred_check_branch
      %28 = sbr.rel (0) target = $region21
    $region20: #{tpu_custom_call.1} parent=1 // pred_region
      _
    $region21: #{tpu_custom_call.1} parent=1 // pred_fallthru
      _
    // Predicated region
    $region22: #{tpu_custom_call.1} parent=1 // pred_check
      _
    $region23: #{tpu_custom_call.1} parent=1 // pred_check_branch
      %30 = sbr.rel (0) target = $region25
    $region24: #{tpu_custom_call.1} parent=1 // pred_region
      _
    $region25: #{tpu_custom_call.1} parent=1 // pred_fallthru
      _
    // Predicated region
    $region26: #{tpu_custom_call.1} parent=1 // pred_check
      _
    $region27: #{tpu_custom_call.1} parent=1 // pred_check_branch
      %32 = sbr.rel (0) target = $region29
    $region28: #{tpu_custom_call.1} parent=1 // pred_region
      _
    $region29: #{tpu_custom_call.1} parent=1 // pred_fallthru
      _
    // Predicated region
    $region30: #{tpu_custom_call.1} parent=1 // pred_check
      _
    $region31: #{tpu_custom_call.1} parent=1 // pred_check_branch
      %34 = sbr.rel (0) target = $region33
    $region32: #{tpu_custom_call.1} parent=1 // pred_region
      _
    $region33: #{tpu_custom_call.1} parent=1 // pred_fallthru
      _
    // Predicated region
    $region34: #{tpu_custom_call.1} parent=1 // pred_check
      _
    $region35: #{tpu_custom_call.1} parent=1 // pred_check_branch
      %36 = sbr.rel (0) target = $region37
    $region36: #{tpu_custom_call.1} parent=1 // pred_region
      _
    $region37: #{tpu_custom_call.1} parent=1 // pred_fallthru
      _
    // Predicated region
    $region38: #{tpu_custom_call.1} parent=1 // pred_check
      _
    $region39: #{tpu_custom_call.1} parent=1 // pred_check_branch
      %38 = sbr.rel (0) target = $region41
    $region40: #{tpu_custom_call.1} parent=1 // pred_region
      _
    $region41: #{tpu_custom_call.1} parent=1 // pred_fallthru
      _
    %v39 = vld [vmem:[%s4] sm:$0xff]
    %v40 = vld [vmem:[%s4 + $0x8] sm:$0xff]
    %v41 = vld [vmem:[%s4 + $0x10] sm:$0xff]
    %v42 = vld [vmem:[%s4 + $0x18] sm:$0xff]
    %v43 = vld [vmem:[%s4 + $0x20] sm:$0xff]
    %v44 = vld [vmem:[%s4 + $0x28] sm:$0xff]
    %v45 = vld [vmem:[%s4 + $0x30] sm:$0xff]
    %v46 = vld [vmem:[%s4 + $0x38] sm:$0xff]
    %v47 = vld [vmem:[%s4 + $0x40] sm:$0xff]
    %v48 = vld [vmem:[%s4 + $0x48] sm:$0xff]
    %v49 = vld [vmem:[%s4 + $0x50] sm:$0xff]
    %v50 = vld [vmem:[%s4 + $0x58] sm:$0xff]
    %v51 = vld [vmem:[%s4 + $0x60] sm:$0xff]
    %v52 = vld [vmem:[%s4 + $0x68] sm:$0xff]
    %v53 = vld [vmem:[%s4 + $0x70] sm:$0xff]
    %v54 = vld [vmem:[%s4 + $0x78] sm:$0xff]
    %v55 = vld [vmem:[%s4 + $0x80] sm:$0xff]
    %v56 = vld [vmem:[%s4 + $0x88] sm:$0xff]
    %v57 = vld [vmem:[%s4 + $0x90] sm:$0xff]
    %v58 = vld [vmem:[%s4 + $0x98] sm:$0xff]
    %v59 = vld [vmem:[%s4 + $0xa0] sm:$0xff]
    %v60 = vld [vmem:[%s4 + $0xa8] sm:$0xff]
    %v61 = vld [vmem:[%s4 + $0xb0] sm:$0xff]
    %v62 = vld [vmem:[%s4 + $0xb8] sm:$0xff]
    %v63 = vld [vmem:[%s4 + $0xc0] sm:$0xff]
    %v64 = vld [vmem:[%s4 + $0xc8] sm:$0xff]
    %v65 = vld [vmem:[%s4 + $0xd0] sm:$0xff]
    %v66 = vld [vmem:[%s4 + $0xd8] sm:$0xff]
    %v67 = vld [vmem:[%s4 + $0xe0] sm:$0xff]
    %v68 = vld [vmem:[%s4 + $0xe8] sm:$0xff]
    %v69 = vld [vmem:[%s4 + $0xf0] sm:$0xff]
    %v70 = vld [vmem:[%s4 + $0xf8] sm:$0xff]
    %v71 = vld [vmem:[%s4 + $0x100] sm:$0xff]
    %v72 = vld [vmem:[%s4 + $0x108] sm:$0xff]
    %v73 = vld [vmem:[%s4 + $0x110] sm:$0xff]
    %v74 = vld [vmem:[%s4 + $0x118] sm:$0xff]
    %v75 = vld [vmem:[%s4 + $0x120] sm:$0xff]
    %v76 = vld [vmem:[%s4 + $0x128] sm:$0xf]
    %v77 = vld [vmem:[%s7] sm:$0x1]
    %v78 = vld [vmem:[%s0] sm:$0x3f]
    %v80 = vlaneseq
    %v81 = vshrl.u32 %v80, 7
    %v82 = vsub.s32 0, %v81
    %v83 = vrot.slane %v77, %v82
    %v86 = vcombine.high %v78, %v78
    %v88 = vunpack.c.l.s4 1983009808
    %v89 = vunpack.c.0.s8 %v88
    %v90 = vlaneseq
    %v91 = vshrl.u32 %v90, 7
    %v92 = vsub.s32 %v89, %v91
    %v93 = vrot.slane %v78, %v92
    %v95 = vunpack.c.l.s4 1983009808
    %v96 = vunpack.c.0.s8 %v95
    %v97 = vlaneseq
    %v98 = vshrl.u32 %v97, 7
    %v99 = vsub.s32 %v96, %v98
    %v100 = vrot.slane %v86, %v99
    %v101 = vcombine.high %v93, %v93
    %vm104 = vcmask 359424
    %v105 = vsel %vm104, %v100, 0
    %vm107 = vcmask 1043456
    %v109 = vsel %vm107, %v76, 0
    %111 = vmatprep.subr.mxu0 0.0
    %112 = vmatpush1.msra.mxu0 %v39
    %113 = vmatprep.subr.mxu0 0.0
    %114 = vmatpush1.msra.mxu0 %v40
    %115 = vmatprep.subr.mxu0 0.0
    %116 = vmatpush1.msra.mxu0 %v41
    %117 = vmatprep.subr.mxu0 0.0
    %118 = vmatpush1.msra.mxu0 %v42
    %119 = vmatprep.subr.mxu0 0.0
    %120 = vmatpush1.msra.mxu0 %v43
    %121 = vmatprep.subr.mxu0 0.0
    %122 = vmatpush1.msra.mxu0 %v44
    %123 = vmatprep.subr.mxu0 0.0
    %124 = vmatpush1.msra.mxu0 %v45
    %125 = vmatprep.subr.mxu0 0.0
    %126 = vmatpush1.msra.mxu0 %v46
    %127 = vmatprep.subr.mxu0 0.0
    %128 = vmatpush1.msra.mxu0 %v47
    %129 = vmatprep.subr.mxu0 0.0
    %130 = vmatpush1.msra.mxu0 %v48
    %131 = vmatprep.subr.mxu0 0.0
    %132 = vmatpush1.msra.mxu0 %v49
    %133 = vmatprep.subr.mxu0 0.0
    %134 = vmatpush1.msra.mxu0 %v50
    %135 = vmatprep.subr.mxu0 0.0
    %136 = vmatpush1.msra.mxu0 %v51
    %137 = vmatprep.subr.mxu0 0.0
    %138 = vmatpush1.msra.mxu0 %v52
    %139 = vmatprep.subr.mxu0 0.0
    %140 = vmatpush1.msra.mxu0 %v53
    %141 = vmatprep.subr.mxu0 0.0
    %142 = vmatpush1.msra.mxu0 %v54
    %143 = vmatprep.subr.mxu0 0.0
    %144 = vmatpush1.msra.mxu0 %v55
    %145 = vmatprep.subr.mxu0 0.0
    %146 = vmatpush1.msra.mxu0 %v56
    %147 = vmatprep.subr.mxu0 0.0
    %148 = vmatpush1.msra.mxu0 %v57
    %149 = vmatprep.subr.mxu0 0.0
    %150 = vmatpush1.msra.mxu0 %v58
    %151 = vmatprep.subr.mxu0 0.0
    %152 = vmatpush1.msra.mxu0 %v59
    %153 = vmatprep.subr.mxu0 0.0
    %154 = vmatpush1.msra.mxu0 %v60
    %155 = vmatprep.subr.mxu0 0.0
    %156 = vmatpush1.msra.mxu0 %v61
    %157 = vmatprep.subr.mxu0 0.0
    %158 = vmatpush1.msra.mxu0 %v62
    %159 = vmatprep.subr.mxu0 0.0
    %160 = vmatpush1.msra.mxu0 %v63
    %161 = vmatprep.subr.mxu0 0.0
    %162 = vmatpush1.msra.mxu0 %v64
    %163 = vmatprep.subr.mxu0 0.0
    %164 = vmatpush1.msra.mxu0 %v65
    %165 = vmatprep.subr.mxu0 0.0
    %166 = vmatpush1.msra.mxu0 %v66
    %167 = vmatprep.subr.mxu0 0.0
    %168 = vmatpush1.msra.mxu0 %v67
    %169 = vmatprep.subr.mxu0 0.0
    %170 = vmatpush1.msra.mxu0 %v68
    %171 = vmatprep.subr.mxu0 0.0
    %172 = vmatpush1.msra.mxu0 %v69
    %173 = vmatprep.subr.mxu0 0.0
    %174 = vmatpush1.msra.mxu0 %v70
    %175 = vmatprep.mubr.f32.mxu0 %v101
    %176 = vmatmul.mubr.f32.gmra.mrb[0].mxu0 %v93
    %v177 = vpop.f32.mrb[0].mxu0
    %v178 = vadd.f32 %v83, %v177
    %v179 = vpop.f32.mrb[0].mxu0
    %180 = vdwg.mxu0
    %181 = vmatprep.subr.mxu0 0.0
    %182 = vmatpush1.msra.mxu0 %v71
    %183 = vmatprep.subr.mxu0 0.0
    %184 = vmatpush1.msra.mxu0 %v72
    %185 = vmatprep.subr.mxu0 0.0
    %186 = vmatpush1.msra.mxu0 %v73
    %187 = vmatprep.subr.mxu0 0.0
    %188 = vmatpush1.msra.mxu0 %v74
    %189 = vmatprep.subr.mxu0 0.0
    %190 = vmatpush1.msra.mxu0 %v75
    %191 = vmatprep.subr.mxu0 0.0
    %192 = vmatpush1.msra.mxu0 %v109
    %193 = vmatprep.subr.mxu0 0.0
    %194 = vmatpush1.msra.mxu0 0.0
    %195 = vmatprep.subr.mxu0 0.0
    %196 = vmatpush1.msra.mxu0 0.0
    %197 = vmatprep.subr.mxu0 0.0
    %198 = vmatpush1.msra.mxu0 0.0
    %199 = vmatprep.subr.mxu0 0.0
    %200 = vmatpush1.msra.mxu0 0.0
    %201 = vmatprep.subr.mxu0 0.0
    %202 = vmatpush1.msra.mxu0 0.0
    %203 = vmatprep.subr.mxu0 0.0
    %204 = vmatpush1.msra.mxu0 0.0
    %205 = vmatprep.subr.mxu0 0.0
    %206 = vmatpush1.msra.mxu0 0.0
    %207 = vmatprep.subr.mxu0 0.0
    %208 = vmatpush1.msra.mxu0 0.0
    %209 = vmatprep.subr.mxu0 0.0
    %210 = vmatpush1.msra.mxu0 0.0
    %211 = vmatprep.subr.mxu0 0.0
    %212 = vmatpush1.msra.mxu0 0.0
    %213 = vmatprep.subr.mxu0 0.0
    %214 = vmatpush1.msra.mxu0 0.0
    %215 = vmatprep.subr.mxu0 0.0
    %216 = vmatpush1.msra.mxu0 0.0
    %217 = vmatprep.subr.mxu0 0.0
    %218 = vmatpush1.msra.mxu0 0.0
    %219 = vmatprep.subr.mxu0 0.0
    %220 = vmatpush1.msra.mxu0 0.0
    %221 = vmatprep.subr.mxu0 0.0
    %222 = vmatpush1.msra.mxu0 0.0
    %223 = vmatprep.subr.mxu0 0.0
    %224 = vmatpush1.msra.mxu0 0.0
    %225 = vmatprep.subr.mxu0 0.0
    %226 = vmatpush1.msra.mxu0 0.0
    %227 = vmatprep.subr.mxu0 0.0
    %228 = vmatpush1.msra.mxu0 0.0
    %229 = vmatprep.subr.mxu0 0.0
    %230 = vmatpush1.msra.mxu0 0.0
    %231 = vmatprep.subr.mxu0 0.0
    %232 = vmatpush1.msra.mxu0 0.0
    %233 = vmatprep.subr.mxu0 0.0
    %234 = vmatpush1.msra.mxu0 0.0
    %235 = vmatprep.subr.mxu0 0.0
    %236 = vmatpush1.msra.mxu0 0.0
    %237 = vmatprep.subr.mxu0 0.0
    %238 = vmatpush1.msra.mxu0 0.0
    %239 = vmatprep.subr.mxu0 0.0
    %240 = vmatpush1.msra.mxu0 0.0
    %241 = vmatprep.subr.mxu0 0.0
    %242 = vmatpush1.msra.mxu0 0.0
    %243 = vmatprep.subr.mxu0 0.0
    %244 = vmatpush1.msra.mxu0 0.0
    %245 = vmatprep.mubr.f32.mxu0 0.0
    %246 = vmatmul.mubr.f32.gmra.mrb[0].mxu0 %v105
    %v247 = vpop.f32.mrb[0].mxu0
    %v248 = vadd.f32 %v178, %v247
    %v249 = vpop.f32.mrb[0].mxu0
    %250 = vdwg.mxu0
    %vm251 = vcmask 779264
    %252 = vst.msk [vmem:[#allocation2] sm:$0x3] %vm251, %v248
    %s253 = scalar_lea.vmem %s0, 6
    %v254 = vld [vmem:[%s253] sm:$0x3f]
    %v256 = vcombine.high %v254, %v254
    %v258 = vunpack.c.l.s4 1983009808
    %v259 = vunpack.c.0.s8 %v258
    %v260 = vlaneseq
    %v261 = vshrl.u32 %v260, 7
    %v262 = vsub.s32 %v259, %v261
    %v263 = vrot.slane %v254, %v262
    %v265 = vunpack.c.l.s4 1983009808
    %v266 = vunpack.c.0.s8 %v265
    %v267 = vlaneseq
    %v268 = vshrl.u32 %v267, 7
    %v269 = vsub.s32 %v266, %v268
    %v270 = vrot.slane %v256, %v269
    %v271 = vcombine.high %v263, %v263
    %v274 = vsel %vm104, %v270, 0
    %276 = vmatprep.subr.mxu0 0.0
    %277 = vmatpush1.msra.mxu0 %v39
    %278 = vmatprep.subr.mxu0 0.0
    %279 = vmatpush1.msra.mxu0 %v40
    %280 = vmatprep.subr.mxu0 0.0
    %281 = vmatpush1.msra.mxu0 %v41
    %282 = vmatprep.subr.mxu0 0.0
    %283 = vmatpush1.msra.mxu0 %v42
    %284 = vmatprep.subr.mxu0 0.0
    %285 = vmatpush1.msra.mxu0 %v43
    %286 = vmatprep.subr.mxu0 0.0
    %287 = vmatpush1.msra.mxu0 %v44
    %288 = vmatprep.subr.mxu0 0.0
    %289 = vmatpush1.msra.mxu0 %v45
    %290 = vmatprep.subr.mxu0 0.0
    %291 = vmatpush1.msra.mxu0 %v46
    %292 = vmatprep.subr.mxu0 0.0
    %293 = vmatpush1.msra.mxu0 %v47
    %294 = vmatprep.subr.mxu0 0.0
    %295 = vmatpush1.msra.mxu0 %v48
    %296 = vmatprep.subr.mxu0 0.0
    %297 = vmatpush1.msra.mxu0 %v49
    %298 = vmatprep.subr.mxu0 0.0
    %299 = vmatpush1.msra.mxu0 %v50
    %300 = vmatprep.subr.mxu0 0.0
    %301 = vmatpush1.msra.mxu0 %v51
    %302 = vmatprep.subr.mxu0 0.0
    %303 = vmatpush1.msra.mxu0 %v52
    %304 = vmatprep.subr.mxu0 0.0
    %305 = vmatpush1.msra.mxu0 %v53
    %306 = vmatprep.subr.mxu0 0.0
    %307 = vmatpush1.msra.mxu0 %v54
    %308 = vmatprep.subr.mxu0 0.0
    %309 = vmatpush1.msra.mxu0 %v55
    %310 = vmatprep.subr.mxu0 0.0
    %311 = vmatpush1.msra.mxu0 %v56
    %312 = vmatprep.subr.mxu0 0.0
    %313 = vmatpush1.msra.mxu0 %v57
    %314 = vmatprep.subr.mxu0 0.0
    %315 = vmatpush1.msra.mxu0 %v58
    %316 = vmatprep.subr.mxu0 0.0
    %317 = vmatpush1.msra.mxu0 %v59
    %318 = vmatprep.subr.mxu0 0.0
    %319 = vmatpush1.msra.mxu0 %v60
    %320 = vmatprep.subr.mxu0 0.0
    %321 = vmatpush1.msra.mxu0 %v61
    %322 = vmatprep.subr.mxu0 0.0
    %323 = vmatpush1.msra.mxu0 %v62
    %324 = vmatprep.subr.mxu0 0.0
    %325 = vmatpush1.msra.mxu0 %v63
    %326 = vmatprep.subr.mxu0 0.0
    %327 = vmatpush1.msra.mxu0 %v64
    %328 = vmatprep.subr.mxu0 0.0
    %329 = vmatpush1.msra.mxu0 %v65
    %330 = vmatprep.subr.mxu0 0.0
    %331 = vmatpush1.msra.mxu0 %v66
    %332 = vmatprep.subr.mxu0 0.0
    %333 = vmatpush1.msra.mxu0 %v67
    %334 = vmatprep.subr.mxu0 0.0
    %335 = vmatpush1.msra.mxu0 %v68
    %336 = vmatprep.subr.mxu0 0.0
    %337 = vmatpush1.msra.mxu0 %v69
    %338 = vmatprep.subr.mxu0 0.0
    %339 = vmatpush1.msra.mxu0 %v70
    %340 = vmatprep.mubr.f32.mxu0 %v271
    %341 = vmatmul.mubr.f32.gmra.mrb[0].mxu0 %v263
    %v342 = vpop.f32.mrb[0].mxu0
    %v343 = vadd.f32 %v83, %v342
    %v344 = vpop.f32.mrb[0].mxu0
    %345 = vdwg.mxu0
    %346 = vmatprep.subr.mxu0 0.0
    %347 = vmatpush1.msra.mxu0 %v71
    %348 = vmatprep.subr.mxu0 0.0
    %349 = vmatpush1.msra.mxu0 %v72
    %350 = vmatprep.subr.mxu0 0.0
    %351 = vmatpush1.msra.mxu0 %v73
    %352 = vmatprep.subr.mxu0 0.0
    %353 = vmatpush1.msra.mxu0 %v74
    %354 = vmatprep.subr.mxu0 0.0
    %355 = vmatpush1.msra.mxu0 %v75
    %356 = vmatprep.subr.mxu0 0.0
    %357 = vmatpush1.msra.mxu0 %v109
    %358 = vmatprep.subr.mxu0 0.0
    %359 = vmatpush1.msra.mxu0 0.0
    %360 = vmatprep.subr.mxu0 0.0
    %361 = vmatpush1.msra.mxu0 0.0
    %362 = vmatprep.subr.mxu0 0.0
    %363 = vmatpush1.msra.mxu0 0.0
    %364 = vmatprep.subr.mxu0 0.0
    %365 = vmatpush1.msra.mxu0 0.0
    %366 = vmatprep.subr.mxu0 0.0
    %367 = vmatpush1.msra.mxu0 0.0
    %368 = vmatprep.subr.mxu0 0.0
    %369 = vmatpush1.msra.mxu0 0.0
    %370 = vmatprep.subr.mxu0 0.0
    %371 = vmatpush1.msra.mxu0 0.0
    %372 = vmatprep.subr.mxu0 0.0
    %373 = vmatpush1.msra.mxu0 0.0
    %374 = vmatprep.subr.mxu0 0.0
    %375 = vmatpush1.msra.mxu0 0.0
    %376 = vmatprep.subr.mxu0 0.0
    %377 = vmatpush1.msra.mxu0 0.0
    %378 = vmatprep.subr.mxu0 0.0
    %379 = vmatpush1.msra.mxu0 0.0
    %380 = vmatprep.subr.mxu0 0.0
    %381 = vmatpush1.msra.mxu0 0.0
    %382 = vmatprep.subr.mxu0 0.0
    %383 = vmatpush1.msra.mxu0 0.0
    %384 = vmatprep.subr.mxu0 0.0
    %385 = vmatpush1.msra.mxu0 0.0
    %386 = vmatprep.subr.mxu0 0.0
    %387 = vmatpush1.msra.mxu0 0.0
    %388 = vmatprep.subr.mxu0 0.0
    %389 = vmatpush1.msra.mxu0 0.0
    %390 = vmatprep.subr.mxu0 0.0
    %391 = vmatpush1.msra.mxu0 0.0
    %392 = vmatprep.subr.mxu0 0.0
    %393 = vmatpush1.msra.mxu0 0.0
    %394 = vmatprep.subr.mxu0 0.0
    %395 = vmatpush1.msra.mxu0 0.0
    %396 = vmatprep.subr.mxu0 0.0
    %397 = vmatpush1.msra.mxu0 0.0
    %398 = vmatprep.subr.mxu0 0.0
    %399 = vmatpush1.msra.mxu0 0.0
    %400 = vmatprep.subr.mxu0 0.0
    %401 = vmatpush1.msra.mxu0 0.0
    %402 = vmatprep.subr.mxu0 0.0
    %403 = vmatpush1.msra.mxu0 0.0
    %404 = vmatprep.subr.mxu0 0.0
    %405 = vmatpush1.msra.mxu0 0.0
    %406 = vmatprep.subr.mxu0 0.0
    %407 = vmatpush1.msra.mxu0 0.0
    %408 = vmatprep.subr.mxu0 0.0
    %409 = vmatpush1.msra.mxu0 0.0
    %410 = vmatprep.mubr.f32.mxu0 0.0
    %411 = vmatmul.mubr.f32.gmra.mrb[0].mxu0 %v274
    %v412 = vpop.f32.mrb[0].mxu0
    %v413 = vadd.f32 %v343, %v412
    %v414 = vpop.f32.mrb[0].mxu0
    %415 = vdwg.mxu0
    %s416 = scalar_lea.vmem [#allocation2], 2
    %417 = vst.msk [vmem:[%s416] sm:$0x3] %vm251, %v413
    %s418 = scalar_lea.vmem %s0, 12
    %v419 = vld [vmem:[%s418] sm:$0x3f]
    %v421 = vcombine.high %v419, %v419
    %v423 = vunpack.c.l.s4 1983009808
    %v424 = vunpack.c.0.s8 %v423
    %v425 = vlaneseq
    %v426 = vshrl.u32 %v425, 7
    %v427 = vsub.s32 %v424, %v426
    %v428 = vrot.slane %v419, %v427
    %v430 = vunpack.c.l.s4 1983009808
    %v431 = vunpack.c.0.s8 %v430
    %v432 = vlaneseq
    %v433 = vshrl.u32 %v432, 7
    %v434 = vsub.s32 %v431, %v433
    %v435 = vrot.slane %v421, %v434
    %v436 = vcombine.high %v428, %v428
    %v439 = vsel %vm104, %v435, 0
    %441 = vmatprep.subr.mxu0 0.0
    %442 = vmatpush1.msra.mxu0 %v39
    %443 = vmatprep.subr.mxu0 0.0
    %444 = vmatpush1.msra.mxu0 %v40
    %445 = vmatprep.subr.mxu0 0.0
    %446 = vmatpush1.msra.mxu0 %v41
    %447 = vmatprep.subr.mxu0 0.0
    %448 = vmatpush1.msra.mxu0 %v42
    %449 = vmatprep.subr.mxu0 0.0
    %450 = vmatpush1.msra.mxu0 %v43
    %451 = vmatprep.subr.mxu0 0.0
    %452 = vmatpush1.msra.mxu0 %v44
    %453 = vmatprep.subr.mxu0 0.0
    %454 = vmatpush1.msra.mxu0 %v45
    %455 = vmatprep.subr.mxu0 0.0
    %456 = vmatpush1.msra.mxu0 %v46
    %457 = vmatprep.subr.mxu0 0.0
    %458 = vmatpush1.msra.mxu0 %v47
    %459 = vmatprep.subr.mxu0 0.0
    %460 = vmatpush1.msra.mxu0 %v48
    %461 = vmatprep.subr.mxu0 0.0
    %462 = vmatpush1.msra.mxu0 %v49
    %463 = vmatprep.subr.mxu0 0.0
    %464 = vmatpush1.msra.mxu0 %v50
    %465 = vmatprep.subr.mxu0 0.0
    %466 = vmatpush1.msra.mxu0 %v51
    %467 = vmatprep.subr.mxu0 0.0
    %468 = vmatpush1.msra.mxu0 %v52
    %469 = vmatprep.subr.mxu0 0.0
    %470 = vmatpush1.msra.mxu0 %v53
    %471 = vmatprep.subr.mxu0 0.0
    %472 = vmatpush1.msra.mxu0 %v54
    %473 = vmatprep.subr.mxu0 0.0
    %474 = vmatpush1.msra.mxu0 %v55
    %475 = vmatprep.subr.mxu0 0.0
    %476 = vmatpush1.msra.mxu0 %v56
    %477 = vmatprep.subr.mxu0 0.0
    %478 = vmatpush1.msra.mxu0 %v57
    %479 = vmatprep.subr.mxu0 0.0
    %480 = vmatpush1.msra.mxu0 %v58
    %481 = vmatprep.subr.mxu0 0.0
    %482 = vmatpush1.msra.mxu0 %v59
    %483 = vmatprep.subr.mxu0 0.0
    %484 = vmatpush1.msra.mxu0 %v60
    %485 = vmatprep.subr.mxu0 0.0
    %486 = vmatpush1.msra.mxu0 %v61
    %487 = vmatprep.subr.mxu0 0.0
    %488 = vmatpush1.msra.mxu0 %v62
    %489 = vmatprep.subr.mxu0 0.0
    %490 = vmatpush1.msra.mxu0 %v63
    %491 = vmatprep.subr.mxu0 0.0
    %492 = vmatpush1.msra.mxu0 %v64
    %493 = vmatprep.subr.mxu0 0.0
    %494 = vmatpush1.msra.mxu0 %v65
    %495 = vmatprep.subr.mxu0 0.0
    %496 = vmatpush1.msra.mxu0 %v66
    %497 = vmatprep.subr.mxu0 0.0
    %498 = vmatpush1.msra.mxu0 %v67
    %499 = vmatprep.subr.mxu0 0.0
    %500 = vmatpush1.msra.mxu0 %v68
    %501 = vmatprep.subr.mxu0 0.0
    %502 = vmatpush1.msra.mxu0 %v69
    %503 = vmatprep.subr.mxu0 0.0
    %504 = vmatpush1.msra.mxu0 %v70
    %505 = vmatprep.mubr.f32.mxu0 %v436
    %506 = vmatmul.mubr.f32.gmra.mrb[0].mxu0 %v428
    %v507 = vpop.f32.mrb[0].mxu0
    %v508 = vadd.f32 %v83, %v507
    %v509 = vpop.f32.mrb[0].mxu0
    %510 = vdwg.mxu0
    %511 = vmatprep.subr.mxu0 0.0
    %512 = vmatpush1.msra.mxu0 %v71
    %513 = vmatprep.subr.mxu0 0.0
    %514 = vmatpush1.msra.mxu0 %v72
    %515 = vmatprep.subr.mxu0 0.0
    %516 = vmatpush1.msra.mxu0 %v73
    %517 = vmatprep.subr.mxu0 0.0
    %518 = vmatpush1.msra.mxu0 %v74
    %519 = vmatprep.subr.mxu0 0.0
    %520 = vmatpush1.msra.mxu0 %v75
    %521 = vmatprep.subr.mxu0 0.0
    %522 = vmatpush1.msra.mxu0 %v109
    %523 = vmatprep.subr.mxu0 0.0
    %524 = vmatpush1.msra.mxu0 0.0
    %525 = vmatprep.subr.mxu0 0.0
    %526 = vmatpush1.msra.mxu0 0.0
    %527 = vmatprep.subr.mxu0 0.0
    %528 = vmatpush1.msra.mxu0 0.0
    %529 = vmatprep.subr.mxu0 0.0
    %530 = vmatpush1.msra.mxu0 0.0
    %531 = vmatprep.subr.mxu0 0.0
    %532 = vmatpush1.msra.mxu0 0.0
    %533 = vmatprep.subr.mxu0 0.0
    %534 = vmatpush1.msra.mxu0 0.0
    %535 = vmatprep.subr.mxu0 0.0
    %536 = vmatpush1.msra.mxu0 0.0
    %537 = vmatprep.subr.mxu0 0.0
    %538 = vmatpush1.msra.mxu0 0.0
    %539 = vmatprep.subr.mxu0 0.0
    %540 = vmatpush1.msra.mxu0 0.0
    %541 = vmatprep.subr.mxu0 0.0
    %542 = vmatpush1.msra.mxu0 0.0
    %543 = vmatprep.subr.mxu0 0.0
    %544 = vmatpush1.msra.mxu0 0.0
    %545 = vmatprep.subr.mxu0 0.0
    %546 = vmatpush1.msra.mxu0 0.0
    %547 = vmatprep.subr.mxu0 0.0
    %548 = vmatpush1.msra.mxu0 0.0
    %549 = vmatprep.subr.mxu0 0.0
    %550 = vmatpush1.msra.mxu0 0.0
    %551 = vmatprep.subr.mxu0 0.0
    %552 = vmatpush1.msra.mxu0 0.0
    %553 = vmatprep.subr.mxu0 0.0
    %554 = vmatpush1.msra.mxu0 0.0
    %555 = vmatprep.subr.mxu0 0.0
    %556 = vmatpush1.msra.mxu0 0.0
    %557 = vmatprep.subr.mxu0 0.0
    %558 = vmatpush1.msra.mxu0 0.0
    %559 = vmatprep.subr.mxu0 0.0
    %560 = vmatpush1.msra.mxu0 0.0
    %561 = vmatprep.subr.mxu0 0.0
    %562 = vmatpush1.msra.mxu0 0.0
    %563 = vmatprep.subr.mxu0 0.0
    %564 = vmatpush1.msra.mxu0 0.0
    %565 = vmatprep.subr.mxu0 0.0
    %566 = vmatpush1.msra.mxu0 0.0
    %567 = vmatprep.subr.mxu0 0.0
    %568 = vmatpush1.msra.mxu0 0.0
    %569 = vmatprep.subr.mxu0 0.0
    %570 = vmatpush1.msra.mxu0 0.0
    %571 = vmatprep.subr.mxu0 0.0
    %572 = vmatpush1.msra.mxu0 0.0
    %573 = vmatprep.subr.mxu0 0.0
    %574 = vmatpush1.msra.mxu0 0.0
    %575 = vmatprep.mubr.f32.mxu0 0.0
    %576 = vmatmul.mubr.f32.gmra.mrb[0].mxu0 %v439
    %v577 = vpop.f32.mrb[0].mxu0
    %v578 = vadd.f32 %v508, %v577
    %v579 = vpop.f32.mrb[0].mxu0
    %580 = vdwg.mxu0
    %s581 = scalar_lea.vmem [#allocation2], 4
    %582 = vst.msk [vmem:[%s581] sm:$0x3] %vm251, %v578
    %s583 = scalar_lea.vmem %s0, 18
    %v584 = vld [vmem:[%s583] sm:$0x3f]
    %v586 = vcombine.high %v584, %v584
    %v588 = vunpack.c.l.s4 1983009808
    %v589 = vunpack.c.0.s8 %v588
    %v590 = vlaneseq
    %v591 = vshrl.u32 %v590, 7
    %v592 = vsub.s32 %v589, %v591
    %v593 = vrot.slane %v584, %v592
    %v595 = vunpack.c.l.s4 1983009808
    %v596 = vunpack.c.0.s8 %v595
    %v597 = vlaneseq
    %v598 = vshrl.u32 %v597, 7
    %v599 = vsub.s32 %v596, %v598
    %v600 = vrot.slane %v586, %v599
    %v601 = vcombine.high %v593, %v593
    %v604 = vsel %vm104, %v600, 0
    %606 = vmatprep.subr.mxu0 0.0
    %607 = vmatpush1.msra.mxu0 %v39
    %608 = vmatprep.subr.mxu0 0.0
    %609 = vmatpush1.msra.mxu0 %v40
    %610 = vmatprep.subr.mxu0 0.0
    %611 = vmatpush1.msra.mxu0 %v41
    %612 = vmatprep.subr.mxu0 0.0
    %613 = vmatpush1.msra.mxu0 %v42
    %614 = vmatprep.subr.mxu0 0.0
    %615 = vmatpush1.msra.mxu0 %v43
    %616 = vmatprep.subr.mxu0 0.0
    %617 = vmatpush1.msra.mxu0 %v44
    %618 = vmatprep.subr.mxu0 0.0
    %619 = vmatpush1.msra.mxu0 %v45
    %620 = vmatprep.subr.mxu0 0.0
    %621 = vmatpush1.msra.mxu0 %v46
    %622 = vmatprep.subr.mxu0 0.0
    %623 = vmatpush1.msra.mxu0 %v47
    %624 = vmatprep.subr.mxu0 0.0
    %625 = vmatpush1.msra.mxu0 %v48
    %626 = vmatprep.subr.mxu0 0.0
    %627 = vmatpush1.msra.mxu0 %v49
    %628 = vmatprep.subr.mxu0 0.0
    %629 = vmatpush1.msra.mxu0 %v50
    %630 = vmatprep.subr.mxu0 0.0
    %631 = vmatpush1.msra.mxu0 %v51
    %632 = vmatprep.subr.mxu0 0.0
    %633 = vmatpush1.msra.mxu0 %v52
    %634 = vmatprep.subr.mxu0 0.0
    %635 = vmatpush1.msra.mxu0 %v53
    %636 = vmatprep.subr.mxu0 0.0
    %637 = vmatpush1.msra.mxu0 %v54
    %638 = vmatprep.subr.mxu0 0.0
    %639 = vmatpush1.msra.mxu0 %v55
    %640 = vmatprep.subr.mxu0 0.0
    %641 = vmatpush1.msra.mxu0 %v56
    %642 = vmatprep.subr.mxu0 0.0
    %643 = vmatpush1.msra.mxu0 %v57
    %644 = vmatprep.subr.mxu0 0.0
    %645 = vmatpush1.msra.mxu0 %v58
    %646 = vmatprep.subr.mxu0 0.0
    %647 = vmatpush1.msra.mxu0 %v59
    %648 = vmatprep.subr.mxu0 0.0
    %649 = vmatpush1.msra.mxu0 %v60
    %650 = vmatprep.subr.mxu0 0.0
    %651 = vmatpush1.msra.mxu0 %v61
    %652 = vmatprep.subr.mxu0 0.0
    %653 = vmatpush1.msra.mxu0 %v62
    %654 = vmatprep.subr.mxu0 0.0
    %655 = vmatpush1.msra.mxu0 %v63
    %656 = vmatprep.subr.mxu0 0.0
    %657 = vmatpush1.msra.mxu0 %v64
    %658 = vmatprep.subr.mxu0 0.0
    %659 = vmatpush1.msra.mxu0 %v65
    %660 = vmatprep.subr.mxu0 0.0
    %661 = vmatpush1.msra.mxu0 %v66
    %662 = vmatprep.subr.mxu0 0.0
    %663 = vmatpush1.msra.mxu0 %v67
    %664 = vmatprep.subr.mxu0 0.0
    %665 = vmatpush1.msra.mxu0 %v68
    %666 = vmatprep.subr.mxu0 0.0
    %667 = vmatpush1.msra.mxu0 %v69
    %668 = vmatprep.subr.mxu0 0.0
    %669 = vmatpush1.msra.mxu0 %v70
    %670 = vmatprep.mubr.f32.mxu0 %v601
    %671 = vmatmul.mubr.f32.gmra.mrb[0].mxu0 %v593
    %v672 = vpop.f32.mrb[0].mxu0
    %v673 = vadd.f32 %v83, %v672
    %v674 = vpop.f32.mrb[0].mxu0
    %675 = vdwg.mxu0
    %676 = vmatprep.subr.mxu0 0.0
    %677 = vmatpush1.msra.mxu0 %v71
    %678 = vmatprep.subr.mxu0 0.0
    %679 = vmatpush1.msra.mxu0 %v72
    %680 = vmatprep.subr.mxu0 0.0
    %681 = vmatpush1.msra.mxu0 %v73
    %682 = vmatprep.subr.mxu0 0.0
    %683 = vmatpush1.msra.mxu0 %v74
    %684 = vmatprep.subr.mxu0 0.0
    %685 = vmatpush1.msra.mxu0 %v75
    %686 = vmatprep.subr.mxu0 0.0
    %687 = vmatpush1.msra.mxu0 %v109
    %688 = vmatprep.subr.mxu0 0.0
    %689 = vmatpush1.msra.mxu0 0.0
    %690 = vmatprep.subr.mxu0 0.0
    %691 = vmatpush1.msra.mxu0 0.0
    %692 = vmatprep.subr.mxu0 0.0
    %693 = vmatpush1.msra.mxu0 0.0
    %694 = vmatprep.subr.mxu0 0.0
    %695 = vmatpush1.msra.mxu0 0.0
    %696 = vmatprep.subr.mxu0 0.0
    %697 = vmatpush1.msra.mxu0 0.0
    %698 = vmatprep.subr.mxu0 0.0
    %699 = vmatpush1.msra.mxu0 0.0
    %700 = vmatprep.subr.mxu0 0.0
    %701 = vmatpush1.msra.mxu0 0.0
    %702 = vmatprep.subr.mxu0 0.0
    %703 = vmatpush1.msra.mxu0 0.0
    %704 = vmatprep.subr.mxu0 0.0
    %705 = vmatpush1.msra.mxu0 0.0
    %706 = vmatprep.subr.mxu0 0.0
    %707 = vmatpush1.msra.mxu0 0.0
    %708 = vmatprep.subr.mxu0 0.0
    %709 = vmatpush1.msra.mxu0 0.0
    %710 = vmatprep.subr.mxu0 0.0
    %711 = vmatpush1.msra.mxu0 0.0
    %712 = vmatprep.subr.mxu0 0.0
    %713 = vmatpush1.msra.mxu0 0.0
    %714 = vmatprep.subr.mxu0 0.0
    %715 = vmatpush1.msra.mxu0 0.0
    %716 = vmatprep.subr.mxu0 0.0
    %717 = vmatpush1.msra.mxu0 0.0
    %718 = vmatprep.subr.mxu0 0.0
    %719 = vmatpush1.msra.mxu0 0.0
    %720 = vmatprep.subr.mxu0 0.0
    %721 = vmatpush1.msra.mxu0 0.0
    %722 = vmatprep.subr.mxu0 0.0
    %723 = vmatpush1.msra.mxu0 0.0
    %724 = vmatprep.subr.mxu0 0.0
    %725 = vmatpush1.msra.mxu0 0.0
    %726 = vmatprep.subr.mxu0 0.0
    %727 = vmatpush1.msra.mxu0 0.0
    %728 = vmatprep.subr.mxu0 0.0
    %729 = vmatpush1.msra.mxu0 0.0
    %730 = vmatprep.subr.mxu0 0.0
    %731 = vmatpush1.msra.mxu0 0.0
    %732 = vmatprep.subr.mxu0 0.0
    %733 = vmatpush1.msra.mxu0 0.0
    %734 = vmatprep.subr.mxu0 0.0
    %735 = vmatpush1.msra.mxu0 0.0
    %736 = vmatprep.subr.mxu0 0.0
    %737 = vmatpush1.msra.mxu0 0.0
    %738 = vmatprep.subr.mxu0 0.0
    %739 = vmatpush1.msra.mxu0 0.0
    %740 = vmatprep.mubr.f32.mxu0 0.0
    %741 = vmatmul.mubr.f32.gmra.mrb[0].mxu0 %v604
    %v742 = vpop.f32.mrb[0].mxu0
    %v743 = vadd.f32 %v673, %v742
    %v744 = vpop.f32.mrb[0].mxu0
    %745 = vdwg.mxu0
    %s746 = scalar_lea.vmem [#allocation2], 6
    %747 = vst.msk [vmem:[%s746] sm:$0x3] %vm251, %v743
    %s748 = scalar_lea.vmem %s0, 24
    %v749 = vld [vmem:[%s748] sm:$0x3f]
    %v751 = vcombine.high %v749, %v749
    %v753 = vunpack.c.l.s4 1983009808
    %v754 = vunpack.c.0.s8 %v753
    %v755 = vlaneseq
    %v756 = vshrl.u32 %v755, 7
    %v757 = vsub.s32 %v754, %v756
    %v758 = vrot.slane %v749, %v757
    %v760 = vunpack.c.l.s4 1983009808
    %v761 = vunpack.c.0.s8 %v760
    %v762 = vlaneseq
    %v763 = vshrl.u32 %v762, 7
    %v764 = vsub.s32 %v761, %v763
    %v765 = vrot.slane %v751, %v764
    %v766 = vcombine.high %v758, %v758
    %v769 = vsel %vm104, %v765, 0
    %771 = vmatprep.subr.mxu0 0.0
    %772 = vmatpush1.msra.mxu0 %v39
    %773 = vmatprep.subr.mxu0 0.0
    %774 = vmatpush1.msra.mxu0 %v40
    %775 = vmatprep.subr.mxu0 0.0
    %776 = vmatpush1.msra.mxu0 %v41
    %777 = vmatprep.subr.mxu0 0.0
    %778 = vmatpush1.msra.mxu0 %v42
    %779 = vmatprep.subr.mxu0 0.0
    %780 = vmatpush1.msra.mxu0 %v43
    %781 = vmatprep.subr.mxu0 0.0
    %782 = vmatpush1.msra.mxu0 %v44
    %783 = vmatprep.subr.mxu0 0.0
    %784 = vmatpush1.msra.mxu0 %v45
    %785 = vmatprep.subr.mxu0 0.0
    %786 = vmatpush1.msra.mxu0 %v46
    %787 = vmatprep.subr.mxu0 0.0
    %788 = vmatpush1.msra.mxu0 %v47
    %789 = vmatprep.subr.mxu0 0.0
    %790 = vmatpush1.msra.mxu0 %v48
    %791 = vmatprep.subr.mxu0 0.0
    %792 = vmatpush1.msra.mxu0 %v49
    %793 = vmatprep.subr.mxu0 0.0
    %794 = vmatpush1.msra.mxu0 %v50
    %795 = vmatprep.subr.mxu0 0.0
    %796 = vmatpush1.msra.mxu0 %v51
    %797 = vmatprep.subr.mxu0 0.0
    %798 = vmatpush1.msra.mxu0 %v52
    %799 = vmatprep.subr.mxu0 0.0
    %800 = vmatpush1.msra.mxu0 %v53
    %801 = vmatprep.subr.mxu0 0.0
    %802 = vmatpush1.msra.mxu0 %v54
    %803 = vmatprep.subr.mxu0 0.0
    %804 = vmatpush1.msra.mxu0 %v55
    %805 = vmatprep.subr.mxu0 0.0
    %806 = vmatpush1.msra.mxu0 %v56
    %807 = vmatprep.subr.mxu0 0.0
    %808 = vmatpush1.msra.mxu0 %v57
    %809 = vmatprep.subr.mxu0 0.0
    %810 = vmatpush1.msra.mxu0 %v58
    %811 = vmatprep.subr.mxu0 0.0
    %812 = vmatpush1.msra.mxu0 %v59
    %813 = vmatprep.subr.mxu0 0.0
    %814 = vmatpush1.msra.mxu0 %v60
    %815 = vmatprep.subr.mxu0 0.0
    %816 = vmatpush1.msra.mxu0 %v61
    %817 = vmatprep.subr.mxu0 0.0
    %818 = vmatpush1.msra.mxu0 %v62
    %819 = vmatprep.subr.mxu0 0.0
    %820 = vmatpush1.msra.mxu0 %v63
    %821 = vmatprep.subr.mxu0 0.0
    %822 = vmatpush1.msra.mxu0 %v64
    %823 = vmatprep.subr.mxu0 0.0
    %824 = vmatpush1.msra.mxu0 %v65
    %825 = vmatprep.subr.mxu0 0.0
    %826 = vmatpush1.msra.mxu0 %v66
    %827 = vmatprep.subr.mxu0 0.0
    %828 = vmatpush1.msra.mxu0 %v67
    %829 = vmatprep.subr.mxu0 0.0
    %830 = vmatpush1.msra.mxu0 %v68
    %831 = vmatprep.subr.mxu0 0.0
    %832 = vmatpush1.msra.mxu0 %v69
    %833 = vmatprep.subr.mxu0 0.0
    %834 = vmatpush1.msra.mxu0 %v70
    %835 = vmatprep.mubr.f32.mxu0 %v766
    %836 = vmatmul.mubr.f32.gmra.mrb[0].mxu0 %v758
    %v837 = vpop.f32.mrb[0].mxu0
    %v838 = vadd.f32 %v83, %v837
    %v839 = vpop.f32.mrb[0].mxu0
    %840 = vdwg.mxu0
    %841 = vmatprep.subr.mxu0 0.0
    %842 = vmatpush1.msra.mxu0 %v71
    %843 = vmatprep.subr.mxu0 0.0
    %844 = vmatpush1.msra.mxu0 %v72
    %845 = vmatprep.subr.mxu0 0.0
    %846 = vmatpush1.msra.mxu0 %v73
    %847 = vmatprep.subr.mxu0 0.0
    %848 = vmatpush1.msra.mxu0 %v74
    %849 = vmatprep.subr.mxu0 0.0
    %850 = vmatpush1.msra.mxu0 %v75
    %851 = vmatprep.subr.mxu0 0.0
    %852 = vmatpush1.msra.mxu0 %v109
    %853 = vmatprep.subr.mxu0 0.0
    %854 = vmatpush1.msra.mxu0 0.0
    %855 = vmatprep.subr.mxu0 0.0
    %856 = vmatpush1.msra.mxu0 0.0
    %857 = vmatprep.subr.mxu0 0.0
    %858 = vmatpush1.msra.mxu0 0.0
    %859 = vmatprep.subr.mxu0 0.0
    %860 = vmatpush1.msra.mxu0 0.0
    %861 = vmatprep.subr.mxu0 0.0
    %862 = vmatpush1.msra.mxu0 0.0
    %863 = vmatprep.subr.mxu0 0.0
    %864 = vmatpush1.msra.mxu0 0.0
    %865 = vmatprep.subr.mxu0 0.0
    %866 = vmatpush1.msra.mxu0 0.0
    %867 = vmatprep.subr.mxu0 0.0
    %868 = vmatpush1.msra.mxu0 0.0
    %869 = vmatprep.subr.mxu0 0.0
    %870 = vmatpush1.msra.mxu0 0.0
    %871 = vmatprep.subr.mxu0 0.0
    %872 = vmatpush1.msra.mxu0 0.0
    %873 = vmatprep.subr.mxu0 0.0
    %874 = vmatpush1.msra.mxu0 0.0
    %875 = vmatprep.subr.mxu0 0.0
    %876 = vmatpush1.msra.mxu0 0.0
    %877 = vmatprep.subr.mxu0 0.0
    %878 = vmatpush1.msra.mxu0 0.0
    %879 = vmatprep.subr.mxu0 0.0
    %880 = vmatpush1.msra.mxu0 0.0
    %881 = vmatprep.subr.mxu0 0.0
    %882 = vmatpush1.msra.mxu0 0.0
    %883 = vmatprep.subr.mxu0 0.0
    %884 = vmatpush1.msra.mxu0 0.0
    %885 = vmatprep.subr.mxu0 0.0
    %886 = vmatpush1.msra.mxu0 0.0
    %887 = vmatprep.subr.mxu0 0.0
    %888 = vmatpush1.msra.mxu0 0.0
    %889 = vmatprep.subr.mxu0 0.0
    %890 = vmatpush1.msra.mxu0 0.0
    %891 = vmatprep.subr.mxu0 0.0
    %892 = vmatpush1.msra.mxu0 0.0
    %893 = vmatprep.subr.mxu0 0.0
    %894 = vmatpush1.msra.mxu0 0.0
    %895 = vmatprep.subr.mxu0 0.0
    %896 = vmatpush1.msra.mxu0 0.0
    %897 = vmatprep.subr.mxu0 0.0
    %898 = vmatpush1.msra.mxu0 0.0
    %899 = vmatprep.subr.mxu0 0.0
    %900 = vmatpush1.msra.mxu0 0.0
    %901 = vmatprep.subr.mxu0 0.0
    %902 = vmatpush1.msra.mxu0 0.0
    %903 = vmatprep.subr.mxu0 0.0
    %904 = vmatpush1.msra.mxu0 0.0
    %905 = vmatprep.mubr.f32.mxu0 0.0
    %906 = vmatmul.mubr.f32.gmra.mrb[0].mxu0 %v769
    %v907 = vpop.f32.mrb[0].mxu0
    %v908 = vadd.f32 %v838, %v907
    %v909 = vpop.f32.mrb[0].mxu0
    %910 = vdwg.mxu0
    %s911 = scalar_lea.vmem [#allocation2], 8
    %912 = vst.msk [vmem:[%s911] sm:$0x3] %vm251, %v908
    %s913 = scalar_lea.vmem %s0, 30
    %v914 = vld [vmem:[%s913] sm:$0x3f]
    %v916 = vcombine.high %v914, %v914
    %v918 = vunpack.c.l.s4 1983009808
    %v919 = vunpack.c.0.s8 %v918
    %v920 = vlaneseq
    %v921 = vshrl.u32 %v920, 7
    %v922 = vsub.s32 %v919, %v921
    %v923 = vrot.slane %v914, %v922
    %v925 = vunpack.c.l.s4 1983009808
    %v926 = vunpack.c.0.s8 %v925
    %v927 = vlaneseq
    %v928 = vshrl.u32 %v927, 7
    %v929 = vsub.s32 %v926, %v928
    %v930 = vrot.slane %v916, %v929
    %v931 = vcombine.high %v923, %v923
    %v934 = vsel %vm104, %v930, 0
    %936 = vmatprep.subr.mxu0 0.0
    %937 = vmatpush1.msra.mxu0 %v39
    %938 = vmatprep.subr.mxu0 0.0
    %939 = vmatpush1.msra.mxu0 %v40
    %940 = vmatprep.subr.mxu0 0.0
    %941 = vmatpush1.msra.mxu0 %v41
    %942 = vmatprep.subr.mxu0 0.0
    %943 = vmatpush1.msra.mxu0 %v42
    %944 = vmatprep.subr.mxu0 0.0
    %945 = vmatpush1.msra.mxu0 %v43
    %946 = vmatprep.subr.mxu0 0.0
    %947 = vmatpush1.msra.mxu0 %v44
    %948 = vmatprep.subr.mxu0 0.0
    %949 = vmatpush1.msra.mxu0 %v45
    %950 = vmatprep.subr.mxu0 0.0
    %951 = vmatpush1.msra.mxu0 %v46
    %952 = vmatprep.subr.mxu0 0.0
    %953 = vmatpush1.msra.mxu0 %v47
    %954 = vmatprep.subr.mxu0 0.0
    %955 = vmatpush1.msra.mxu0 %v48
    %956 = vmatprep.subr.mxu0 0.0
    %957 = vmatpush1.msra.mxu0 %v49
    %958 = vmatprep.subr.mxu0 0.0
    %959 = vmatpush1.msra.mxu0 %v50
    %960 = vmatprep.subr.mxu0 0.0
    %961 = vmatpush1.msra.mxu0 %v51
    %962 = vmatprep.subr.mxu0 0.0
    %963 = vmatpush1.msra.mxu0 %v52
    %964 = vmatprep.subr.mxu0 0.0
    %965 = vmatpush1.msra.mxu0 %v53
    %966 = vmatprep.subr.mxu0 0.0
    %967 = vmatpush1.msra.mxu0 %v54
    %968 = vmatprep.subr.mxu0 0.0
    %969 = vmatpush1.msra.mxu0 %v55
    %970 = vmatprep.subr.mxu0 0.0
    %971 = vmatpush1.msra.mxu0 %v56
    %972 = vmatprep.subr.mxu0 0.0
    %973 = vmatpush1.msra.mxu0 %v57
    %974 = vmatprep.subr.mxu0 0.0
    %975 = vmatpush1.msra.mxu0 %v58
    %976 = vmatprep.subr.mxu0 0.0
    %977 = vmatpush1.msra.mxu0 %v59
    %978 = vmatprep.subr.mxu0 0.0
    %979 = vmatpush1.msra.mxu0 %v60
    %980 = vmatprep.subr.mxu0 0.0
    %981 = vmatpush1.msra.mxu0 %v61
    %982 = vmatprep.subr.mxu0 0.0
    %983 = vmatpush1.msra.mxu0 %v62
    %984 = vmatprep.subr.mxu0 0.0
    %985 = vmatpush1.msra.mxu0 %v63
    %986 = vmatprep.subr.mxu0 0.0
    %987 = vmatpush1.msra.mxu0 %v64
    %988 = vmatprep.subr.mxu0 0.0
    %989 = vmatpush1.msra.mxu0 %v65
    %990 = vmatprep.subr.mxu0 0.0
    %991 = vmatpush1.msra.mxu0 %v66
    %992 = vmatprep.subr.mxu0 0.0
    %993 = vmatpush1.msra.mxu0 %v67
    %994 = vmatprep.subr.mxu0 0.0
    %995 = vmatpush1.msra.mxu0 %v68
    %996 = vmatprep.subr.mxu0 0.0
    %997 = vmatpush1.msra.mxu0 %v69
    %998 = vmatprep.subr.mxu0 0.0
    %999 = vmatpush1.msra.mxu0 %v70
    %1000 = vmatprep.mubr.f32.mxu0 %v931
    %1001 = vmatmul.mubr.f32.gmra.mrb[0].mxu0 %v923
    %v1002 = vpop.f32.mrb[0].mxu0
    %v1003 = vadd.f32 %v83, %v1002
    %v1004 = vpop.f32.mrb[0].mxu0
    %1005 = vdwg.mxu0
    %1006 = vmatprep.subr.mxu0 0.0
    %1007 = vmatpush1.msra.mxu0 %v71
    %1008 = vmatprep.subr.mxu0 0.0
    %1009 = vmatpush1.msra.mxu0 %v72
    %1010 = vmatprep.subr.mxu0 0.0
    %1011 = vmatpush1.msra.mxu0 %v73
    %1012 = vmatprep.subr.mxu0 0.0
    %1013 = vmatpush1.msra.mxu0 %v74
    %1014 = vmatprep.subr.mxu0 0.0
    %1015 = vmatpush1.msra.mxu0 %v75
    %1016 = vmatprep.subr.mxu0 0.0
    %1017 = vmatpush1.msra.mxu0 %v109
    %1018 = vmatprep.subr.mxu0 0.0
    %1019 = vmatpush1.msra.mxu0 0.0
    %1020 = vmatprep.subr.mxu0 0.0
    %1021 = vmatpush1.msra.mxu0 0.0
    %1022 = vmatprep.subr.mxu0 0.0
    %1023 = vmatpush1.msra.mxu0 0.0
    %1024 = vmatprep.subr.mxu0 0.0
    %1025 = vmatpush1.msra.mxu0 0.0
    %1026 = vmatprep.subr.mxu0 0.0
    %1027 = vmatpush1.msra.mxu0 0.0
    %1028 = vmatprep.subr.mxu0 0.0
    %1029 = vmatpush1.msra.mxu0 0.0
    %1030 = vmatprep.subr.mxu0 0.0
    %1031 = vmatpush1.msra.mxu0 0.0
    %1032 = vmatprep.subr.mxu0 0.0
    %1033 = vmatpush1.msra.mxu0 0.0
    %1034 = vmatprep.subr.mxu0 0.0
    %1035 = vmatpush1.msra.mxu0 0.0
    %1036 = vmatprep.subr.mxu0 0.0
    %1037 = vmatpush1.msra.mxu0 0.0
    %1038 = vmatprep.subr.mxu0 0.0
    %1039 = vmatpush1.msra.mxu0 0.0
    %1040 = vmatprep.subr.mxu0 0.0
    %1041 = vmatpush1.msra.mxu0 0.0
    %1042 = vmatprep.subr.mxu0 0.0
    %1043 = vmatpush1.msra.mxu0 0.0
    %1044 = vmatprep.subr.mxu0 0.0
    %1045 = vmatpush1.msra.mxu0 0.0
    %1046 = vmatprep.subr.mxu0 0.0
    %1047 = vmatpush1.msra.mxu0 0.0
    %1048 = vmatprep.subr.mxu0 0.0
    %1049 = vmatpush1.msra.mxu0 0.0
    %1050 = vmatprep.subr.mxu0 0.0
    %1051 = vmatpush1.msra.mxu0 0.0
    %1052 = vmatprep.subr.mxu0 0.0
    %1053 = vmatpush1.msra.mxu0 0.0
    %1054 = vmatprep.subr.mxu0 0.0
    %1055 = vmatpush1.msra.mxu0 0.0
    %1056 = vmatprep.subr.mxu0 0.0
    %1057 = vmatpush1.msra.mxu0 0.0
    %1058 = vmatprep.subr.mxu0 0.0
    %1059 = vmatpush1.msra.mxu0 0.0
    %1060 = vmatprep.subr.mxu0 0.0
    %1061 = vmatpush1.msra.mxu0 0.0
    %1062 = vmatprep.subr.mxu0 0.0
    %1063 = vmatpush1.msra.mxu0 0.0
    %1064 = vmatprep.subr.mxu0 0.0
    %1065 = vmatpush1.msra.mxu0 0.0
    %1066 = vmatprep.subr.mxu0 0.0
    %1067 = vmatpush1.msra.mxu0 0.0
    %1068 = vmatprep.subr.mxu0 0.0
    %1069 = vmatpush1.msra.mxu0 0.0
    %1070 = vmatprep.mubr.f32.mxu0 0.0
    %1071 = vmatmul.mubr.f32.gmra.mrb[0].mxu0 %v934
    %v1072 = vpop.f32.mrb[0].mxu0
    %v1073 = vadd.f32 %v1003, %v1072
    %v1074 = vpop.f32.mrb[0].mxu0
    %1075 = vdwg.mxu0
    %s1076 = scalar_lea.vmem [#allocation2], 10
    %1077 = vst.msk [vmem:[%s1076] sm:$0x3] %vm251, %v1073
    %s1078 = scalar_lea.vmem %s0, 36
    %v1079 = vld [vmem:[%s1078] sm:$0x3f]
    %v1081 = vcombine.high %v1079, %v1079
    %v1083 = vunpack.c.l.s4 1983009808
    %v1084 = vunpack.c.0.s8 %v1083
    %v1085 = vlaneseq
    %v1086 = vshrl.u32 %v1085, 7
    %v1087 = vsub.s32 %v1084, %v1086
    %v1088 = vrot.slane %v1079, %v1087
    %v1090 = vunpack.c.l.s4 1983009808
    %v1091 = vunpack.c.0.s8 %v1090
    %v1092 = vlaneseq
    %v1093 = vshrl.u32 %v1092, 7
    %v1094 = vsub.s32 %v1091, %v1093
    %v1095 = vrot.slane %v1081, %v1094
    %v1096 = vcombine.high %v1088, %v1088
    %v1099 = vsel %vm104, %v1095, 0
    %1101 = vmatprep.subr.mxu0 0.0
    %1102 = vmatpush1.msra.mxu0 %v39
    %1103 = vmatprep.subr.mxu0 0.0
    %1104 = vmatpush1.msra.mxu0 %v40
    %1105 = vmatprep.subr.mxu0 0.0
    %1106 = vmatpush1.msra.mxu0 %v41
    %1107 = vmatprep.subr.mxu0 0.0
    %1108 = vmatpush1.msra.mxu0 %v42
    %1109 = vmatprep.subr.mxu0 0.0
    %1110 = vmatpush1.msra.mxu0 %v43
    %1111 = vmatprep.subr.mxu0 0.0
    %1112 = vmatpush1.msra.mxu0 %v44
    %1113 = vmatprep.subr.mxu0 0.0
    %1114 = vmatpush1.msra.mxu0 %v45
    %1115 = vmatprep.subr.mxu0 0.0
    %1116 = vmatpush1.msra.mxu0 %v46
    %1117 = vmatprep.subr.mxu0 0.0
    %1118 = vmatpush1.msra.mxu0 %v47
    %1119 = vmatprep.subr.mxu0 0.0
    %1120 = vmatpush1.msra.mxu0 %v48
    %1121 = vmatprep.subr.mxu0 0.0
    %1122 = vmatpush1.msra.mxu0 %v49
    %1123 = vmatprep.subr.mxu0 0.0
    %1124 = vmatpush1.msra.mxu0 %v50
    %1125 = vmatprep.subr.mxu0 0.0
    %1126 = vmatpush1.msra.mxu0 %v51
    %1127 = vmatprep.subr.mxu0 0.0
    %1128 = vmatpush1.msra.mxu0 %v52
    %1129 = vmatprep.subr.mxu0 0.0
    %1130 = vmatpush1.msra.mxu0 %v53
    %1131 = vmatprep.subr.mxu0 0.0
    %1132 = vmatpush1.msra.mxu0 %v54
    %1133 = vmatprep.subr.mxu0 0.0
    %1134 = vmatpush1.msra.mxu0 %v55
    %1135 = vmatprep.subr.mxu0 0.0
    %1136 = vmatpush1.msra.mxu0 %v56
    %1137 = vmatprep.subr.mxu0 0.0
    %1138 = vmatpush1.msra.mxu0 %v57
    %1139 = vmatprep.subr.mxu0 0.0
    %1140 = vmatpush1.msra.mxu0 %v58
    %1141 = vmatprep.subr.mxu0 0.0
    %1142 = vmatpush1.msra.mxu0 %v59
    %1143 = vmatprep.subr.mxu0 0.0
    %1144 = vmatpush1.msra.mxu0 %v60
    %1145 = vmatprep.subr.mxu0 0.0
    %1146 = vmatpush1.msra.mxu0 %v61
    %1147 = vmatprep.subr.mxu0 0.0
    %1148 = vmatpush1.msra.mxu0 %v62
    %1149 = vmatprep.subr.mxu0 0.0
    %1150 = vmatpush1.msra.mxu0 %v63
    %1151 = vmatprep.subr.mxu0 0.0
    %1152 = vmatpush1.msra.mxu0 %v64
    %1153 = vmatprep.subr.mxu0 0.0
    %1154 = vmatpush1.msra.mxu0 %v65
    %1155 = vmatprep.subr.mxu0 0.0
    %1156 = vmatpush1.msra.mxu0 %v66
    %1157 = vmatprep.subr.mxu0 0.0
    %1158 = vmatpush1.msra.mxu0 %v67
    %1159 = vmatprep.subr.mxu0 0.0
    %1160 = vmatpush1.msra.mxu0 %v68
    %1161 = vmatprep.subr.mxu0 0.0
    %1162 = vmatpush1.msra.mxu0 %v69
    %1163 = vmatprep.subr.mxu0 0.0
    %1164 = vmatpush1.msra.mxu0 %v70
    %1165 = vmatprep.mubr.f32.mxu0 %v1096
    %1166 = vmatmul.mubr.f32.gmra.mrb[0].mxu0 %v1088
    %v1167 = vpop.f32.mrb[0].mxu0
    %v1168 = vadd.f32 %v83, %v1167
    %v1169 = vpop.f32.mrb[0].mxu0
    %1170 = vdwg.mxu0
    %1171 = vmatprep.subr.mxu0 0.0
    %1172 = vmatpush1.msra.mxu0 %v71
    %1173 = vmatprep.subr.mxu0 0.0
    %1174 = vmatpush1.msra.mxu0 %v72
    %1175 = vmatprep.subr.mxu0 0.0
    %1176 = vmatpush1.msra.mxu0 %v73
    %1177 = vmatprep.subr.mxu0 0.0
    %1178 = vmatpush1.msra.mxu0 %v74
    %1179 = vmatprep.subr.mxu0 0.0
    %1180 = vmatpush1.msra.mxu0 %v75
    %1181 = vmatprep.subr.mxu0 0.0
    %1182 = vmatpush1.msra.mxu0 %v109
    %1183 = vmatprep.subr.mxu0 0.0
    %1184 = vmatpush1.msra.mxu0 0.0
    %1185 = vmatprep.subr.mxu0 0.0
    %1186 = vmatpush1.msra.mxu0 0.0
    %1187 = vmatprep.subr.mxu0 0.0
    %1188 = vmatpush1.msra.mxu0 0.0
    %1189 = vmatprep.subr.mxu0 0.0
    %1190 = vmatpush1.msra.mxu0 0.0
    %1191 = vmatprep.subr.mxu0 0.0
    %1192 = vmatpush1.msra.mxu0 0.0
    %1193 = vmatprep.subr.mxu0 0.0
    %1194 = vmatpush1.msra.mxu0 0.0
    %1195 = vmatprep.subr.mxu0 0.0
    %1196 = vmatpush1.msra.mxu0 0.0
    %1197 = vmatprep.subr.mxu0 0.0
    %1198 = vmatpush1.msra.mxu0 0.0
    %1199 = vmatprep.subr.mxu0 0.0
    %1200 = vmatpush1.msra.mxu0 0.0
    %1201 = vmatprep.subr.mxu0 0.0
    %1202 = vmatpush1.msra.mxu0 0.0
    %1203 = vmatprep.subr.mxu0 0.0
    %1204 = vmatpush1.msra.mxu0 0.0
    %1205 = vmatprep.subr.mxu0 0.0
    %1206 = vmatpush1.msra.mxu0 0.0
    %1207 = vmatprep.subr.mxu0 0.0
    %1208 = vmatpush1.msra.mxu0 0.0
    %1209 = vmatprep.subr.mxu0 0.0
    %1210 = vmatpush1.msra.mxu0 0.0
    %1211 = vmatprep.subr.mxu0 0.0
    %1212 = vmatpush1.msra.mxu0 0.0
    %1213 = vmatprep.subr.mxu0 0.0
    %1214 = vmatpush1.msra.mxu0 0.0
    %1215 = vmatprep.subr.mxu0 0.0
    %1216 = vmatpush1.msra.mxu0 0.0
    %1217 = vmatprep.subr.mxu0 0.0
    %1218 = vmatpush1.msra.mxu0 0.0
    %1219 = vmatprep.subr.mxu0 0.0
    %1220 = vmatpush1.msra.mxu0 0.0
    %1221 = vmatprep.subr.mxu0 0.0
    %1222 = vmatpush1.msra.mxu0 0.0
    %1223 = vmatprep.subr.mxu0 0.0
    %1224 = vmatpush1.msra.mxu0 0.0
    %1225 = vmatprep.subr.mxu0 0.0
    %1226 = vmatpush1.msra.mxu0 0.0
    %1227 = vmatprep.subr.mxu0 0.0
    %1228 = vmatpush1.msra.mxu0 0.0
    %1229 = vmatprep.subr.mxu0 0.0
    %1230 = vmatpush1.msra.mxu0 0.0
    %1231 = vmatprep.subr.mxu0 0.0
    %1232 = vmatpush1.msra.mxu0 0.0
    %1233 = vmatprep.subr.mxu0 0.0
    %1234 = vmatpush1.msra.mxu0 0.0
    %1235 = vmatprep.mubr.f32.mxu0 0.0
    %1236 = vmatmul.mubr.f32.gmra.mrb[0].mxu0 %v1099
    %v1237 = vpop.f32.mrb[0].mxu0
    %v1238 = vadd.f32 %v1168, %v1237
    %v1239 = vpop.f32.mrb[0].mxu0
    %1240 = vdwg.mxu0
    %s1241 = scalar_lea.vmem [#allocation2], 12
    %1242 = vst.msk [vmem:[%s1241] sm:$0x3] %vm251, %v1238
    %s1243 = scalar_lea.vmem %s0, 42
    %v1244 = vld [vmem:[%s1243] sm:$0x3f]
    %v1246 = vcombine.high %v1244, %v1244
    %v1248 = vunpack.c.l.s4 1983009808
    %v1249 = vunpack.c.0.s8 %v1248
    %v1250 = vlaneseq
    %v1251 = vshrl.u32 %v1250, 7
    %v1252 = vsub.s32 %v1249, %v1251
    %v1253 = vrot.slane %v1244, %v1252
    %v1255 = vunpack.c.l.s4 1983009808
    %v1256 = vunpack.c.0.s8 %v1255
    %v1257 = vlaneseq
    %v1258 = vshrl.u32 %v1257, 7
    %v1259 = vsub.s32 %v1256, %v1258
    %v1260 = vrot.slane %v1246, %v1259
    %v1261 = vcombine.high %v1253, %v1253
    %v1264 = vsel %vm104, %v1260, 0
    %1266 = vmatprep.subr.mxu0 0.0
    %1267 = vmatpush1.msra.mxu0 %v39
    %1268 = vmatprep.subr.mxu0 0.0
    %1269 = vmatpush1.msra.mxu0 %v40
    %1270 = vmatprep.subr.mxu0 0.0
    %1271 = vmatpush1.msra.mxu0 %v41
    %1272 = vmatprep.subr.mxu0 0.0
    %1273 = vmatpush1.msra.mxu0 %v42
    %1274 = vmatprep.subr.mxu0 0.0
    %1275 = vmatpush1.msra.mxu0 %v43
    %1276 = vmatprep.subr.mxu0 0.0
    %1277 = vmatpush1.msra.mxu0 %v44
    %1278 = vmatprep.subr.mxu0 0.0
    %1279 = vmatpush1.msra.mxu0 %v45
    %1280 = vmatprep.subr.mxu0 0.0
    %1281 = vmatpush1.msra.mxu0 %v46
    %1282 = vmatprep.subr.mxu0 0.0
    %1283 = vmatpush1.msra.mxu0 %v47
    %1284 = vmatprep.subr.mxu0 0.0
    %1285 = vmatpush1.msra.mxu0 %v48
    %1286 = vmatprep.subr.mxu0 0.0
    %1287 = vmatpush1.msra.mxu0 %v49
    %1288 = vmatprep.subr.mxu0 0.0
    %1289 = vmatpush1.msra.mxu0 %v50
    %1290 = vmatprep.subr.mxu0 0.0
    %1291 = vmatpush1.msra.mxu0 %v51
    %1292 = vmatprep.subr.mxu0 0.0
    %1293 = vmatpush1.msra.mxu0 %v52
    %1294 = vmatprep.subr.mxu0 0.0
    %1295 = vmatpush1.msra.mxu0 %v53
    %1296 = vmatprep.subr.mxu0 0.0
    %1297 = vmatpush1.msra.mxu0 %v54
    %1298 = vmatprep.subr.mxu0 0.0
    %1299 = vmatpush1.msra.mxu0 %v55
    %1300 = vmatprep.subr.mxu0 0.0
    %1301 = vmatpush1.msra.mxu0 %v56
    %1302 = vmatprep.subr.mxu0 0.0
    %1303 = vmatpush1.msra.mxu0 %v57
    %1304 = vmatprep.subr.mxu0 0.0
    %1305 = vmatpush1.msra.mxu0 %v58
    %1306 = vmatprep.subr.mxu0 0.0
    %1307 = vmatpush1.msra.mxu0 %v59
    %1308 = vmatprep.subr.mxu0 0.0
    %1309 = vmatpush1.msra.mxu0 %v60
    %1310 = vmatprep.subr.mxu0 0.0
    %1311 = vmatpush1.msra.mxu0 %v61
    %1312 = vmatprep.subr.mxu0 0.0
    %1313 = vmatpush1.msra.mxu0 %v62
    %1314 = vmatprep.subr.mxu0 0.0
    %1315 = vmatpush1.msra.mxu0 %v63
    %1316 = vmatprep.subr.mxu0 0.0
    %1317 = vmatpush1.msra.mxu0 %v64
    %1318 = vmatprep.subr.mxu0 0.0
    %1319 = vmatpush1.msra.mxu0 %v65
    %1320 = vmatprep.subr.mxu0 0.0
    %1321 = vmatpush1.msra.mxu0 %v66
    %1322 = vmatprep.subr.mxu0 0.0
    %1323 = vmatpush1.msra.mxu0 %v67
    %1324 = vmatprep.subr.mxu0 0.0
    %1325 = vmatpush1.msra.mxu0 %v68
    %1326 = vmatprep.subr.mxu0 0.0
    %1327 = vmatpush1.msra.mxu0 %v69
    %1328 = vmatprep.subr.mxu0 0.0
    %1329 = vmatpush1.msra.mxu0 %v70
    %1330 = vmatprep.mubr.f32.mxu0 %v1261
    %1331 = vmatmul.mubr.f32.gmra.mrb[0].mxu0 %v1253
    %v1332 = vpop.f32.mrb[0].mxu0
    %v1333 = vadd.f32 %v83, %v1332
    %v1334 = vpop.f32.mrb[0].mxu0
    %1335 = vdwg.mxu0
    %1336 = vmatprep.subr.mxu0 0.0
    %1337 = vmatpush1.msra.mxu0 %v71
    %1338 = vmatprep.subr.mxu0 0.0
    %1339 = vmatpush1.msra.mxu0 %v72
    %1340 = vmatprep.subr.mxu0 0.0
    %1341 = vmatpush1.msra.mxu0 %v73
    %1342 = vmatprep.subr.mxu0 0.0
    %1343 = vmatpush1.msra.mxu0 %v74
    %1344 = vmatprep.subr.mxu0 0.0
    %1345 = vmatpush1.msra.mxu0 %v75
    %1346 = vmatprep.subr.mxu0 0.0
    %1347 = vmatpush1.msra.mxu0 %v109
    %1348 = vmatprep.subr.mxu0 0.0
    %1349 = vmatpush1.msra.mxu0 0.0
    %1350 = vmatprep.subr.mxu0 0.0
    %1351 = vmatpush1.msra.mxu0 0.0
    %1352 = vmatprep.subr.mxu0 0.0
    %1353 = vmatpush1.msra.mxu0 0.0
    %1354 = vmatprep.subr.mxu0 0.0
    %1355 = vmatpush1.msra.mxu0 0.0
    %1356 = vmatprep.subr.mxu0 0.0
    %1357 = vmatpush1.msra.mxu0 0.0
    %1358 = vmatprep.subr.mxu0 0.0
    %1359 = vmatpush1.msra.mxu0 0.0
    %1360 = vmatprep.subr.mxu0 0.0
    %1361 = vmatpush1.msra.mxu0 0.0
    %1362 = vmatprep.subr.mxu0 0.0
    %1363 = vmatpush1.msra.mxu0 0.0
    %1364 = vmatprep.subr.mxu0 0.0
    %1365 = vmatpush1.msra.mxu0 0.0
    %1366 = vmatprep.subr.mxu0 0.0
    %1367 = vmatpush1.msra.mxu0 0.0
    %1368 = vmatprep.subr.mxu0 0.0
    %1369 = vmatpush1.msra.mxu0 0.0
    %1370 = vmatprep.subr.mxu0 0.0
    %1371 = vmatpush1.msra.mxu0 0.0
    %1372 = vmatprep.subr.mxu0 0.0
    %1373 = vmatpush1.msra.mxu0 0.0
    %1374 = vmatprep.subr.mxu0 0.0
    %1375 = vmatpush1.msra.mxu0 0.0
    %1376 = vmatprep.subr.mxu0 0.0
    %1377 = vmatpush1.msra.mxu0 0.0
    %1378 = vmatprep.subr.mxu0 0.0
    %1379 = vmatpush1.msra.mxu0 0.0
    %1380 = vmatprep.subr.mxu0 0.0
    %1381 = vmatpush1.msra.mxu0 0.0
    %1382 = vmatprep.subr.mxu0 0.0
    %1383 = vmatpush1.msra.mxu0 0.0
    %1384 = vmatprep.subr.mxu0 0.0
    %1385 = vmatpush1.msra.mxu0 0.0
    %1386 = vmatprep.subr.mxu0 0.0
    %1387 = vmatpush1.msra.mxu0 0.0
    %1388 = vmatprep.subr.mxu0 0.0
    %1389 = vmatpush1.msra.mxu0 0.0
    %1390 = vmatprep.subr.mxu0 0.0
    %1391 = vmatpush1.msra.mxu0 0.0
    %1392 = vmatprep.subr.mxu0 0.0
    %1393 = vmatpush1.msra.mxu0 0.0
    %1394 = vmatprep.subr.mxu0 0.0
    %1395 = vmatpush1.msra.mxu0 0.0
    %1396 = vmatprep.subr.mxu0 0.0
    %1397 = vmatpush1.msra.mxu0 0.0
    %1398 = vmatprep.subr.mxu0 0.0
    %1399 = vmatpush1.msra.mxu0 0.0
    %1400 = vmatprep.mubr.f32.mxu0 0.0
    %1401 = vmatmul.mubr.f32.gmra.mrb[0].mxu0 %v1264
    %v1402 = vpop.f32.mrb[0].mxu0
    %v1403 = vadd.f32 %v1333, %v1402
    %v1404 = vpop.f32.mrb[0].mxu0
    %1405 = vdwg.mxu0
    %s1406 = scalar_lea.vmem [#allocation2], 14
    %1407 = vst.msk [vmem:[%s1406] sm:$0x3] %vm251, %v1403
    %v1408 = vld [vmem:[%s1] sm:$0x3]
    %v1409 = vld [vmem:[%s5] sm:$0xff]
    %v1410 = vld [vmem:[%s5 + $0x8] sm:$0xff]
    %v1411 = vld [vmem:[%s6] sm:$0xff]
    %v1412 = vld [vmem:[%s6 + $0x8] sm:$0xff]
    %v1413 = vld [vmem:[%s8] sm:$0x1]
    %v1415 = vlaneseq
    %v1416 = vshrl.u32 %v1415, 7
    %v1417 = vsub.s32 0, %v1416
    %v1418 = vrot.slane %v1413, %v1417
    %v1419 = vld [vmem:[%s9] sm:$0x1]
    %v1421 = vlaneseq
    %v1422 = vshrl.u32 %v1421, 7
    %v1423 = vsub.s32 0, %v1422
    %v1424 = vrot.slane %v1419, %v1423
    %v1425 = vld [vmem:[#allocation2] sm:$0x3]
    %v1426 = vld [vmem:[%s1406] sm:$0x3]
    %vm1427 = vcmask 130048
    %v1429 = vsel %vm1427, 0.0, 0
    %1431 = vmatprep.subr.mxu0 0.0
    %1432 = vmatpush1.msra.mxu0 %v1409
    %1433 = vmatprep.subr.mxu0 0.0
    %1434 = vmatpush1.msra.mxu0 %v1410
    %1435 = vmatprep.subr.mxu0 0.0
    %1436 = vmatpush1.msra.mxu0 0.0
    %1437 = vmatprep.subr.mxu0 0.0
    %1438 = vmatpush1.msra.mxu0 0.0
    %1439 = vmatprep.subr.mxu0 0.0
    %1440 = vmatpush1.msra.mxu0 0.0
    %1441 = vmatprep.subr.mxu0 0.0
    %1442 = vmatpush1.msra.mxu0 0.0
    %1443 = vmatprep.subr.mxu0 0.0
    %1444 = vmatpush1.msra.mxu0 0.0
    %1445 = vmatprep.subr.mxu0 0.0
    %1446 = vmatpush1.msra.mxu0 0.0
    %1447 = vmatprep.subr.mxu0 0.0
    %1448 = vmatpush1.msra.mxu0 0.0
    %1449 = vmatprep.subr.mxu0 0.0
    %1450 = vmatpush1.msra.mxu0 0.0
    %1451 = vmatprep.subr.mxu0 0.0
    %1452 = vmatpush1.msra.mxu0 0.0
    %1453 = vmatprep.subr.mxu0 0.0
    %1454 = vmatpush1.msra.mxu0 0.0
    %1455 = vmatprep.subr.mxu0 0.0
    %1456 = vmatpush1.msra.mxu0 0.0
    %1457 = vmatprep.subr.mxu0 0.0
    %1458 = vmatpush1.msra.mxu0 0.0
    %1459 = vmatprep.subr.mxu0 0.0
    %1460 = vmatpush1.msra.mxu0 0.0
    %1461 = vmatprep.subr.mxu0 0.0
    %1462 = vmatpush1.msra.mxu0 0.0
    %1463 = vmatprep.subr.mxu0 0.0
    %1464 = vmatpush1.msra.mxu0 0.0
    %1465 = vmatprep.subr.mxu0 0.0
    %1466 = vmatpush1.msra.mxu0 0.0
    %1467 = vmatprep.subr.mxu0 0.0
    %1468 = vmatpush1.msra.mxu0 0.0
    %1469 = vmatprep.subr.mxu0 0.0
    %1470 = vmatpush1.msra.mxu0 0.0
    %1471 = vmatprep.subr.mxu0 0.0
    %1472 = vmatpush1.msra.mxu0 0.0
    %1473 = vmatprep.subr.mxu0 0.0
    %1474 = vmatpush1.msra.mxu0 0.0
    %1475 = vmatprep.subr.mxu0 0.0
    %1476 = vmatpush1.msra.mxu0 0.0
    %1477 = vmatprep.subr.mxu0 0.0
    %1478 = vmatpush1.msra.mxu0 0.0
    %1479 = vmatprep.subr.mxu0 0.0
    %1480 = vmatpush1.msra.mxu0 0.0
    %1481 = vmatprep.subr.mxu0 0.0
    %1482 = vmatpush1.msra.mxu0 0.0
    %1483 = vmatprep.subr.mxu0 0.0
    %1484 = vmatpush1.msra.mxu0 0.0
    %1485 = vmatprep.subr.mxu0 0.0
    %1486 = vmatpush1.msra.mxu0 0.0
    %1487 = vmatprep.subr.mxu0 0.0
    %1488 = vmatpush1.msra.mxu0 0.0
    %1489 = vmatprep.subr.mxu0 0.0
    %1490 = vmatpush1.msra.mxu0 0.0
    %1491 = vmatprep.subr.mxu0 0.0
    %1492 = vmatpush1.msra.mxu0 0.0
    %1493 = vmatprep.subr.mxu0 0.0
    %1494 = vmatpush1.msra.mxu0 0.0
    %1495 = vmatprep.mubr.f32.mxu0 0.0
    %1496 = vmatmul.mubr.f32.gmra.mrb[0].mxu0 %v1429
    %v1497 = vpop.f32.mrb[0].mxu0
    %v1498 = vadd.f32 0.0, %v1497
    %v1499 = vpop.f32.mrb[0].mxu0
    %1500 = vdwg.mxu0
    %v1501 = vadd.f32 %v1425, %v1498
    %v1502 = vxor.u32 %v1501, 2147483648
    %v1503 = vmul.f32 %v1502, 1.442695
    %v1504 = vpow.pop %v1503
    %v1505 = vadd.f32 %v1504, 1.0
    %v1506 = vrcp.pop %v1505
    %v1507 = vmul.f32 1.0, %v1506
    %1508 = vrot.lane.b32.xlu0 %v1418, 32
    %v1509 = vpop.permute.xlu0 %1508
    %v1511 = vadd.f32 %v1498, %v1509
    %1513 = vrot.lane.b32.xlu0 %v1511, 96
    %v1514 = vpop.permute.xlu0 %1513
    %v1516 = vmul.f32 %v1507, %v1514
    %1518 = vrot.lane.b32.xlu0 %v1516, 32
    %v1519 = vpop.permute.xlu0 %1518
    %v1521 = vadd.f32 %v1425, %v1519
    %v1522 = vtanh.pop %v1521
    %v1523 = vsub.f32 1.0, %v1507
    %1525 = vrot.lane.b32.xlu0 %v1522, 112
    %v1526 = vpop.permute.xlu0 %1525
    %v1528 = vmul.f32 %v1523, %v1526
    %v1529 = vmul.f32 %v1507, 0.0
    %v1530 = vadd.f32 %v1528, %v1529
    %1531 = vmatprep.subr.mxu0 0.0
    %1532 = vmatpush1.msra.mxu0 %v1411
    %1533 = vmatprep.subr.mxu0 0.0
    %1534 = vmatpush1.msra.mxu0 %v1412
    %1535 = vmatprep.subr.mxu0 0.0
    %1536 = vmatpush1.msra.mxu0 0.0
    %1537 = vmatprep.subr.mxu0 0.0
    %1538 = vmatpush1.msra.mxu0 0.0
    %1539 = vmatprep.subr.mxu0 0.0
    %1540 = vmatpush1.msra.mxu0 0.0
    %1541 = vmatprep.subr.mxu0 0.0
    %1542 = vmatpush1.msra.mxu0 0.0
    %1543 = vmatprep.subr.mxu0 0.0
    %1544 = vmatpush1.msra.mxu0 0.0
    %1545 = vmatprep.subr.mxu0 0.0
    %1546 = vmatpush1.msra.mxu0 0.0
    %1547 = vmatprep.subr.mxu0 0.0
    %1548 = vmatpush1.msra.mxu0 0.0
    %1549 = vmatprep.subr.mxu0 0.0
    %1550 = vmatpush1.msra.mxu0 0.0
    %1551 = vmatprep.subr.mxu0 0.0
    %1552 = vmatpush1.msra.mxu0 0.0
    %1553 = vmatprep.subr.mxu0 0.0
    %1554 = vmatpush1.msra.mxu0 0.0
    %1555 = vmatprep.subr.mxu0 0.0
    %1556 = vmatpush1.msra.mxu0 0.0
    %1557 = vmatprep.subr.mxu0 0.0
    %1558 = vmatpush1.msra.mxu0 0.0
    %1559 = vmatprep.subr.mxu0 0.0
    %1560 = vmatpush1.msra.mxu0 0.0
    %1561 = vmatprep.subr.mxu0 0.0
    %1562 = vmatpush1.msra.mxu0 0.0
    %1563 = vmatprep.subr.mxu0 0.0
    %1564 = vmatpush1.msra.mxu0 0.0
    %1565 = vmatprep.subr.mxu0 0.0
    %1566 = vmatpush1.msra.mxu0 0.0
    %1567 = vmatprep.subr.mxu0 0.0
    %1568 = vmatpush1.msra.mxu0 0.0
    %1569 = vmatprep.subr.mxu0 0.0
    %1570 = vmatpush1.msra.mxu0 0.0
    %1571 = vmatprep.subr.mxu0 0.0
    %1572 = vmatpush1.msra.mxu0 0.0
    %1573 = vmatprep.subr.mxu0 0.0
    %1574 = vmatpush1.msra.mxu0 0.0
    %1575 = vmatprep.subr.mxu0 0.0
    %1576 = vmatpush1.msra.mxu0 0.0
    %1577 = vmatprep.subr.mxu0 0.0
    %1578 = vmatpush1.msra.mxu0 0.0
    %1579 = vmatprep.subr.mxu0 0.0
    %1580 = vmatpush1.msra.mxu0 0.0
    %1581 = vmatprep.subr.mxu0 0.0
    %1582 = vmatpush1.msra.mxu0 0.0
    %1583 = vmatprep.subr.mxu0 0.0
    %1584 = vmatpush1.msra.mxu0 0.0
    %1585 = vmatprep.subr.mxu0 0.0
    %1586 = vmatpush1.msra.mxu0 0.0
    %1587 = vmatprep.subr.mxu0 0.0
    %1588 = vmatpush1.msra.mxu0 0.0
    %1589 = vmatprep.subr.mxu0 0.0
    %1590 = vmatpush1.msra.mxu0 0.0
    %1591 = vmatprep.subr.mxu0 0.0
    %1592 = vmatpush1.msra.mxu0 0.0
    %1593 = vmatprep.subr.mxu0 0.0
    %1594 = vmatpush1.msra.mxu0 0.0
    %1595 = vmatprep.mubr.f32.mxu0 0.0
    %1596 = vmatmul.mubr.f32.gmra.mrb[0].mxu0 %v1429
    %v1597 = vpop.f32.mrb[0].mxu0
    %v1598 = vadd.f32 0.0, %v1597
    %v1599 = vpop.f32.mrb[0].mxu0
    %1600 = vdwg.mxu0
    %1602 = vrot.lane.b32.xlu0 %v1598, 48
    %v1603 = vpop.permute.xlu0 %1602
    %v1605 = vadd.f32 %v1426, %v1603
    %v1606 = vxor.u32 %v1605, 2147483648
    %v1607 = vmul.f32 %v1606, 1.442695
    %v1608 = vpow.pop %v1607
    %v1609 = vadd.f32 %v1608, 1.0
    %v1610 = vrcp.pop %v1609
    %v1611 = vmul.f32 1.0, %v1610
    %1612 = vrot.lane.b32.xlu0 %v1424, 32
    %v1613 = vpop.permute.xlu0 %1612
    %v1615 = vadd.f32 %v1598, %v1613
    %1617 = vrot.lane.b32.xlu0 %v1615, 16
    %v1618 = vpop.permute.xlu0 %1617
    %v1620 = vmul.f32 %v1611, %v1618
    %1622 = vrot.lane.b32.xlu0 %v1620, 32
    %v1623 = vpop.permute.xlu0 %1622
    %v1625 = vadd.f32 %v1426, %v1623
    %v1626 = vtanh.pop %v1625
    %v1627 = vsub.f32 1.0, %v1611
    %1629 = vrot.lane.b32.xlu0 %v1626, 112
    %v1630 = vpop.permute.xlu0 %1629
    %v1632 = vmul.f32 %v1627, %v1630
    %v1633 = vmul.f32 %v1611, 0.0
    %v1634 = vadd.f32 %v1632, %v1633
    %vm1635 = vcmp.gt.s32.totalorder %v1408, 0
    %vm1636 = vcmp.gt.s32.totalorder %v1408, 7
    %v1637 = vsel %vm1635, 1, 0
    %1638 = vset.pattern.permute.xlu0 0
    %1639 = vperm.xlu0 %1638, %v1637
    %v1640 = vpop.permute.xlu0 %1639
    %vm1641 = vcmp.eq.s32.totalorder %v1640, 1
    %v1642 = vsel %vm1641, %v1530, 0.0
    %1644 = vrot.lane.b32.xlu0 %v1642, 112
    %v1645 = vpop.permute.xlu0 %1644
    %vm1647 = vcmask 123904
    %1648 = vst.msk [vmem:[#allocation5] sm:$0x3] %vm1647, %v1645
    %v1649 = vsel %vm1636, 1, 0
    %1650 = vset.pattern.permute.xlu0 0
    %1651 = vperm.xlu0 %1650, %v1649
    %v1652 = vpop.permute.xlu0 %1651
    %vm1653 = vcmp.eq.s32.totalorder %v1652, 1
    %v1654 = vsel %vm1653, %v1634, 0.0
    %1656 = vrot.lane.b32.xlu0 %v1654, 80
    %v1657 = vpop.permute.xlu0 %1656
    %s1659 = scalar_lea.vmem [#allocation5], 14
    %vm1660 = vcmask 255104
    %1661 = vst.msk [vmem:[%s1659] sm:$0x3] %vm1660, %v1657
    %v1662 = vld [vmem:[%s416] sm:$0x3]
    %v1663 = vld [vmem:[%s1241] sm:$0x3]
    %v1664 = vsel %vm1427, %v1645, 0
    %1666 = vmatprep.subr.mxu0 0.0
    %1667 = vmatpush1.msra.mxu0 %v1409
    %1668 = vmatprep.subr.mxu0 0.0
    %1669 = vmatpush1.msra.mxu0 %v1410
    %1670 = vmatprep.subr.mxu0 0.0
    %1671 = vmatpush1.msra.mxu0 0.0
    %1672 = vmatprep.subr.mxu0 0.0
    %1673 = vmatpush1.msra.mxu0 0.0
    %1674 = vmatprep.subr.mxu0 0.0
    %1675 = vmatpush1.msra.mxu0 0.0
    %1676 = vmatprep.subr.mxu0 0.0
    %1677 = vmatpush1.msra.mxu0 0.0
    %1678 = vmatprep.subr.mxu0 0.0
    %1679 = vmatpush1.msra.mxu0 0.0
    %1680 = vmatprep.subr.mxu0 0.0
    %1681 = vmatpush1.msra.mxu0 0.0
    %1682 = vmatprep.subr.mxu0 0.0
    %1683 = vmatpush1.msra.mxu0 0.0
    %1684 = vmatprep.subr.mxu0 0.0
    %1685 = vmatpush1.msra.mxu0 0.0
    %1686 = vmatprep.subr.mxu0 0.0
    %1687 = vmatpush1.msra.mxu0 0.0
    %1688 = vmatprep.subr.mxu0 0.0
    %1689 = vmatpush1.msra.mxu0 0.0
    %1690 = vmatprep.subr.mxu0 0.0
    %1691 = vmatpush1.msra.mxu0 0.0
    %1692 = vmatprep.subr.mxu0 0.0
    %1693 = vmatpush1.msra.mxu0 0.0
    %1694 = vmatprep.subr.mxu0 0.0
    %1695 = vmatpush1.msra.mxu0 0.0
    %1696 = vmatprep.subr.mxu0 0.0
    %1697 = vmatpush1.msra.mxu0 0.0
    %1698 = vmatprep.subr.mxu0 0.0
    %1699 = vmatpush1.msra.mxu0 0.0
    %1700 = vmatprep.subr.mxu0 0.0
    %1701 = vmatpush1.msra.mxu0 0.0
    %1702 = vmatprep.subr.mxu0 0.0
    %1703 = vmatpush1.msra.mxu0 0.0
    %1704 = vmatprep.subr.mxu0 0.0
    %1705 = vmatpush1.msra.mxu0 0.0
    %1706 = vmatprep.subr.mxu0 0.0
    %1707 = vmatpush1.msra.mxu0 0.0
    %1708 = vmatprep.subr.mxu0 0.0
    %1709 = vmatpush1.msra.mxu0 0.0
    %1710 = vmatprep.subr.mxu0 0.0
    %1711 = vmatpush1.msra.mxu0 0.0
    %1712 = vmatprep.subr.mxu0 0.0
    %1713 = vmatpush1.msra.mxu0 0.0
    %1714 = vmatprep.subr.mxu0 0.0
    %1715 = vmatpush1.msra.mxu0 0.0
    %1716 = vmatprep.subr.mxu0 0.0
    %1717 = vmatpush1.msra.mxu0 0.0
    %1718 = vmatprep.subr.mxu0 0.0
    %1719 = vmatpush1.msra.mxu0 0.0
    %1720 = vmatprep.subr.mxu0 0.0
    %1721 = vmatpush1.msra.mxu0 0.0
    %1722 = vmatprep.subr.mxu0 0.0
    %1723 = vmatpush1.msra.mxu0 0.0
    %1724 = vmatprep.subr.mxu0 0.0
    %1725 = vmatpush1.msra.mxu0 0.0
    %1726 = vmatprep.subr.mxu0 0.0
    %1727 = vmatpush1.msra.mxu0 0.0
    %1728 = vmatprep.subr.mxu0 0.0
    %1729 = vmatpush1.msra.mxu0 0.0
    %1730 = vmatprep.mubr.f32.mxu0 0.0
    %1731 = vmatmul.mubr.f32.gmra.mrb[0].mxu0 %v1664
    %v1732 = vpop.f32.mrb[0].mxu0
    %v1733 = vadd.f32 0.0, %v1732
    %v1734 = vpop.f32.mrb[0].mxu0
    %1735 = vdwg.mxu0
    %v1736 = vadd.f32 %v1662, %v1733
    %v1737 = vxor.u32 %v1736, 2147483648
    %v1738 = vmul.f32 %v1737, 1.442695
    %v1739 = vpow.pop %v1738
    %v1740 = vadd.f32 %v1739, 1.0
    %v1741 = vrcp.pop %v1740
    %v1742 = vmul.f32 1.0, %v1741
    %v1743 = vadd.f32 %v1733, %v1509
    %1745 = vrot.lane.b32.xlu0 %v1743, 96
    %v1746 = vpop.permute.xlu0 %1745
    %v1748 = vmul.f32 %v1742, %v1746
    %1750 = vrot.lane.b32.xlu0 %v1748, 32
    %v1751 = vpop.permute.xlu0 %1750
    %v1753 = vadd.f32 %v1662, %v1751
    %v1754 = vtanh.pop %v1753
    %v1755 = vsub.f32 1.0, %v1742
    %1757 = vrot.lane.b32.xlu0 %v1754, 112
    %v1758 = vpop.permute.xlu0 %1757
    %v1760 = vmul.f32 %v1755, %v1758
    %v1761 = vmul.f32 %v1742, %v1642
    %v1762 = vadd.f32 %v1760, %v1761
    %1763 = vrot.lane.b32.xlu0 %v1654, 64
    %v1764 = vpop.permute.xlu0 %1763
    %v1765 = vsel %vm1427, %v1764, 0
    %1767 = vmatprep.subr.mxu0 0.0
    %1768 = vmatpush1.msra.mxu0 %v1411
    %1769 = vmatprep.subr.mxu0 0.0
    %1770 = vmatpush1.msra.mxu0 %v1412
    %1771 = vmatprep.subr.mxu0 0.0
    %1772 = vmatpush1.msra.mxu0 0.0
    %1773 = vmatprep.subr.mxu0 0.0
    %1774 = vmatpush1.msra.mxu0 0.0
    %1775 = vmatprep.subr.mxu0 0.0
    %1776 = vmatpush1.msra.mxu0 0.0
    %1777 = vmatprep.subr.mxu0 0.0
    %1778 = vmatpush1.msra.mxu0 0.0
    %1779 = vmatprep.subr.mxu0 0.0
    %1780 = vmatpush1.msra.mxu0 0.0
    %1781 = vmatprep.subr.mxu0 0.0
    %1782 = vmatpush1.msra.mxu0 0.0
    %1783 = vmatprep.subr.mxu0 0.0
    %1784 = vmatpush1.msra.mxu0 0.0
    %1785 = vmatprep.subr.mxu0 0.0
    %1786 = vmatpush1.msra.mxu0 0.0
    %1787 = vmatprep.subr.mxu0 0.0
    %1788 = vmatpush1.msra.mxu0 0.0
    %1789 = vmatprep.subr.mxu0 0.0
    %1790 = vmatpush1.msra.mxu0 0.0
    %1791 = vmatprep.subr.mxu0 0.0
    %1792 = vmatpush1.msra.mxu0 0.0
    %1793 = vmatprep.subr.mxu0 0.0
    %1794 = vmatpush1.msra.mxu0 0.0
    %1795 = vmatprep.subr.mxu0 0.0
    %1796 = vmatpush1.msra.mxu0 0.0
    %1797 = vmatprep.subr.mxu0 0.0
    %1798 = vmatpush1.msra.mxu0 0.0
    %1799 = vmatprep.subr.mxu0 0.0
    %1800 = vmatpush1.msra.mxu0 0.0
    %1801 = vmatprep.subr.mxu0 0.0
    %1802 = vmatpush1.msra.mxu0 0.0
    %1803 = vmatprep.subr.mxu0 0.0
    %1804 = vmatpush1.msra.mxu0 0.0
    %1805 = vmatprep.subr.mxu0 0.0
    %1806 = vmatpush1.msra.mxu0 0.0
    %1807 = vmatprep.subr.mxu0 0.0
    %1808 = vmatpush1.msra.mxu0 0.0
    %1809 = vmatprep.subr.mxu0 0.0
    %1810 = vmatpush1.msra.mxu0 0.0
    %1811 = vmatprep.subr.mxu0 0.0
    %1812 = vmatpush1.msra.mxu0 0.0
    %1813 = vmatprep.subr.mxu0 0.0
    %1814 = vmatpush1.msra.mxu0 0.0
    %1815 = vmatprep.subr.mxu0 0.0
    %1816 = vmatpush1.msra.mxu0 0.0
    %1817 = vmatprep.subr.mxu0 0.0
    %1818 = vmatpush1.msra.mxu0 0.0
    %1819 = vmatprep.subr.mxu0 0.0
    %1820 = vmatpush1.msra.mxu0 0.0
    %1821 = vmatprep.subr.mxu0 0.0
    %1822 = vmatpush1.msra.mxu0 0.0
    %1823 = vmatprep.subr.mxu0 0.0
    %1824 = vmatpush1.msra.mxu0 0.0
    %1825 = vmatprep.subr.mxu0 0.0
    %1826 = vmatpush1.msra.mxu0 0.0
    %1827 = vmatprep.subr.mxu0 0.0
    %1828 = vmatpush1.msra.mxu0 0.0
    %1829 = vmatprep.subr.mxu0 0.0
    %1830 = vmatpush1.msra.mxu0 0.0
    %1831 = vmatprep.mubr.f32.mxu0 0.0
    %1832 = vmatmul.mubr.f32.gmra.mrb[0].mxu0 %v1765
    %v1833 = vpop.f32.mrb[0].mxu0
    %v1834 = vadd.f32 0.0, %v1833
    %v1835 = vpop.f32.mrb[0].mxu0
    %1836 = vdwg.mxu0
    %1838 = vrot.lane.b32.xlu0 %v1834, 48
    %v1839 = vpop.permute.xlu0 %1838
    %v1841 = vadd.f32 %v1663, %v1839
    %v1842 = vxor.u32 %v1841, 2147483648
    %v1843 = vmul.f32 %v1842, 1.442695
    %v1844 = vpow.pop %v1843
    %v1845 = vadd.f32 %v1844, 1.0
    %v1846 = vrcp.pop %v1845
    %v1847 = vmul.f32 1.0, %v1846
    %v1848 = vadd.f32 %v1834, %v1613
    %1850 = vrot.lane.b32.xlu0 %v1848, 16
    %v1851 = vpop.permute.xlu0 %1850
    %v1853 = vmul.f32 %v1847, %v1851
    %1855 = vrot.lane.b32.xlu0 %v1853, 32
    %v1856 = vpop.permute.xlu0 %1855
    %v1858 = vadd.f32 %v1663, %v1856
    %v1859 = vtanh.pop %v1858
    %v1860 = vsub.f32 1.0, %v1847
    %1862 = vrot.lane.b32.xlu0 %v1859, 112
    %v1863 = vpop.permute.xlu0 %1862
    %v1865 = vmul.f32 %v1860, %v1863
    %v1866 = vmul.f32 %v1847, %v1654
    %v1867 = vadd.f32 %v1865, %v1866
    %vm1868 = vcmp.gt.s32.totalorder %v1408, 1
    %vm1869 = vcmp.gt.s32.totalorder %v1408, 6
    %v1870 = vsel %vm1868, 1, 0
    %1871 = vset.pattern.permute.xlu0 0
    %1872 = vperm.xlu0 %1871, %v1870
    %v1873 = vpop.permute.xlu0 %1872
    %vm1874 = vcmp.eq.s32.totalorder %v1873, 1
    %v1875 = vsel %vm1874, %v1762, 0.0
    %1877 = vrot.lane.b32.xlu0 %v1875, 112
    %v1878 = vpop.permute.xlu0 %1877
    %s1880 = scalar_lea.vmem [#allocation5], 2
    %1881 = vst.msk [vmem:[%s1880] sm:$0x3] %vm1647, %v1878
    %v1882 = vsel %vm1869, 1, 0
    %1883 = vset.pattern.permute.xlu0 0
    %1884 = vperm.xlu0 %1883, %v1882
    %v1885 = vpop.permute.xlu0 %1884
    %vm1886 = vcmp.eq.s32.totalorder %v1885, 1
    %v1887 = vsel %vm1886, %v1867, 0.0
    %1889 = vrot.lane.b32.xlu0 %v1887, 80
    %v1890 = vpop.permute.xlu0 %1889
    %s1892 = scalar_lea.vmem [#allocation5], 12
    %1893 = vst.msk [vmem:[%s1892] sm:$0x3] %vm1660, %v1890
    %v1894 = vsel %vm1874, %v1762, %v1642
    %v1895 = vsel %vm1886, %v1867, %v1654
    %v1896 = vld [vmem:[%s581] sm:$0x3]
    %v1897 = vld [vmem:[%s1076] sm:$0x3]
    %1899 = vrot.lane.b32.xlu0 %v1894, 112
    %v1900 = vpop.permute.xlu0 %1899
    %v1901 = vsel %vm1427, %v1900, 0
    %1903 = vmatprep.subr.mxu0 0.0
    %1904 = vmatpush1.msra.mxu0 %v1409
    %1905 = vmatprep.subr.mxu0 0.0
    %1906 = vmatpush1.msra.mxu0 %v1410
    %1907 = vmatprep.subr.mxu0 0.0
    %1908 = vmatpush1.msra.mxu0 0.0
    %1909 = vmatprep.subr.mxu0 0.0
    %1910 = vmatpush1.msra.mxu0 0.0
    %1911 = vmatprep.subr.mxu0 0.0
    %1912 = vmatpush1.msra.mxu0 0.0
    %1913 = vmatprep.subr.mxu0 0.0
    %1914 = vmatpush1.msra.mxu0 0.0
    %1915 = vmatprep.subr.mxu0 0.0
    %1916 = vmatpush1.msra.mxu0 0.0
    %1917 = vmatprep.subr.mxu0 0.0
    %1918 = vmatpush1.msra.mxu0 0.0
    %1919 = vmatprep.subr.mxu0 0.0
    %1920 = vmatpush1.msra.mxu0 0.0
    %1921 = vmatprep.subr.mxu0 0.0
    %1922 = vmatpush1.msra.mxu0 0.0
    %1923 = vmatprep.subr.mxu0 0.0
    %1924 = vmatpush1.msra.mxu0 0.0
    %1925 = vmatprep.subr.mxu0 0.0
    %1926 = vmatpush1.msra.mxu0 0.0
    %1927 = vmatprep.subr.mxu0 0.0
    %1928 = vmatpush1.msra.mxu0 0.0
    %1929 = vmatprep.subr.mxu0 0.0
    %1930 = vmatpush1.msra.mxu0 0.0
    %1931 = vmatprep.subr.mxu0 0.0
    %1932 = vmatpush1.msra.mxu0 0.0
    %1933 = vmatprep.subr.mxu0 0.0
    %1934 = vmatpush1.msra.mxu0 0.0
    %1935 = vmatprep.subr.mxu0 0.0
    %1936 = vmatpush1.msra.mxu0 0.0
    %1937 = vmatprep.subr.mxu0 0.0
    %1938 = vmatpush1.msra.mxu0 0.0
    %1939 = vmatprep.subr.mxu0 0.0
    %1940 = vmatpush1.msra.mxu0 0.0
    %1941 = vmatprep.subr.mxu0 0.0
    %1942 = vmatpush1.msra.mxu0 0.0
    %1943 = vmatprep.subr.mxu0 0.0
    %1944 = vmatpush1.msra.mxu0 0.0
    %1945 = vmatprep.subr.mxu0 0.0
    %1946 = vmatpush1.msra.mxu0 0.0
    %1947 = vmatprep.subr.mxu0 0.0
    %1948 = vmatpush1.msra.mxu0 0.0
    %1949 = vmatprep.subr.mxu0 0.0
    %1950 = vmatpush1.msra.mxu0 0.0
    %1951 = vmatprep.subr.mxu0 0.0
    %1952 = vmatpush1.msra.mxu0 0.0
    %1953 = vmatprep.subr.mxu0 0.0
    %1954 = vmatpush1.msra.mxu0 0.0
    %1955 = vmatprep.subr.mxu0 0.0
    %1956 = vmatpush1.msra.mxu0 0.0
    %1957 = vmatprep.subr.mxu0 0.0
    %1958 = vmatpush1.msra.mxu0 0.0
    %1959 = vmatprep.subr.mxu0 0.0
    %1960 = vmatpush1.msra.mxu0 0.0
    %1961 = vmatprep.subr.mxu0 0.0
    %1962 = vmatpush1.msra.mxu0 0.0
    %1963 = vmatprep.subr.mxu0 0.0
    %1964 = vmatpush1.msra.mxu0 0.0
    %1965 = vmatprep.subr.mxu0 0.0
    %1966 = vmatpush1.msra.mxu0 0.0
    %1967 = vmatprep.mubr.f32.mxu0 0.0
    %1968 = vmatmul.mubr.f32.gmra.mrb[0].mxu0 %v1901
    %v1969 = vpop.f32.mrb[0].mxu0
    %v1970 = vadd.f32 0.0, %v1969
    %v1971 = vpop.f32.mrb[0].mxu0
    %1972 = vdwg.mxu0
    %v1973 = vadd.f32 %v1896, %v1970
    %v1974 = vxor.u32 %v1973, 2147483648
    %v1975 = vmul.f32 %v1974, 1.442695
    %v1976 = vpow.pop %v1975
    %v1977 = vadd.f32 %v1976, 1.0
    %v1978 = vrcp.pop %v1977
    %v1979 = vmul.f32 1.0, %v1978
    %v1980 = vadd.f32 %v1970, %v1509
    %1982 = vrot.lane.b32.xlu0 %v1980, 96
    %v1983 = vpop.permute.xlu0 %1982
    %v1985 = vmul.f32 %v1979, %v1983
    %1987 = vrot.lane.b32.xlu0 %v1985, 32
    %v1988 = vpop.permute.xlu0 %1987
    %v1990 = vadd.f32 %v1896, %v1988
    %v1991 = vtanh.pop %v1990
    %v1992 = vsub.f32 1.0, %v1979
    %1994 = vrot.lane.b32.xlu0 %v1991, 112
    %v1995 = vpop.permute.xlu0 %1994
    %v1997 = vmul.f32 %v1992, %v1995
    %v1998 = vmul.f32 %v1979, %v1894
    %v1999 = vadd.f32 %v1997, %v1998
    %2001 = vrot.lane.b32.xlu0 %v1895, 64
    %v2002 = vpop.permute.xlu0 %2001
    %v2003 = vsel %vm1427, %v2002, 0
    %2005 = vmatprep.subr.mxu0 0.0
    %2006 = vmatpush1.msra.mxu0 %v1411
    %2007 = vmatprep.subr.mxu0 0.0
    %2008 = vmatpush1.msra.mxu0 %v1412
    %2009 = vmatprep.subr.mxu0 0.0
    %2010 = vmatpush1.msra.mxu0 0.0
    %2011 = vmatprep.subr.mxu0 0.0
    %2012 = vmatpush1.msra.mxu0 0.0
    %2013 = vmatprep.subr.mxu0 0.0
    %2014 = vmatpush1.msra.mxu0 0.0
    %2015 = vmatprep.subr.mxu0 0.0
    %2016 = vmatpush1.msra.mxu0 0.0
    %2017 = vmatprep.subr.mxu0 0.0
    %2018 = vmatpush1.msra.mxu0 0.0
    %2019 = vmatprep.subr.mxu0 0.0
    %2020 = vmatpush1.msra.mxu0 0.0
    %2021 = vmatprep.subr.mxu0 0.0
    %2022 = vmatpush1.msra.mxu0 0.0
    %2023 = vmatprep.subr.mxu0 0.0
    %2024 = vmatpush1.msra.mxu0 0.0
    %2025 = vmatprep.subr.mxu0 0.0
    %2026 = vmatpush1.msra.mxu0 0.0
    %2027 = vmatprep.subr.mxu0 0.0
    %2028 = vmatpush1.msra.mxu0 0.0
    %2029 = vmatprep.subr.mxu0 0.0
    %2030 = vmatpush1.msra.mxu0 0.0
    %2031 = vmatprep.subr.mxu0 0.0
    %2032 = vmatpush1.msra.mxu0 0.0
    %2033 = vmatprep.subr.mxu0 0.0
    %2034 = vmatpush1.msra.mxu0 0.0
    %2035 = vmatprep.subr.mxu0 0.0
    %2036 = vmatpush1.msra.mxu0 0.0
    %2037 = vmatprep.subr.mxu0 0.0
    %2038 = vmatpush1.msra.mxu0 0.0
    %2039 = vmatprep.subr.mxu0 0.0
    %2040 = vmatpush1.msra.mxu0 0.0
    %2041 = vmatprep.subr.mxu0 0.0
    %2042 = vmatpush1.msra.mxu0 0.0
    %2043 = vmatprep.subr.mxu0 0.0
    %2044 = vmatpush1.msra.mxu0 0.0
    %2045 = vmatprep.subr.mxu0 0.0
    %2046 = vmatpush1.msra.mxu0 0.0
    %2047 = vmatprep.subr.mxu0 0.0
    %2048 = vmatpush1.msra.mxu0 0.0
    %2049 = vmatprep.subr.mxu0 0.0
    %2050 = vmatpush1.msra.mxu0 0.0
    %2051 = vmatprep.subr.mxu0 0.0
    %2052 = vmatpush1.msra.mxu0 0.0
    %2053 = vmatprep.subr.mxu0 0.0
    %2054 = vmatpush1.msra.mxu0 0.0
    %2055 = vmatprep.subr.mxu0 0.0
    %2056 = vmatpush1.msra.mxu0 0.0
    %2057 = vmatprep.subr.mxu0 0.0
    %2058 = vmatpush1.msra.mxu0 0.0
    %2059 = vmatprep.subr.mxu0 0.0
    %2060 = vmatpush1.msra.mxu0 0.0
    %2061 = vmatprep.subr.mxu0 0.0
    %2062 = vmatpush1.msra.mxu0 0.0
    %2063 = vmatprep.subr.mxu0 0.0
    %2064 = vmatpush1.msra.mxu0 0.0
    %2065 = vmatprep.subr.mxu0 0.0
    %2066 = vmatpush1.msra.mxu0 0.0
    %2067 = vmatprep.subr.mxu0 0.0
    %2068 = vmatpush1.msra.mxu0 0.0
    %2069 = vmatprep.mubr.f32.mxu0 0.0
    %2070 = vmatmul.mubr.f32.gmra.mrb[0].mxu0 %v2003
    %v2071 = vpop.f32.mrb[0].mxu0
    %v2072 = vadd.f32 0.0, %v2071
    %v2073 = vpop.f32.mrb[0].mxu0
    %2074 = vdwg.mxu0
    %2076 = vrot.lane.b32.xlu0 %v2072, 48
    %v2077 = vpop.permute.xlu0 %2076
    %v2079 = vadd.f32 %v1897, %v2077
    %v2080 = vxor.u32 %v2079, 2147483648
    %v2081 = vmul.f32 %v2080, 1.442695
    %v2082 = vpow.pop %v2081
    %v2083 = vadd.f32 %v2082, 1.0
    %v2084 = vrcp.pop %v2083
    %v2085 = vmul.f32 1.0, %v2084
    %v2086 = vadd.f32 %v2072, %v1613
    %2088 = vrot.lane.b32.xlu0 %v2086, 16
    %v2089 = vpop.permute.xlu0 %2088
    %v2091 = vmul.f32 %v2085, %v2089
    %2093 = vrot.lane.b32.xlu0 %v2091, 32
    %v2094 = vpop.permute.xlu0 %2093
    %v2096 = vadd.f32 %v1897, %v2094
    %v2097 = vtanh.pop %v2096
    %v2098 = vsub.f32 1.0, %v2085
    %2100 = vrot.lane.b32.xlu0 %v2097, 112
    %v2101 = vpop.permute.xlu0 %2100
    %v2103 = vmul.f32 %v2098, %v2101
    %v2104 = vmul.f32 %v2085, %v1895
    %v2105 = vadd.f32 %v2103, %v2104
    %vm2106 = vcmp.gt.s32.totalorder %v1408, 2
    %vm2107 = vcmp.gt.s32.totalorder %v1408, 5
    %v2108 = vsel %vm2106, 1, 0
    %2109 = vset.pattern.permute.xlu0 0
    %2110 = vperm.xlu0 %2109, %v2108
    %v2111 = vpop.permute.xlu0 %2110
    %vm2112 = vcmp.eq.s32.totalorder %v2111, 1
    %v2113 = vsel %vm2112, %v1999, 0.0
    %2115 = vrot.lane.b32.xlu0 %v2113, 112
    %v2116 = vpop.permute.xlu0 %2115
    %s2118 = scalar_lea.vmem [#allocation5], 4
    %2119 = vst.msk [vmem:[%s2118] sm:$0x3] %vm1647, %v2116
    %v2120 = vsel %vm2107, 1, 0
    %2121 = vset.pattern.permute.xlu0 0
    %2122 = vperm.xlu0 %2121, %v2120
    %v2123 = vpop.permute.xlu0 %2122
    %vm2124 = vcmp.eq.s32.totalorder %v2123, 1
    %v2125 = vsel %vm2124, %v2105, 0.0
    %2127 = vrot.lane.b32.xlu0 %v2125, 80
    %v2128 = vpop.permute.xlu0 %2127
    %s2130 = scalar_lea.vmem [#allocation5], 10
    %2131 = vst.msk [vmem:[%s2130] sm:$0x3] %vm1660, %v2128
    %v2132 = vsel %vm2112, %v1999, %v1894
    %v2133 = vsel %vm2124, %v2105, %v1895
    %v2134 = vld [vmem:[%s746] sm:$0x3]
    %v2135 = vld [vmem:[%s911] sm:$0x3]
    %2137 = vrot.lane.b32.xlu0 %v2132, 112
    %v2138 = vpop.permute.xlu0 %2137
    %v2139 = vsel %vm1427, %v2138, 0
    %2141 = vmatprep.subr.mxu0 0.0
    %2142 = vmatpush1.msra.mxu0 %v1409
    %2143 = vmatprep.subr.mxu0 0.0
    %2144 = vmatpush1.msra.mxu0 %v1410
    %2145 = vmatprep.subr.mxu0 0.0
    %2146 = vmatpush1.msra.mxu0 0.0
    %2147 = vmatprep.subr.mxu0 0.0
    %2148 = vmatpush1.msra.mxu0 0.0
    %2149 = vmatprep.subr.mxu0 0.0
    %2150 = vmatpush1.msra.mxu0 0.0
    %2151 = vmatprep.subr.mxu0 0.0
    %2152 = vmatpush1.msra.mxu0 0.0
    %2153 = vmatprep.subr.mxu0 0.0
    %2154 = vmatpush1.msra.mxu0 0.0
    %2155 = vmatprep.subr.mxu0 0.0
    %2156 = vmatpush1.msra.mxu0 0.0
    %2157 = vmatprep.subr.mxu0 0.0
    %2158 = vmatpush1.msra.mxu0 0.0
    %2159 = vmatprep.subr.mxu0 0.0
    %2160 = vmatpush1.msra.mxu0 0.0
    %2161 = vmatprep.subr.mxu0 0.0
    %2162 = vmatpush1.msra.mxu0 0.0
    %2163 = vmatprep.subr.mxu0 0.0
    %2164 = vmatpush1.msra.mxu0 0.0
    %2165 = vmatprep.subr.mxu0 0.0
    %2166 = vmatpush1.msra.mxu0 0.0
    %2167 = vmatprep.subr.mxu0 0.0
    %2168 = vmatpush1.msra.mxu0 0.0
    %2169 = vmatprep.subr.mxu0 0.0
    %2170 = vmatpush1.msra.mxu0 0.0
    %2171 = vmatprep.subr.mxu0 0.0
    %2172 = vmatpush1.msra.mxu0 0.0
    %2173 = vmatprep.subr.mxu0 0.0
    %2174 = vmatpush1.msra.mxu0 0.0
    %2175 = vmatprep.subr.mxu0 0.0
    %2176 = vmatpush1.msra.mxu0 0.0
    %2177 = vmatprep.subr.mxu0 0.0
    %2178 = vmatpush1.msra.mxu0 0.0
    %2179 = vmatprep.subr.mxu0 0.0
    %2180 = vmatpush1.msra.mxu0 0.0
    %2181 = vmatprep.subr.mxu0 0.0
    %2182 = vmatpush1.msra.mxu0 0.0
    %2183 = vmatprep.subr.mxu0 0.0
    %2184 = vmatpush1.msra.mxu0 0.0
    %2185 = vmatprep.subr.mxu0 0.0
    %2186 = vmatpush1.msra.mxu0 0.0
    %2187 = vmatprep.subr.mxu0 0.0
    %2188 = vmatpush1.msra.mxu0 0.0
    %2189 = vmatprep.subr.mxu0 0.0
    %2190 = vmatpush1.msra.mxu0 0.0
    %2191 = vmatprep.subr.mxu0 0.0
    %2192 = vmatpush1.msra.mxu0 0.0
    %2193 = vmatprep.subr.mxu0 0.0
    %2194 = vmatpush1.msra.mxu0 0.0
    %2195 = vmatprep.subr.mxu0 0.0
    %2196 = vmatpush1.msra.mxu0 0.0
    %2197 = vmatprep.subr.mxu0 0.0
    %2198 = vmatpush1.msra.mxu0 0.0
    %2199 = vmatprep.subr.mxu0 0.0
    %2200 = vmatpush1.msra.mxu0 0.0
    %2201 = vmatprep.subr.mxu0 0.0
    %2202 = vmatpush1.msra.mxu0 0.0
    %2203 = vmatprep.subr.mxu0 0.0
    %2204 = vmatpush1.msra.mxu0 0.0
    %2205 = vmatprep.mubr.f32.mxu0 0.0
    %2206 = vmatmul.mubr.f32.gmra.mrb[0].mxu0 %v2139
    %v2207 = vpop.f32.mrb[0].mxu0
    %v2208 = vadd.f32 0.0, %v2207
    %v2209 = vpop.f32.mrb[0].mxu0
    %2210 = vdwg.mxu0
    %v2211 = vadd.f32 %v2134, %v2208
    %v2212 = vxor.u32 %v2211, 2147483648
    %v2213 = vmul.f32 %v2212, 1.442695
    %v2214 = vpow.pop %v2213
    %v2215 = vadd.f32 %v2214, 1.0
    %v2216 = vrcp.pop %v2215
    %v2217 = vmul.f32 1.0, %v2216
    %v2218 = vadd.f32 %v2208, %v1509
    %2220 = vrot.lane.b32.xlu0 %v2218, 96
    %v2221 = vpop.permute.xlu0 %2220
    %v2223 = vmul.f32 %v2217, %v2221
    %2225 = vrot.lane.b32.xlu0 %v2223, 32
    %v2226 = vpop.permute.xlu0 %2225
    %v2228 = vadd.f32 %v2134, %v2226
    %v2229 = vtanh.pop %v2228
    %v2230 = vsub.f32 1.0, %v2217
    %2232 = vrot.lane.b32.xlu0 %v2229, 112
    %v2233 = vpop.permute.xlu0 %2232
    %v2235 = vmul.f32 %v2230, %v2233
    %v2236 = vmul.f32 %v2217, %v2132
    %v2237 = vadd.f32 %v2235, %v2236
    %2239 = vrot.lane.b32.xlu0 %v2133, 64
    %v2240 = vpop.permute.xlu0 %2239
    %v2241 = vsel %vm1427, %v2240, 0
    %2243 = vmatprep.subr.mxu0 0.0
    %2244 = vmatpush1.msra.mxu0 %v1411
    %2245 = vmatprep.subr.mxu0 0.0
    %2246 = vmatpush1.msra.mxu0 %v1412
    %2247 = vmatprep.subr.mxu0 0.0
    %2248 = vmatpush1.msra.mxu0 0.0
    %2249 = vmatprep.subr.mxu0 0.0
    %2250 = vmatpush1.msra.mxu0 0.0
    %2251 = vmatprep.subr.mxu0 0.0
    %2252 = vmatpush1.msra.mxu0 0.0
    %2253 = vmatprep.subr.mxu0 0.0
    %2254 = vmatpush1.msra.mxu0 0.0
    %2255 = vmatprep.subr.mxu0 0.0
    %2256 = vmatpush1.msra.mxu0 0.0
    %2257 = vmatprep.subr.mxu0 0.0
    %2258 = vmatpush1.msra.mxu0 0.0
    %2259 = vmatprep.subr.mxu0 0.0
    %2260 = vmatpush1.msra.mxu0 0.0
    %2261 = vmatprep.subr.mxu0 0.0
    %2262 = vmatpush1.msra.mxu0 0.0
    %2263 = vmatprep.subr.mxu0 0.0
    %2264 = vmatpush1.msra.mxu0 0.0
    %2265 = vmatprep.subr.mxu0 0.0
    %2266 = vmatpush1.msra.mxu0 0.0
    %2267 = vmatprep.subr.mxu0 0.0
    %2268 = vmatpush1.msra.mxu0 0.0
    %2269 = vmatprep.subr.mxu0 0.0
    %2270 = vmatpush1.msra.mxu0 0.0
    %2271 = vmatprep.subr.mxu0 0.0
    %2272 = vmatpush1.msra.mxu0 0.0
    %2273 = vmatprep.subr.mxu0 0.0
    %2274 = vmatpush1.msra.mxu0 0.0
    %2275 = vmatprep.subr.mxu0 0.0
    %2276 = vmatpush1.msra.mxu0 0.0
    %2277 = vmatprep.subr.mxu0 0.0
    %2278 = vmatpush1.msra.mxu0 0.0
    %2279 = vmatprep.subr.mxu0 0.0
    %2280 = vmatpush1.msra.mxu0 0.0
    %2281 = vmatprep.subr.mxu0 0.0
    %2282 = vmatpush1.msra.mxu0 0.0
    %2283 = vmatprep.subr.mxu0 0.0
    %2284 = vmatpush1.msra.mxu0 0.0
    %2285 = vmatprep.subr.mxu0 0.0
    %2286 = vmatpush1.msra.mxu0 0.0
    %2287 = vmatprep.subr.mxu0 0.0
    %2288 = vmatpush1.msra.mxu0 0.0
    %2289 = vmatprep.subr.mxu0 0.0
    %2290 = vmatpush1.msra.mxu0 0.0
    %2291 = vmatprep.subr.mxu0 0.0
    %2292 = vmatpush1.msra.mxu0 0.0
    %2293 = vmatprep.subr.mxu0 0.0
    %2294 = vmatpush1.msra.mxu0 0.0
    %2295 = vmatprep.subr.mxu0 0.0
    %2296 = vmatpush1.msra.mxu0 0.0
    %2297 = vmatprep.subr.mxu0 0.0
    %2298 = vmatpush1.msra.mxu0 0.0
    %2299 = vmatprep.subr.mxu0 0.0
    %2300 = vmatpush1.msra.mxu0 0.0
    %2301 = vmatprep.subr.mxu0 0.0
    %2302 = vmatpush1.msra.mxu0 0.0
    %2303 = vmatprep.subr.mxu0 0.0
    %2304 = vmatpush1.msra.mxu0 0.0
    %2305 = vmatprep.subr.mxu0 0.0
    %2306 = vmatpush1.msra.mxu0 0.0
    %2307 = vmatprep.mubr.f32.mxu0 0.0
    %2308 = vmatmul.mubr.f32.gmra.mrb[0].mxu0 %v2241
    %v2309 = vpop.f32.mrb[0].mxu0
    %v2310 = vadd.f32 0.0, %v2309
    %v2311 = vpop.f32.mrb[0].mxu0
    %2312 = vdwg.mxu0
    %2314 = vrot.lane.b32.xlu0 %v2310, 48
    %v2315 = vpop.permute.xlu0 %2314
    %v2317 = vadd.f32 %v2135, %v2315
    %v2318 = vxor.u32 %v2317, 2147483648
    %v2319 = vmul.f32 %v2318, 1.442695
    %v2320 = vpow.pop %v2319
    %v2321 = vadd.f32 %v2320, 1.0
    %v2322 = vrcp.pop %v2321
    %v2323 = vmul.f32 1.0, %v2322
    %v2324 = vadd.f32 %v2310, %v1613
    %2326 = vrot.lane.b32.xlu0 %v2324, 16
    %v2327 = vpop.permute.xlu0 %2326
    %v2329 = vmul.f32 %v2323, %v2327
    %2331 = vrot.lane.b32.xlu0 %v2329, 32
    %v2332 = vpop.permute.xlu0 %2331
    %v2334 = vadd.f32 %v2135, %v2332
    %v2335 = vtanh.pop %v2334
    %v2336 = vsub.f32 1.0, %v2323
    %2338 = vrot.lane.b32.xlu0 %v2335, 112
    %v2339 = vpop.permute.xlu0 %2338
    %v2341 = vmul.f32 %v2336, %v2339
    %v2342 = vmul.f32 %v2323, %v2133
    %v2343 = vadd.f32 %v2341, %v2342
    %vm2344 = vcmp.gt.s32.totalorder %v1408, 3
    %vm2345 = vcmp.gt.s32.totalorder %v1408, 4
    %v2346 = vsel %vm2344, 1, 0
    %2347 = vset.pattern.permute.xlu0 0
    %2348 = vperm.xlu0 %2347, %v2346
    %v2349 = vpop.permute.xlu0 %2348
    %vm2350 = vcmp.eq.s32.totalorder %v2349, 1
    %v2351 = vsel %vm2350, %v2237, 0.0
    %2353 = vrot.lane.b32.xlu0 %v2351, 112
    %v2354 = vpop.permute.xlu0 %2353
    %s2356 = scalar_lea.vmem [#allocation5], 6
    %2357 = vst.msk [vmem:[%s2356] sm:$0x3] %vm1647, %v2354
    %v2358 = vsel %vm2345, 1, 0
    %2359 = vset.pattern.permute.xlu0 0
    %2360 = vperm.xlu0 %2359, %v2358
    %v2361 = vpop.permute.xlu0 %2360
    %vm2362 = vcmp.eq.s32.totalorder %v2361, 1
    %v2363 = vsel %vm2362, %v2343, 0.0
    %2365 = vrot.lane.b32.xlu0 %v2363, 80
    %v2366 = vpop.permute.xlu0 %2365
    %s2368 = scalar_lea.vmem [#allocation5], 8
    %2369 = vst.msk [vmem:[%s2368] sm:$0x3] %vm1660, %v2366
    %v2370 = vsel %vm2350, %v2237, %v2132
    %v2371 = vsel %vm2362, %v2343, %v2133
    %v2372 = vld [vmem:[%s911] sm:$0x3]
    %v2373 = vld [vmem:[%s746] sm:$0x3]
    %2375 = vrot.lane.b32.xlu0 %v2370, 112
    %v2376 = vpop.permute.xlu0 %2375
    %v2377 = vsel %vm1427, %v2376, 0
    %2379 = vmatprep.subr.mxu0 0.0
    %2380 = vmatpush1.msra.mxu0 %v1409
    %2381 = vmatprep.subr.mxu0 0.0
    %2382 = vmatpush1.msra.mxu0 %v1410
    %2383 = vmatprep.subr.mxu0 0.0
    %2384 = vmatpush1.msra.mxu0 0.0
    %2385 = vmatprep.subr.mxu0 0.0
    %2386 = vmatpush1.msra.mxu0 0.0
    %2387 = vmatprep.subr.mxu0 0.0
    %2388 = vmatpush1.msra.mxu0 0.0
    %2389 = vmatprep.subr.mxu0 0.0
    %2390 = vmatpush1.msra.mxu0 0.0
    %2391 = vmatprep.subr.mxu0 0.0
    %2392 = vmatpush1.msra.mxu0 0.0
    %2393 = vmatprep.subr.mxu0 0.0
    %2394 = vmatpush1.msra.mxu0 0.0
    %2395 = vmatprep.subr.mxu0 0.0
    %2396 = vmatpush1.msra.mxu0 0.0
    %2397 = vmatprep.subr.mxu0 0.0
    %2398 = vmatpush1.msra.mxu0 0.0
    %2399 = vmatprep.subr.mxu0 0.0
    %2400 = vmatpush1.msra.mxu0 0.0
    %2401 = vmatprep.subr.mxu0 0.0
    %2402 = vmatpush1.msra.mxu0 0.0
    %2403 = vmatprep.subr.mxu0 0.0
    %2404 = vmatpush1.msra.mxu0 0.0
    %2405 = vmatprep.subr.mxu0 0.0
    %2406 = vmatpush1.msra.mxu0 0.0
    %2407 = vmatprep.subr.mxu0 0.0
    %2408 = vmatpush1.msra.mxu0 0.0
    %2409 = vmatprep.subr.mxu0 0.0
    %2410 = vmatpush1.msra.mxu0 0.0
    %2411 = vmatprep.subr.mxu0 0.0
    %2412 = vmatpush1.msra.mxu0 0.0
    %2413 = vmatprep.subr.mxu0 0.0
    %2414 = vmatpush1.msra.mxu0 0.0
    %2415 = vmatprep.subr.mxu0 0.0
    %2416 = vmatpush1.msra.mxu0 0.0
    %2417 = vmatprep.subr.mxu0 0.0
    %2418 = vmatpush1.msra.mxu0 0.0
    %2419 = vmatprep.subr.mxu0 0.0
    %2420 = vmatpush1.msra.mxu0 0.0
    %2421 = vmatprep.subr.mxu0 0.0
    %2422 = vmatpush1.msra.mxu0 0.0
    %2423 = vmatprep.subr.mxu0 0.0
    %2424 = vmatpush1.msra.mxu0 0.0
    %2425 = vmatprep.subr.mxu0 0.0
    %2426 = vmatpush1.msra.mxu0 0.0
    %2427 = vmatprep.subr.mxu0 0.0
    %2428 = vmatpush1.msra.mxu0 0.0
    %2429 = vmatprep.subr.mxu0 0.0
    %2430 = vmatpush1.msra.mxu0 0.0
    %2431 = vmatprep.subr.mxu0 0.0
    %2432 = vmatpush1.msra.mxu0 0.0
    %2433 = vmatprep.subr.mxu0 0.0
    %2434 = vmatpush1.msra.mxu0 0.0
    %2435 = vmatprep.subr.mxu0 0.0
    %2436 = vmatpush1.msra.mxu0 0.0
    %2437 = vmatprep.subr.mxu0 0.0
    %2438 = vmatpush1.msra.mxu0 0.0
    %2439 = vmatprep.subr.mxu0 0.0
    %2440 = vmatpush1.msra.mxu0 0.0
    %2441 = vmatprep.subr.mxu0 0.0
    %2442 = vmatpush1.msra.mxu0 0.0
    %2443 = vmatprep.mubr.f32.mxu0 0.0
    %2444 = vmatmul.mubr.f32.gmra.mrb[0].mxu0 %v2377
    %v2445 = vpop.f32.mrb[0].mxu0
    %v2446 = vadd.f32 0.0, %v2445
    %v2447 = vpop.f32.mrb[0].mxu0
    %2448 = vdwg.mxu0
    %v2449 = vadd.f32 %v2372, %v2446
    %v2450 = vxor.u32 %v2449, 2147483648
    %v2451 = vmul.f32 %v2450, 1.442695
    %v2452 = vpow.pop %v2451
    %v2453 = vadd.f32 %v2452, 1.0
    %v2454 = vrcp.pop %v2453
    %v2455 = vmul.f32 1.0, %v2454
    %v2456 = vadd.f32 %v2446, %v1509
    %2458 = vrot.lane.b32.xlu0 %v2456, 96
    %v2459 = vpop.permute.xlu0 %2458
    %v2461 = vmul.f32 %v2455, %v2459
    %2463 = vrot.lane.b32.xlu0 %v2461, 32
    %v2464 = vpop.permute.xlu0 %2463
    %v2466 = vadd.f32 %v2372, %v2464
    %v2467 = vtanh.pop %v2466
    %v2468 = vsub.f32 1.0, %v2455
    %2470 = vrot.lane.b32.xlu0 %v2467, 112
    %v2471 = vpop.permute.xlu0 %2470
    %v2473 = vmul.f32 %v2468, %v2471
    %v2474 = vmul.f32 %v2455, %v2370
    %v2475 = vadd.f32 %v2473, %v2474
    %2477 = vrot.lane.b32.xlu0 %v2371, 64
    %v2478 = vpop.permute.xlu0 %2477
    %v2479 = vsel %vm1427, %v2478, 0
    %2481 = vmatprep.subr.mxu0 0.0
    %2482 = vmatpush1.msra.mxu0 %v1411
    %2483 = vmatprep.subr.mxu0 0.0
    %2484 = vmatpush1.msra.mxu0 %v1412
    %2485 = vmatprep.subr.mxu0 0.0
    %2486 = vmatpush1.msra.mxu0 0.0
    %2487 = vmatprep.subr.mxu0 0.0
    %2488 = vmatpush1.msra.mxu0 0.0
    %2489 = vmatprep.subr.mxu0 0.0
    %2490 = vmatpush1.msra.mxu0 0.0
    %2491 = vmatprep.subr.mxu0 0.0
    %2492 = vmatpush1.msra.mxu0 0.0
    %2493 = vmatprep.subr.mxu0 0.0
    %2494 = vmatpush1.msra.mxu0 0.0
    %2495 = vmatprep.subr.mxu0 0.0
    %2496 = vmatpush1.msra.mxu0 0.0
    %2497 = vmatprep.subr.mxu0 0.0
    %2498 = vmatpush1.msra.mxu0 0.0
    %2499 = vmatprep.subr.mxu0 0.0
    %2500 = vmatpush1.msra.mxu0 0.0
    %2501 = vmatprep.subr.mxu0 0.0
    %2502 = vmatpush1.msra.mxu0 0.0
    %2503 = vmatprep.subr.mxu0 0.0
    %2504 = vmatpush1.msra.mxu0 0.0
    %2505 = vmatprep.subr.mxu0 0.0
    %2506 = vmatpush1.msra.mxu0 0.0
    %2507 = vmatprep.subr.mxu0 0.0
    %2508 = vmatpush1.msra.mxu0 0.0
    %2509 = vmatprep.subr.mxu0 0.0
    %2510 = vmatpush1.msra.mxu0 0.0
    %2511 = vmatprep.subr.mxu0 0.0
    %2512 = vmatpush1.msra.mxu0 0.0
    %2513 = vmatprep.subr.mxu0 0.0
    %2514 = vmatpush1.msra.mxu0 0.0
    %2515 = vmatprep.subr.mxu0 0.0
    %2516 = vmatpush1.msra.mxu0 0.0
    %2517 = vmatprep.subr.mxu0 0.0
    %2518 = vmatpush1.msra.mxu0 0.0
    %2519 = vmatprep.subr.mxu0 0.0
    %2520 = vmatpush1.msra.mxu0 0.0
    %2521 = vmatprep.subr.mxu0 0.0
    %2522 = vmatpush1.msra.mxu0 0.0
    %2523 = vmatprep.subr.mxu0 0.0
    %2524 = vmatpush1.msra.mxu0 0.0
    %2525 = vmatprep.subr.mxu0 0.0
    %2526 = vmatpush1.msra.mxu0 0.0
    %2527 = vmatprep.subr.mxu0 0.0
    %2528 = vmatpush1.msra.mxu0 0.0
    %2529 = vmatprep.subr.mxu0 0.0
    %2530 = vmatpush1.msra.mxu0 0.0
    %2531 = vmatprep.subr.mxu0 0.0
    %2532 = vmatpush1.msra.mxu0 0.0
    %2533 = vmatprep.subr.mxu0 0.0
    %2534 = vmatpush1.msra.mxu0 0.0
    %2535 = vmatprep.subr.mxu0 0.0
    %2536 = vmatpush1.msra.mxu0 0.0
    %2537 = vmatprep.subr.mxu0 0.0
    %2538 = vmatpush1.msra.mxu0 0.0
    %2539 = vmatprep.subr.mxu0 0.0
    %2540 = vmatpush1.msra.mxu0 0.0
    %2541 = vmatprep.subr.mxu0 0.0
    %2542 = vmatpush1.msra.mxu0 0.0
    %2543 = vmatprep.subr.mxu0 0.0
    %2544 = vmatpush1.msra.mxu0 0.0
    %2545 = vmatprep.mubr.f32.mxu0 0.0
    %2546 = vmatmul.mubr.f32.gmra.mrb[0].mxu0 %v2479
    %v2547 = vpop.f32.mrb[0].mxu0
    %v2548 = vadd.f32 0.0, %v2547
    %v2549 = vpop.f32.mrb[0].mxu0
    %2550 = vdwg.mxu0
    %2552 = vrot.lane.b32.xlu0 %v2548, 48
    %v2553 = vpop.permute.xlu0 %2552
    %v2555 = vadd.f32 %v2373, %v2553
    %v2556 = vxor.u32 %v2555, 2147483648
    %v2557 = vmul.f32 %v2556, 1.442695
    %v2558 = vpow.pop %v2557
    %v2559 = vadd.f32 %v2558, 1.0
    %v2560 = vrcp.pop %v2559
    %v2561 = vmul.f32 1.0, %v2560
    %v2562 = vadd.f32 %v2548, %v1613
    %2564 = vrot.lane.b32.xlu0 %v2562, 16
    %v2565 = vpop.permute.xlu0 %2564
    %v2567 = vmul.f32 %v2561, %v2565
    %2569 = vrot.lane.b32.xlu0 %v2567, 32
    %v2570 = vpop.permute.xlu0 %2569
    %v2572 = vadd.f32 %v2373, %v2570
    %v2573 = vtanh.pop %v2572
    %v2574 = vsub.f32 1.0, %v2561
    %2576 = vrot.lane.b32.xlu0 %v2573, 112
    %v2577 = vpop.permute.xlu0 %2576
    %v2579 = vmul.f32 %v2574, %v2577
    %v2580 = vmul.f32 %v2561, %v2371
    %v2581 = vadd.f32 %v2579, %v2580
    %v2582 = vsel %vm2362, %v2475, 0.0
    %2584 = vrot.lane.b32.xlu0 %v2582, 112
    %v2585 = vpop.permute.xlu0 %2584
    %2587 = vst.msk [vmem:[%s2368] sm:$0x3] %vm1647, %v2585
    %v2588 = vsel %vm2350, %v2581, 0.0
    %2590 = vrot.lane.b32.xlu0 %v2588, 80
    %v2591 = vpop.permute.xlu0 %2590
    %2593 = vst.msk [vmem:[%s2356] sm:$0x3] %vm1660, %v2591
    %v2594 = vsel %vm2362, %v2475, %v2370
    %v2595 = vsel %vm2350, %v2581, %v2371
    %v2596 = vld [vmem:[%s1076] sm:$0x3]
    %v2597 = vld [vmem:[%s581] sm:$0x3]
    %2599 = vrot.lane.b32.xlu0 %v2594, 112
    %v2600 = vpop.permute.xlu0 %2599
    %v2601 = vsel %vm1427, %v2600, 0
    %2603 = vmatprep.subr.mxu0 0.0
    %2604 = vmatpush1.msra.mxu0 %v1409
    %2605 = vmatprep.subr.mxu0 0.0
    %2606 = vmatpush1.msra.mxu0 %v1410
    %2607 = vmatprep.subr.mxu0 0.0
    %2608 = vmatpush1.msra.mxu0 0.0
    %2609 = vmatprep.subr.mxu0 0.0
    %2610 = vmatpush1.msra.mxu0 0.0
    %2611 = vmatprep.subr.mxu0 0.0
    %2612 = vmatpush1.msra.mxu0 0.0
    %2613 = vmatprep.subr.mxu0 0.0
    %2614 = vmatpush1.msra.mxu0 0.0
    %2615 = vmatprep.subr.mxu0 0.0
    %2616 = vmatpush1.msra.mxu0 0.0
    %2617 = vmatprep.subr.mxu0 0.0
    %2618 = vmatpush1.msra.mxu0 0.0
    %2619 = vmatprep.subr.mxu0 0.0
    %2620 = vmatpush1.msra.mxu0 0.0
    %2621 = vmatprep.subr.mxu0 0.0
    %2622 = vmatpush1.msra.mxu0 0.0
    %2623 = vmatprep.subr.mxu0 0.0
    %2624 = vmatpush1.msra.mxu0 0.0
    %2625 = vmatprep.subr.mxu0 0.0
    %2626 = vmatpush1.msra.mxu0 0.0
    %2627 = vmatprep.subr.mxu0 0.0
    %2628 = vmatpush1.msra.mxu0 0.0
    %2629 = vmatprep.subr.mxu0 0.0
    %2630 = vmatpush1.msra.mxu0 0.0
    %2631 = vmatprep.subr.mxu0 0.0
    %2632 = vmatpush1.msra.mxu0 0.0
    %2633 = vmatprep.subr.mxu0 0.0
    %2634 = vmatpush1.msra.mxu0 0.0
    %2635 = vmatprep.subr.mxu0 0.0
    %2636 = vmatpush1.msra.mxu0 0.0
    %2637 = vmatprep.subr.mxu0 0.0
    %2638 = vmatpush1.msra.mxu0 0.0
    %2639 = vmatprep.subr.mxu0 0.0
    %2640 = vmatpush1.msra.mxu0 0.0
    %2641 = vmatprep.subr.mxu0 0.0
    %2642 = vmatpush1.msra.mxu0 0.0
    %2643 = vmatprep.subr.mxu0 0.0
    %2644 = vmatpush1.msra.mxu0 0.0
    %2645 = vmatprep.subr.mxu0 0.0
    %2646 = vmatpush1.msra.mxu0 0.0
    %2647 = vmatprep.subr.mxu0 0.0
    %2648 = vmatpush1.msra.mxu0 0.0
    %2649 = vmatprep.subr.mxu0 0.0
    %2650 = vmatpush1.msra.mxu0 0.0
    %2651 = vmatprep.subr.mxu0 0.0
    %2652 = vmatpush1.msra.mxu0 0.0
    %2653 = vmatprep.subr.mxu0 0.0
    %2654 = vmatpush1.msra.mxu0 0.0
    %2655 = vmatprep.subr.mxu0 0.0
    %2656 = vmatpush1.msra.mxu0 0.0
    %2657 = vmatprep.subr.mxu0 0.0
    %2658 = vmatpush1.msra.mxu0 0.0
    %2659 = vmatprep.subr.mxu0 0.0
    %2660 = vmatpush1.msra.mxu0 0.0
    %2661 = vmatprep.subr.mxu0 0.0
    %2662 = vmatpush1.msra.mxu0 0.0
    %2663 = vmatprep.subr.mxu0 0.0
    %2664 = vmatpush1.msra.mxu0 0.0
    %2665 = vmatprep.subr.mxu0 0.0
    %2666 = vmatpush1.msra.mxu0 0.0
    %2667 = vmatprep.mubr.f32.mxu0 0.0
    %2668 = vmatmul.mubr.f32.gmra.mrb[0].mxu0 %v2601
    %v2669 = vpop.f32.mrb[0].mxu0
    %v2670 = vadd.f32 0.0, %v2669
    %v2671 = vpop.f32.mrb[0].mxu0
    %2672 = vdwg.mxu0
    %v2673 = vadd.f32 %v2596, %v2670
    %v2674 = vxor.u32 %v2673, 2147483648
    %v2675 = vmul.f32 %v2674, 1.442695
    %v2676 = vpow.pop %v2675
    %v2677 = vadd.f32 %v2676, 1.0
    %v2678 = vrcp.pop %v2677
    %v2679 = vmul.f32 1.0, %v2678
    %v2680 = vadd.f32 %v2670, %v1509
    %2682 = vrot.lane.b32.xlu0 %v2680, 96
    %v2683 = vpop.permute.xlu0 %2682
    %v2685 = vmul.f32 %v2679, %v2683
    %2687 = vrot.lane.b32.xlu0 %v2685, 32
    %v2688 = vpop.permute.xlu0 %2687
    %v2690 = vadd.f32 %v2596, %v2688
    %v2691 = vtanh.pop %v2690
    %v2692 = vsub.f32 1.0, %v2679
    %2694 = vrot.lane.b32.xlu0 %v2691, 112
    %v2695 = vpop.permute.xlu0 %2694
    %v2697 = vmul.f32 %v2692, %v2695
    %v2698 = vmul.f32 %v2679, %v2594
    %v2699 = vadd.f32 %v2697, %v2698
    %2701 = vrot.lane.b32.xlu0 %v2595, 64
    %v2702 = vpop.permute.xlu0 %2701
    %v2703 = vsel %vm1427, %v2702, 0
    %2705 = vmatprep.subr.mxu0 0.0
    %2706 = vmatpush1.msra.mxu0 %v1411
    %2707 = vmatprep.subr.mxu0 0.0
    %2708 = vmatpush1.msra.mxu0 %v1412
    %2709 = vmatprep.subr.mxu0 0.0
    %2710 = vmatpush1.msra.mxu0 0.0
    %2711 = vmatprep.subr.mxu0 0.0
    %2712 = vmatpush1.msra.mxu0 0.0
    %2713 = vmatprep.subr.mxu0 0.0
    %2714 = vmatpush1.msra.mxu0 0.0
    %2715 = vmatprep.subr.mxu0 0.0
    %2716 = vmatpush1.msra.mxu0 0.0
    %2717 = vmatprep.subr.mxu0 0.0
    %2718 = vmatpush1.msra.mxu0 0.0
    %2719 = vmatprep.subr.mxu0 0.0
    %2720 = vmatpush1.msra.mxu0 0.0
    %2721 = vmatprep.subr.mxu0 0.0
    %2722 = vmatpush1.msra.mxu0 0.0
    %2723 = vmatprep.subr.mxu0 0.0
    %2724 = vmatpush1.msra.mxu0 0.0
    %2725 = vmatprep.subr.mxu0 0.0
    %2726 = vmatpush1.msra.mxu0 0.0
    %2727 = vmatprep.subr.mxu0 0.0
    %2728 = vmatpush1.msra.mxu0 0.0
    %2729 = vmatprep.subr.mxu0 0.0
    %2730 = vmatpush1.msra.mxu0 0.0
    %2731 = vmatprep.subr.mxu0 0.0
    %2732 = vmatpush1.msra.mxu0 0.0
    %2733 = vmatprep.subr.mxu0 0.0
    %2734 = vmatpush1.msra.mxu0 0.0
    %2735 = vmatprep.subr.mxu0 0.0
    %2736 = vmatpush1.msra.mxu0 0.0
    %2737 = vmatprep.subr.mxu0 0.0
    %2738 = vmatpush1.msra.mxu0 0.0
    %2739 = vmatprep.subr.mxu0 0.0
    %2740 = vmatpush1.msra.mxu0 0.0
    %2741 = vmatprep.subr.mxu0 0.0
    %2742 = vmatpush1.msra.mxu0 0.0
    %2743 = vmatprep.subr.mxu0 0.0
    %2744 = vmatpush1.msra.mxu0 0.0
    %2745 = vmatprep.subr.mxu0 0.0
    %2746 = vmatpush1.msra.mxu0 0.0
    %2747 = vmatprep.subr.mxu0 0.0
    %2748 = vmatpush1.msra.mxu0 0.0
    %2749 = vmatprep.subr.mxu0 0.0
    %2750 = vmatpush1.msra.mxu0 0.0
    %2751 = vmatprep.subr.mxu0 0.0
    %2752 = vmatpush1.msra.mxu0 0.0
    %2753 = vmatprep.subr.mxu0 0.0
    %2754 = vmatpush1.msra.mxu0 0.0
    %2755 = vmatprep.subr.mxu0 0.0
    %2756 = vmatpush1.msra.mxu0 0.0
    %2757 = vmatprep.subr.mxu0 0.0
    %2758 = vmatpush1.msra.mxu0 0.0
    %2759 = vmatprep.subr.mxu0 0.0
    %2760 = vmatpush1.msra.mxu0 0.0
    %2761 = vmatprep.subr.mxu0 0.0
    %2762 = vmatpush1.msra.mxu0 0.0
    %2763 = vmatprep.subr.mxu0 0.0
    %2764 = vmatpush1.msra.mxu0 0.0
    %2765 = vmatprep.subr.mxu0 0.0
    %2766 = vmatpush1.msra.mxu0 0.0
    %2767 = vmatprep.subr.mxu0 0.0
    %2768 = vmatpush1.msra.mxu0 0.0
    %2769 = vmatprep.mubr.f32.mxu0 0.0
    %2770 = vmatmul.mubr.f32.gmra.mrb[0].mxu0 %v2703
    %v2771 = vpop.f32.mrb[0].mxu0
    %v2772 = vadd.f32 0.0, %v2771
    %v2773 = vpop.f32.mrb[0].mxu0
    %2774 = vdwg.mxu0
    %2776 = vrot.lane.b32.xlu0 %v2772, 48
    %v2777 = vpop.permute.xlu0 %2776
    %v2779 = vadd.f32 %v2597, %v2777
    %v2780 = vxor.u32 %v2779, 2147483648
    %v2781 = vmul.f32 %v2780, 1.442695
    %v2782 = vpow.pop %v2781
    %v2783 = vadd.f32 %v2782, 1.0
    %v2784 = vrcp.pop %v2783
    %v2785 = vmul.f32 1.0, %v2784
    %v2786 = vadd.f32 %v2772, %v1613
    %2788 = vrot.lane.b32.xlu0 %v2786, 16
    %v2789 = vpop.permute.xlu0 %2788
    %v2791 = vmul.f32 %v2785, %v2789
    %2793 = vrot.lane.b32.xlu0 %v2791, 32
    %v2794 = vpop.permute.xlu0 %2793
    %v2796 = vadd.f32 %v2597, %v2794
    %v2797 = vtanh.pop %v2796
    %v2798 = vsub.f32 1.0, %v2785
    %2800 = vrot.lane.b32.xlu0 %v2797, 112
    %v2801 = vpop.permute.xlu0 %2800
    %v2803 = vmul.f32 %v2798, %v2801
    %v2804 = vmul.f32 %v2785, %v2595
    %v2805 = vadd.f32 %v2803, %v2804
    %v2806 = vsel %vm2124, %v2699, 0.0
    %2808 = vrot.lane.b32.xlu0 %v2806, 112
    %v2809 = vpop.permute.xlu0 %2808
    %2811 = vst.msk [vmem:[%s2130] sm:$0x3] %vm1647, %v2809
    %v2812 = vsel %vm2112, %v2805, 0.0
    %2814 = vrot.lane.b32.xlu0 %v2812, 80
    %v2815 = vpop.permute.xlu0 %2814
    %2817 = vst.msk [vmem:[%s2118] sm:$0x3] %vm1660, %v2815
    %v2818 = vsel %vm2124, %v2699, %v2594
    %v2819 = vsel %vm2112, %v2805, %v2595
    %v2820 = vld [vmem:[%s1241] sm:$0x3]
    %v2821 = vld [vmem:[%s416] sm:$0x3]
    %2823 = vrot.lane.b32.xlu0 %v2818, 112
    %v2824 = vpop.permute.xlu0 %2823
    %v2825 = vsel %vm1427, %v2824, 0
    %2827 = vmatprep.subr.mxu0 0.0
    %2828 = vmatpush1.msra.mxu0 %v1409
    %2829 = vmatprep.subr.mxu0 0.0
    %2830 = vmatpush1.msra.mxu0 %v1410
    %2831 = vmatprep.subr.mxu0 0.0
    %2832 = vmatpush1.msra.mxu0 0.0
    %2833 = vmatprep.subr.mxu0 0.0
    %2834 = vmatpush1.msra.mxu0 0.0
    %2835 = vmatprep.subr.mxu0 0.0
    %2836 = vmatpush1.msra.mxu0 0.0
    %2837 = vmatprep.subr.mxu0 0.0
    %2838 = vmatpush1.msra.mxu0 0.0
    %2839 = vmatprep.subr.mxu0 0.0
    %2840 = vmatpush1.msra.mxu0 0.0
    %2841 = vmatprep.subr.mxu0 0.0
    %2842 = vmatpush1.msra.mxu0 0.0
    %2843 = vmatprep.subr.mxu0 0.0
    %2844 = vmatpush1.msra.mxu0 0.0
    %2845 = vmatprep.subr.mxu0 0.0
    %2846 = vmatpush1.msra.mxu0 0.0
    %2847 = vmatprep.subr.mxu0 0.0
    %2848 = vmatpush1.msra.mxu0 0.0
    %2849 = vmatprep.subr.mxu0 0.0
    %2850 = vmatpush1.msra.mxu0 0.0
    %2851 = vmatprep.subr.mxu0 0.0
    %2852 = vmatpush1.msra.mxu0 0.0
    %2853 = vmatprep.subr.mxu0 0.0
    %2854 = vmatpush1.msra.mxu0 0.0
    %2855 = vmatprep.subr.mxu0 0.0
    %2856 = vmatpush1.msra.mxu0 0.0
    %2857 = vmatprep.subr.mxu0 0.0
    %2858 = vmatpush1.msra.mxu0 0.0
    %2859 = vmatprep.subr.mxu0 0.0
    %2860 = vmatpush1.msra.mxu0 0.0
    %2861 = vmatprep.subr.mxu0 0.0
    %2862 = vmatpush1.msra.mxu0 0.0
    %2863 = vmatprep.subr.mxu0 0.0
    %2864 = vmatpush1.msra.mxu0 0.0
    %2865 = vmatprep.subr.mxu0 0.0
    %2866 = vmatpush1.msra.mxu0 0.0
    %2867 = vmatprep.subr.mxu0 0.0
    %2868 = vmatpush1.msra.mxu0 0.0
    %2869 = vmatprep.subr.mxu0 0.0
    %2870 = vmatpush1.msra.mxu0 0.0
    %2871 = vmatprep.subr.mxu0 0.0
    %2872 = vmatpush1.msra.mxu0 0.0
    %2873 = vmatprep.subr.mxu0 0.0
    %2874 = vmatpush1.msra.mxu0 0.0
    %2875 = vmatprep.subr.mxu0 0.0
    %2876 = vmatpush1.msra.mxu0 0.0
    %2877 = vmatprep.subr.mxu0 0.0
    %2878 = vmatpush1.msra.mxu0 0.0
    %2879 = vmatprep.subr.mxu0 0.0
    %2880 = vmatpush1.msra.mxu0 0.0
    %2881 = vmatprep.subr.mxu0 0.0
    %2882 = vmatpush1.msra.mxu0 0.0
    %2883 = vmatprep.subr.mxu0 0.0
    %2884 = vmatpush1.msra.mxu0 0.0
    %2885 = vmatprep.subr.mxu0 0.0
    %2886 = vmatpush1.msra.mxu0 0.0
    %2887 = vmatprep.subr.mxu0 0.0
    %2888 = vmatpush1.msra.mxu0 0.0
    %2889 = vmatprep.subr.mxu0 0.0
    %2890 = vmatpush1.msra.mxu0 0.0
    %2891 = vmatprep.mubr.f32.mxu0 0.0
    %2892 = vmatmul.mubr.f32.gmra.mrb[0].mxu0 %v2825
    %v2893 = vpop.f32.mrb[0].mxu0
    %v2894 = vadd.f32 0.0, %v2893
    %v2895 = vpop.f32.mrb[0].mxu0
    %2896 = vdwg.mxu0
    %v2897 = vadd.f32 %v2820, %v2894
    %v2898 = vxor.u32 %v2897, 2147483648
    %v2899 = vmul.f32 %v2898, 1.442695
    %v2900 = vpow.pop %v2899
    %v2901 = vadd.f32 %v2900, 1.0
    %v2902 = vrcp.pop %v2901
    %v2903 = vmul.f32 1.0, %v2902
    %v2904 = vadd.f32 %v2894, %v1509
    %2906 = vrot.lane.b32.xlu0 %v2904, 96
    %v2907 = vpop.permute.xlu0 %2906
    %v2909 = vmul.f32 %v2903, %v2907
    %2911 = vrot.lane.b32.xlu0 %v2909, 32
    %v2912 = vpop.permute.xlu0 %2911
    %v2914 = vadd.f32 %v2820, %v2912
    %v2915 = vtanh.pop %v2914
    %v2916 = vsub.f32 1.0, %v2903
    %2918 = vrot.lane.b32.xlu0 %v2915, 112
    %v2919 = vpop.permute.xlu0 %2918
    %v2921 = vmul.f32 %v2916, %v2919
    %v2922 = vmul.f32 %v2903, %v2818
    %v2923 = vadd.f32 %v2921, %v2922
    %2925 = vrot.lane.b32.xlu0 %v2819, 64
    %v2926 = vpop.permute.xlu0 %2925
    %v2927 = vsel %vm1427, %v2926, 0
    %2929 = vmatprep.subr.mxu0 0.0
    %2930 = vmatpush1.msra.mxu0 %v1411
    %2931 = vmatprep.subr.mxu0 0.0
    %2932 = vmatpush1.msra.mxu0 %v1412
    %2933 = vmatprep.subr.mxu0 0.0
    %2934 = vmatpush1.msra.mxu0 0.0
    %2935 = vmatprep.subr.mxu0 0.0
    %2936 = vmatpush1.msra.mxu0 0.0
    %2937 = vmatprep.subr.mxu0 0.0
    %2938 = vmatpush1.msra.mxu0 0.0
    %2939 = vmatprep.subr.mxu0 0.0
    %2940 = vmatpush1.msra.mxu0 0.0
    %2941 = vmatprep.subr.mxu0 0.0
    %2942 = vmatpush1.msra.mxu0 0.0
    %2943 = vmatprep.subr.mxu0 0.0
    %2944 = vmatpush1.msra.mxu0 0.0
    %2945 = vmatprep.subr.mxu0 0.0
    %2946 = vmatpush1.msra.mxu0 0.0
    %2947 = vmatprep.subr.mxu0 0.0
    %2948 = vmatpush1.msra.mxu0 0.0
    %2949 = vmatprep.subr.mxu0 0.0
    %2950 = vmatpush1.msra.mxu0 0.0
    %2951 = vmatprep.subr.mxu0 0.0
    %2952 = vmatpush1.msra.mxu0 0.0
    %2953 = vmatprep.subr.mxu0 0.0
    %2954 = vmatpush1.msra.mxu0 0.0
    %2955 = vmatprep.subr.mxu0 0.0
    %2956 = vmatpush1.msra.mxu0 0.0
    %2957 = vmatprep.subr.mxu0 0.0
    %2958 = vmatpush1.msra.mxu0 0.0
    %2959 = vmatprep.subr.mxu0 0.0
    %2960 = vmatpush1.msra.mxu0 0.0
    %2961 = vmatprep.subr.mxu0 0.0
    %2962 = vmatpush1.msra.mxu0 0.0
    %2963 = vmatprep.subr.mxu0 0.0
    %2964 = vmatpush1.msra.mxu0 0.0
    %2965 = vmatprep.subr.mxu0 0.0
    %2966 = vmatpush1.msra.mxu0 0.0
    %2967 = vmatprep.subr.mxu0 0.0
    %2968 = vmatpush1.msra.mxu0 0.0
    %2969 = vmatprep.subr.mxu0 0.0
    %2970 = vmatpush1.msra.mxu0 0.0
    %2971 = vmatprep.subr.mxu0 0.0
    %2972 = vmatpush1.msra.mxu0 0.0
    %2973 = vmatprep.subr.mxu0 0.0
    %2974 = vmatpush1.msra.mxu0 0.0
    %2975 = vmatprep.subr.mxu0 0.0
    %2976 = vmatpush1.msra.mxu0 0.0
    %2977 = vmatprep.subr.mxu0 0.0
    %2978 = vmatpush1.msra.mxu0 0.0
    %2979 = vmatprep.subr.mxu0 0.0
    %2980 = vmatpush1.msra.mxu0 0.0
    %2981 = vmatprep.subr.mxu0 0.0
    %2982 = vmatpush1.msra.mxu0 0.0
    %2983 = vmatprep.subr.mxu0 0.0
    %2984 = vmatpush1.msra.mxu0 0.0
    %2985 = vmatprep.subr.mxu0 0.0
    %2986 = vmatpush1.msra.mxu0 0.0
    %2987 = vmatprep.subr.mxu0 0.0
    %2988 = vmatpush1.msra.mxu0 0.0
    %2989 = vmatprep.subr.mxu0 0.0
    %2990 = vmatpush1.msra.mxu0 0.0
    %2991 = vmatprep.subr.mxu0 0.0
    %2992 = vmatpush1.msra.mxu0 0.0
    %2993 = vmatprep.mubr.f32.mxu0 0.0
    %2994 = vmatmul.mubr.f32.gmra.mrb[0].mxu0 %v2927
    %v2995 = vpop.f32.mrb[0].mxu0
    %v2996 = vadd.f32 0.0, %v2995
    %v2997 = vpop.f32.mrb[0].mxu0
    %2998 = vdwg.mxu0
    %3000 = vrot.lane.b32.xlu0 %v2996, 48
    %v3001 = vpop.permute.xlu0 %3000
    %v3003 = vadd.f32 %v2821, %v3001
    %v3004 = vxor.u32 %v3003, 2147483648
    %v3005 = vmul.f32 %v3004, 1.442695
    %v3006 = vpow.pop %v3005
    %v3007 = vadd.f32 %v3006, 1.0
    %v3008 = vrcp.pop %v3007
    %v3009 = vmul.f32 1.0, %v3008
    %v3010 = vadd.f32 %v2996, %v1613
    %3012 = vrot.lane.b32.xlu0 %v3010, 16
    %v3013 = vpop.permute.xlu0 %3012
    %v3015 = vmul.f32 %v3009, %v3013
    %3017 = vrot.lane.b32.xlu0 %v3015, 32
    %v3018 = vpop.permute.xlu0 %3017
    %v3020 = vadd.f32 %v2821, %v3018
    %v3021 = vtanh.pop %v3020
    %v3022 = vsub.f32 1.0, %v3009
    %3024 = vrot.lane.b32.xlu0 %v3021, 112
    %v3025 = vpop.permute.xlu0 %3024
    %v3027 = vmul.f32 %v3022, %v3025
    %v3028 = vmul.f32 %v3009, %v2819
    %v3029 = vadd.f32 %v3027, %v3028
    %v3030 = vsel %vm1886, %v2923, 0.0
    %3032 = vrot.lane.b32.xlu0 %v3030, 112
    %v3033 = vpop.permute.xlu0 %3032
    %3035 = vst.msk [vmem:[%s1892] sm:$0x3] %vm1647, %v3033
    %v3036 = vsel %vm1874, %v3029, 0.0
    %3038 = vrot.lane.b32.xlu0 %v3036, 80
    %v3039 = vpop.permute.xlu0 %3038
    %3041 = vst.msk [vmem:[%s1880] sm:$0x3] %vm1660, %v3039
    %v3042 = vsel %vm1886, %v2923, %v2818
    %v3043 = vsel %vm1874, %v3029, %v2819
    %v3044 = vld [vmem:[%s1406] sm:$0x3]
    %v3045 = vld [vmem:[#allocation2] sm:$0x3]
    %3047 = vrot.lane.b32.xlu0 %v3042, 112
    %v3048 = vpop.permute.xlu0 %3047
    %v3049 = vsel %vm1427, %v3048, 0
    %3051 = vmatprep.subr.mxu0 0.0
    %3052 = vmatpush1.msra.mxu0 %v1409
    %3053 = vmatprep.subr.mxu0 0.0
    %3054 = vmatpush1.msra.mxu0 %v1410
    %3055 = vmatprep.subr.mxu0 0.0
    %3056 = vmatpush1.msra.mxu0 0.0
    %3057 = vmatprep.subr.mxu0 0.0
    %3058 = vmatpush1.msra.mxu0 0.0
    %3059 = vmatprep.subr.mxu0 0.0
    %3060 = vmatpush1.msra.mxu0 0.0
    %3061 = vmatprep.subr.mxu0 0.0
    %3062 = vmatpush1.msra.mxu0 0.0
    %3063 = vmatprep.subr.mxu0 0.0
    %3064 = vmatpush1.msra.mxu0 0.0
    %3065 = vmatprep.subr.mxu0 0.0
    %3066 = vmatpush1.msra.mxu0 0.0
    %3067 = vmatprep.subr.mxu0 0.0
    %3068 = vmatpush1.msra.mxu0 0.0
    %3069 = vmatprep.subr.mxu0 0.0
    %3070 = vmatpush1.msra.mxu0 0.0
    %3071 = vmatprep.subr.mxu0 0.0
    %3072 = vmatpush1.msra.mxu0 0.0
    %3073 = vmatprep.subr.mxu0 0.0
    %3074 = vmatpush1.msra.mxu0 0.0
    %3075 = vmatprep.subr.mxu0 0.0
    %3076 = vmatpush1.msra.mxu0 0.0
    %3077 = vmatprep.subr.mxu0 0.0
    %3078 = vmatpush1.msra.mxu0 0.0
    %3079 = vmatprep.subr.mxu0 0.0
    %3080 = vmatpush1.msra.mxu0 0.0
    %3081 = vmatprep.subr.mxu0 0.0
    %3082 = vmatpush1.msra.mxu0 0.0
    %3083 = vmatprep.subr.mxu0 0.0
    %3084 = vmatpush1.msra.mxu0 0.0
    %3085 = vmatprep.subr.mxu0 0.0
    %3086 = vmatpush1.msra.mxu0 0.0
    %3087 = vmatprep.subr.mxu0 0.0
    %3088 = vmatpush1.msra.mxu0 0.0
    %3089 = vmatprep.subr.mxu0 0.0
    %3090 = vmatpush1.msra.mxu0 0.0
    %3091 = vmatprep.subr.mxu0 0.0
    %3092 = vmatpush1.msra.mxu0 0.0
    %3093 = vmatprep.subr.mxu0 0.0
    %3094 = vmatpush1.msra.mxu0 0.0
    %3095 = vmatprep.subr.mxu0 0.0
    %3096 = vmatpush1.msra.mxu0 0.0
    %3097 = vmatprep.subr.mxu0 0.0
    %3098 = vmatpush1.msra.mxu0 0.0
    %3099 = vmatprep.subr.mxu0 0.0
    %3100 = vmatpush1.msra.mxu0 0.0
    %3101 = vmatprep.subr.mxu0 0.0
    %3102 = vmatpush1.msra.mxu0 0.0
    %3103 = vmatprep.subr.mxu0 0.0
    %3104 = vmatpush1.msra.mxu0 0.0
    %3105 = vmatprep.subr.mxu0 0.0
    %3106 = vmatpush1.msra.mxu0 0.0
    %3107 = vmatprep.subr.mxu0 0.0
    %3108 = vmatpush1.msra.mxu0 0.0
    %3109 = vmatprep.subr.mxu0 0.0
    %3110 = vmatpush1.msra.mxu0 0.0
    %3111 = vmatprep.subr.mxu0 0.0
    %3112 = vmatpush1.msra.mxu0 0.0
    %3113 = vmatprep.subr.mxu0 0.0
    %3114 = vmatpush1.msra.mxu0 0.0
    %3115 = vmatprep.mubr.f32.mxu0 0.0
    %3116 = vmatmul.mubr.f32.gmra.mrb[0].mxu0 %v3049
    %v3117 = vpop.f32.mrb[0].mxu0
    %v3118 = vadd.f32 0.0, %v3117
    %v3119 = vpop.f32.mrb[0].mxu0
    %3120 = vdwg.mxu0
    %v3121 = vadd.f32 %v3044, %v3118
    %v3122 = vxor.u32 %v3121, 2147483648
    %v3123 = vmul.f32 %v3122, 1.442695
    %v3124 = vpow.pop %v3123
    %v3125 = vadd.f32 %v3124, 1.0
    %v3126 = vrcp.pop %v3125
    %v3127 = vmul.f32 1.0, %v3126
    %v3128 = vadd.f32 %v3118, %v1509
    %3130 = vrot.lane.b32.xlu0 %v3128, 96
    %v3131 = vpop.permute.xlu0 %3130
    %v3133 = vmul.f32 %v3127, %v3131
    %3135 = vrot.lane.b32.xlu0 %v3133, 32
    %v3136 = vpop.permute.xlu0 %3135
    %v3138 = vadd.f32 %v3044, %v3136
    %v3139 = vtanh.pop %v3138
    %v3140 = vsub.f32 1.0, %v3127
    %3142 = vrot.lane.b32.xlu0 %v3139, 112
    %v3143 = vpop.permute.xlu0 %3142
    %v3145 = vmul.f32 %v3140, %v3143
    %v3146 = vmul.f32 %v3127, %v3042
    %v3147 = vadd.f32 %v3145, %v3146
    %3149 = vrot.lane.b32.xlu0 %v3043, 64
    %v3150 = vpop.permute.xlu0 %3149
    %v3151 = vsel %vm1427, %v3150, 0
    %3153 = vmatprep.subr.mxu0 0.0
    %3154 = vmatpush1.msra.mxu0 %v1411
    %3155 = vmatprep.subr.mxu0 0.0
    %3156 = vmatpush1.msra.mxu0 %v1412
    %3157 = vmatprep.subr.mxu0 0.0
    %3158 = vmatpush1.msra.mxu0 0.0
    %3159 = vmatprep.subr.mxu0 0.0
    %3160 = vmatpush1.msra.mxu0 0.0
    %3161 = vmatprep.subr.mxu0 0.0
    %3162 = vmatpush1.msra.mxu0 0.0
    %3163 = vmatprep.subr.mxu0 0.0
    %3164 = vmatpush1.msra.mxu0 0.0
    %3165 = vmatprep.subr.mxu0 0.0
    %3166 = vmatpush1.msra.mxu0 0.0
    %3167 = vmatprep.subr.mxu0 0.0
    %3168 = vmatpush1.msra.mxu0 0.0
    %3169 = vmatprep.subr.mxu0 0.0
    %3170 = vmatpush1.msra.mxu0 0.0
    %3171 = vmatprep.subr.mxu0 0.0
    %3172 = vmatpush1.msra.mxu0 0.0
    %3173 = vmatprep.subr.mxu0 0.0
    %3174 = vmatpush1.msra.mxu0 0.0
    %3175 = vmatprep.subr.mxu0 0.0
    %3176 = vmatpush1.msra.mxu0 0.0
    %3177 = vmatprep.subr.mxu0 0.0
    %3178 = vmatpush1.msra.mxu0 0.0
    %3179 = vmatprep.subr.mxu0 0.0
    %3180 = vmatpush1.msra.mxu0 0.0
    %3181 = vmatprep.subr.mxu0 0.0
    %3182 = vmatpush1.msra.mxu0 0.0
    %3183 = vmatprep.subr.mxu0 0.0
    %3184 = vmatpush1.msra.mxu0 0.0
    %3185 = vmatprep.subr.mxu0 0.0
    %3186 = vmatpush1.msra.mxu0 0.0
    %3187 = vmatprep.subr.mxu0 0.0
    %3188 = vmatpush1.msra.mxu0 0.0
    %3189 = vmatprep.subr.mxu0 0.0
    %3190 = vmatpush1.msra.mxu0 0.0
    %3191 = vmatprep.subr.mxu0 0.0
    %3192 = vmatpush1.msra.mxu0 0.0
    %3193 = vmatprep.subr.mxu0 0.0
    %3194 = vmatpush1.msra.mxu0 0.0
    %3195 = vmatprep.subr.mxu0 0.0
    %3196 = vmatpush1.msra.mxu0 0.0
    %3197 = vmatprep.subr.mxu0 0.0
    %3198 = vmatpush1.msra.mxu0 0.0
    %3199 = vmatprep.subr.mxu0 0.0
    %3200 = vmatpush1.msra.mxu0 0.0
    %3201 = vmatprep.subr.mxu0 0.0
    %3202 = vmatpush1.msra.mxu0 0.0
    %3203 = vmatprep.subr.mxu0 0.0
    %3204 = vmatpush1.msra.mxu0 0.0
    %3205 = vmatprep.subr.mxu0 0.0
    %3206 = vmatpush1.msra.mxu0 0.0
    %3207 = vmatprep.subr.mxu0 0.0
    %3208 = vmatpush1.msra.mxu0 0.0
    %3209 = vmatprep.subr.mxu0 0.0
    %3210 = vmatpush1.msra.mxu0 0.0
    %3211 = vmatprep.subr.mxu0 0.0
    %3212 = vmatpush1.msra.mxu0 0.0
    %3213 = vmatprep.subr.mxu0 0.0
    %3214 = vmatpush1.msra.mxu0 0.0
    %3215 = vmatprep.subr.mxu0 0.0
    %3216 = vmatpush1.msra.mxu0 0.0
    %3217 = vmatprep.mubr.f32.mxu0 0.0
    %3218 = vmatmul.mubr.f32.gmra.mrb[0].mxu0 %v3151
    %v3219 = vpop.f32.mrb[0].mxu0
    %v3220 = vadd.f32 0.0, %v3219
    %v3221 = vpop.f32.mrb[0].mxu0
    %3222 = vdwg.mxu0
    %3224 = vrot.lane.b32.xlu0 %v3220, 48
    %v3225 = vpop.permute.xlu0 %3224
    %v3227 = vadd.f32 %v3045, %v3225
    %v3228 = vxor.u32 %v3227, 2147483648
    %v3229 = vmul.f32 %v3228, 1.442695
    %v3230 = vpow.pop %v3229
    %v3231 = vadd.f32 %v3230, 1.0
    %v3232 = vrcp.pop %v3231
    %v3233 = vmul.f32 1.0, %v3232
    %v3234 = vadd.f32 %v3220, %v1613
    %3236 = vrot.lane.b32.xlu0 %v3234, 16
    %v3237 = vpop.permute.xlu0 %3236
    %v3239 = vmul.f32 %v3233, %v3237
    %3241 = vrot.lane.b32.xlu0 %v3239, 32
    %v3242 = vpop.permute.xlu0 %3241
    %v3244 = vadd.f32 %v3045, %v3242
    %v3245 = vtanh.pop %v3244
    %v3246 = vsub.f32 1.0, %v3233
    %3248 = vrot.lane.b32.xlu0 %v3245, 112
    %v3249 = vpop.permute.xlu0 %3248
    %v3251 = vmul.f32 %v3246, %v3249
    %v3252 = vmul.f32 %v3233, %v3043
    %v3253 = vadd.f32 %v3251, %v3252
    %v3254 = vsel %vm1653, %v3147, 0.0
    %3256 = vrot.lane.b32.xlu0 %v3254, 112
    %v3257 = vpop.permute.xlu0 %3256
    %3259 = vst.msk [vmem:[%s1659] sm:$0x3] %vm1647, %v3257
    %v3260 = vsel %vm1641, %v3253, 0.0
    %3262 = vrot.lane.b32.xlu0 %v3260, 80
    %v3263 = vpop.permute.xlu0 %3262
    %3265 = vst.msk [vmem:[#allocation5] sm:$0x3] %vm1660, %v3263
    %v3266 = vsel %vm1653, %v3147, %v3042
    %v3267 = vsel %vm1641, %v3253, %v3043
    %3269 = vrot.lane.b32.xlu0 %v3266, 112
    %v3270 = vpop.permute.xlu0 %3269
    %3273 = vrot.lane.b32.xlu0 %v3267, 80
    %v3274 = vpop.permute.xlu0 %3273
    %v3276 = vsel %vm1427, %v3270, %v3274
    %vm3277 = vcmask 254976
    %v3278 = vsel %vm3277, %v3276, 0.0
    %3279 = vadd.xlane.f32.xlu0 %v3278
    %v3280 = vpop.xlane.xlu0 %3279
    %v3281 = vrcp.pop 32.0
    %v3282 = vmul.f32 %v3280, %v3281
    %v3283 = vsub.f32 %v3276, %v3282
    %v3284 = vmul.f32 %v3283, %v3283
    %v3285 = vsel %vm3277, %v3284, 0.0
    %3286 = vadd.xlane.f32.xlu0 %v3285
    %v3287 = vpop.xlane.xlu0 %3286
    %v3288 = vmul.f32 %v3287, %v3281
    %v3289 = vadd.f32 %v3288, 1e-05
    %v3290 = vrsqrt.pop %v3289
    %v3291 = vmul.f32 %v3283, %v3290
    %v3292 = vld [vmem:[%s2] sm:$0x1]
    %v3294 = vlaneseq
    %v3295 = vshrl.u32 %v3294, 7
    %v3296 = vsub.s32 0, %v3295
    %v3297 = vrot.slane %v3292, %v3296
    %v3299 = vmul.f32 %v3291, %v3297
    %v3300 = vld [vmem:[%s3] sm:$0x1]
    %v3302 = vlaneseq
    %v3303 = vshrl.u32 %v3302, 7
    %v3304 = vsub.s32 0, %v3303
    %v3305 = vrot.slane %v3300, %v3304
    %v3307 = vadd.f32 %v3299, %v3305
    %3308 = vst.msk [vmem:[#allocation3] sm:$0x3] %vm3277, %v3307
    // Predicated region
    $region42: #{tpu_custom_call.1} parent=1 // pred_check
      _
    $region43: #{tpu_custom_call.1} parent=1 // pred_check_branch
      %3310 = sbr.rel (0) target = $region45
    $region44: #{tpu_custom_call.1} parent=1 // pred_region
      %s3312 = ssub.s32 32, 32
      %3313 = vsyncadd [#allocation4], %s3312
      %s3315 = sshll.u32 [#allocation3], 4
      %s3316 = int_to_ptr.vmem [resolvable:$true] %s3315
      %3318 = dma.vmem_to_hbm [thread:$0]  %s3316, 32, %s10, [#allocation4]
    $region45: #{tpu_custom_call.1} parent=1 // pred_fallthru
      _
    // Predicated region
    $region46: #{tpu_custom_call.1} parent=1 // pred_check
      _
    $region47: #{tpu_custom_call.1} parent=1 // pred_check_branch
      %3320 = sbr.rel (0) target = $region49
    $region48: #{tpu_custom_call.1} parent=1 // pred_region
      %s3322 = ssub.s32 256, 256
      %3323 = vsyncadd [#allocation6], %s3322
      %s3324 = sshll.u32 [#allocation5], 4
      %s3325 = int_to_ptr.vmem [resolvable:$true] %s3324
      %3330 = dma.vmem_to_hbm [thread:$0]  %s3325, 256, %s11, [#allocation6], 32, 32, 2
    $region49: #{tpu_custom_call.1} parent=1 // pred_fallthru
      _
    // Predicated region
    $region50: #{tpu_custom_call.1} parent=1 // pred_check
      _
    $region51: #{tpu_custom_call.1} parent=1 // pred_check_branch
      %3332 = sbr.rel (0) target = $region53
    $region52: #{tpu_custom_call.1} parent=1 // pred_region
      %3333 = dma.done [#allocation4], 32
    $region53: #{tpu_custom_call.1} parent=1 // pred_fallthru
      _
    // Predicated region
    $region54: #{tpu_custom_call.1} parent=1 // pred_check
      _
    $region55: #{tpu_custom_call.1} parent=1 // pred_check_branch
      %3335 = sbr.rel (0) target = $region57
    $region56: #{tpu_custom_call.1} parent=1 // pred_region
      %3336 = dma.done [#allocation6], 256
    $region57: #{tpu_custom_call.1} parent=1 // pred_fallthru
      _
    %3337 = vsyncpa [#allocation4], 1
    %3338 = vsyncpa [#allocation6], 1

</llo_original>
